<compile_context>
chip_gen: v6e
topology: v6e:2x2x1
jax: 0.10.0
libtpu: 0.0.40
codegen_flags: <defaults>
</compile_context>

<pallas_src>
import functools

import jax
import jax.numpy as jnp
import numpy as np
from jax.experimental import pallas as pl
from jax.experimental.pallas import tpu as pltpu

PAD = 26  # alpha_map['<PAD>']

# ----------------------------- small config ---------------------------------
B = 8           # batch
L_EPI = 8       # epitope max len   (stand-in for 25)
L_ANT = 16      # antigen max len   (stand-in for 64)
EMB = 10        # embedding dim (epitope_emb_node)
HID = 32        # LSTM hidden dim   (stand-in for 1900)
C_IN = 3 * HID          # classifier in_channels (96)
C_MID = C_IN // 10      # in_channels // 10      (9)

HT = 128        # padded combined hidden width: [left|epi|right|pad], lane-aligned
GATES = 4       # i, f, g, o
VOCAB = 27
VOCAB_PAD = 32  # pad vocab to a sublane-friendly size
C_MID_PAD = 128 # classifier mid width padded to one full vreg lane span

assert 3 * HID <= HT
assert C_MID <= C_MID_PAD

_VMEM = pl.BlockSpec(memory_space=pltpu.MemorySpace.VMEM)


# ------------------------------ fused Pallas kernel ---------------------------
def fused_kernel(tok_l_ref, tok_e_ref, tok_r_ref,      # (L*B, 1) int32 time-major tokens
                 tbl_l_ref, tbl_e_ref, tbl_r_ref,      # (VOCAB_PAD, 4*HT) embed@W_ih tables
                 whh_ref,                              # (HT, 4*HT) block-diagonal recurrent W
                 b_ref,                                # (1, 4*HT) combined bias
                 lastcol_ref,                          # (B, HT) int32 per-column capture step
                 g1_ref, be1_ref, w1_ref, b1_ref,      # BN1 + Linear1 (padded to 128 lanes)
                 g2_ref, be2_ref, w2_ref, b2_ref,      # BN2 + Linear2 (padded)
                 out_ref,                              # (B, 1) logits
                 xw_ref):                              # scratch (L*B, 4*HT)
    LB = tok_l_ref.shape[0]
    HTk = whh_ref.shape[0]
    Bk = lastcol_ref.shape[0]
    L = LB // Bk
    V = tbl_l_ref.shape[0]

    # ---- embedding lookup fused with the (hoisted) input projection ------------
    # one-hot(tokens) @ (embed @ W_ih)  ==  embed[tokens] @ W_ih, for every time step
    # at once -> removes the x_t @ W_ih matmul (and the bias re-broadcast) from the
    # serial recurrence.
    lanes = jax.lax.broadcasted_iota(jnp.int32, (LB, V), 1)
    oh_l = (tok_l_ref[...] == lanes).astype(jnp.float32)
    oh_e = (tok_e_ref[...] == lanes).astype(jnp.float32)
    oh_r = (tok_r_ref[...] == lanes).astype(jnp.float32)
    xw_ref[...] = (
        jnp.dot(oh_l, tbl_l_ref[...], preferred_element_type=jnp.float32)
        + jnp.dot(oh_e, tbl_e_ref[...], preferred_element_type=jnp.float32)
        + jnp.dot(oh_r, tbl_r_ref[...], preferred_element_type=jnp.float32)
        + b_ref[...]
    )

    whh = whh_ref[...]
    lastcol = lastcol_ref[...]
    z = jnp.zeros((Bk, HTk), jnp.float32)

    # ---- merged 3-stream recurrence: one (B,HT)@(HT,4HT) matmul per step --------
    def step(t, carry):
        h, c, out = carry
        row = pl.multiple_of(t * Bk, Bk)
        gates = (jnp.dot(h, whh, preferred_element_type=jnp.float32)
                 + xw_ref[pl.ds(row, Bk), :])                  # (B, 4*HT)
        i = jax.nn.sigmoid(gates[:, 0 * HTk:1 * HTk])          # full-vreg, lane-aligned
        f = jax.nn.sigmoid(gates[:, 1 * HTk:2 * HTk])
        g = jnp.tanh(gates[:, 2 * HTk:3 * HTk])
        o = jax.nn.sigmoid(gates[:, 3 * HTk:4 * HTk])
        c = f * c + i * g
        h = o * jnp.tanh(c)
        out = jnp.where(lastcol == t, h, out)                  # capture h at length-1
        return h, c, out

    _, _, feat = jax.lax.fori_loop(0, L, step, (z, z, z), unroll=True)

    # ---- classifier: [LeakyReLU(1.0)=identity], BN1d, Linear, [id], BN1d, Linear --
    eps = 1e-5
    x = feat                                                   # (B, HT): [left|epi|right|0]
    m1 = jnp.mean(x, axis=0, keepdims=True)
    v1 = jnp.mean((x - m1) ** 2, axis=0, keepdims=True)
    x = (x - m1) * jax.lax.rsqrt(v1 + eps) * g1_ref[...] + be1_ref[...]
    x = jnp.dot(x, w1_ref[...], preferred_element_type=jnp.float32) + b1_ref[...]
    m2 = jnp.mean(x, axis=0, keepdims=True)
    v2 = jnp.mean((x - m2) ** 2, axis=0, keepdims=True)
    x = (x - m2) * jax.lax.rsqrt(v2 + eps) * g2_ref[...] + be2_ref[...]
    out_ref[...] = jnp.dot(x, w2_ref[...], preferred_element_type=jnp.float32) + b2_ref[...]


# ------------------------------ model forward --------------------------------
@jax.jit
def base_model_forward(fused, epitope_x, left_antigen_x, right_antigen_x,
                       total_antigen_x):
    # lengths (same semantics as the PyTorch forward)
    epi_len = jnp.sum(epitope_x != PAD, axis=1).astype(jnp.int32)
    left_len = jnp.sum(left_antigen_x != PAD, axis=1).astype(jnp.int32)
    left_len = left_len + jnp.where(left_len == 0, 1, 0)
    right_len = jnp.sum(right_antigen_x != PAD, axis=1).astype(jnp.int32)
    right_len = right_len + jnp.where(right_len == 0, 1, 0)
    _total_len = left_len + epi_len + right_len   # computed but unused downstream

    Bb = epitope_x.shape[0]

    # pad epitope tokens to the common length and flatten all streams time-major
    epi_pad = jnp.pad(epitope_x, ((0, 0), (0, L_ANT - L_EPI)), constant_values=PAD)
    tok_l = left_antigen_x.T.reshape(L_ANT * Bb, 1).astype(jnp.int32)
    tok_e = epi_pad.T.reshape(L_ANT * Bb, 1).astype(jnp.int32)
    tok_r = right_antigen_x.T.reshape(L_ANT * Bb, 1).astype(jnp.int32)

    # per-column capture step: columns [0:32)=left, [32:64)=epi, [64:96)=right, pad=-1
    last = jnp.stack([left_len, epi_len, right_len], axis=1) - 1          # (B, 3)
    lastcol = jnp.concatenate(
        [jnp.repeat(last, HID, axis=1),
         jnp.full((Bb, HT - 3 * HID), -1, jnp.int32)], axis=1).astype(jnp.int32)

    out = pl.pallas_call(
        fused_kernel,
        out_shape=jax.ShapeDtypeStruct((Bb, 1), jnp.float32),
        in_specs=[_VMEM] * 17,
        out_specs=_VMEM,
        scratch_shapes=[pltpu.VMEM((L_ANT * Bb, GATES * HT), jnp.float32)],
    )(tok_l, tok_e, tok_r,
      fused["tbl_left"], fused["tbl_epi"], fused["tbl_right"],
      fused["whh"], fused["bias"], lastcol,
      fused["bn1_gamma"], fused["bn1_beta"], fused["lin1_w"], fused["lin1_b"],
      fused["bn2_gamma"], fused["bn2_beta"], fused["lin2_w"], fused["lin2_b"])
    return out.reshape(-1)


# ------------------------------ parameter init -------------------------------
def make_lstm_params(key, e, h):
    k1, k2, k3 = jax.random.split(key, 3)
    s = 1.0 / np.sqrt(h)
    w_ih = jax.random.uniform(k1, (e, 4 * h), jnp.float32, -s, s)   # gate order [i,f,g,o]
    w_hh = jax.random.uniform(k2, (h, 4 * h), jnp.float32, -s, s)
    b = jax.random.uniform(k3, (1, 4 * h), jnp.float32, -s, s)      # b_ih + b_hh combined
    return (w_ih, w_hh, b)


def make_raw_params(key):
    ks = jax.random.split(key, 8)
    embed = 0.1 * jax.random.normal(ks[0], (VOCAB, EMB), jnp.float32)
    embed = embed.at[PAD].set(0.0)      # padding_idx=26 -> zero row
    s1 = 1.0 / np.sqrt(C_IN)
    s2 = 1.0 / np.sqrt(C_MID)
    cls = {
        "bn1_gamma": jnp.ones((1, C_IN), jnp.float32),
        "bn1_beta": jnp.zeros((1, C_IN), jnp.float32),
        "lin1_w": jax.random.uniform(ks[4], (C_IN, C_MID), jnp.float32, -s1, s1),
        "lin1_b": jax.random.uniform(ks[5], (1, C_MID), jnp.float32, -s1, s1),
        "bn2_gamma": jnp.ones((1, C_MID), jnp.float32),
        "bn2_beta": jnp.zeros((1, C_MID), jnp.float32),
        "lin2_w": jax.random.uniform(ks[6], (C_MID, 1), jnp.float32, -s2, s2),
        "lin2_b": jax.random.uniform(ks[7], (1, 1), jnp.float32, -s2, s2),
    }
    return {
        "embed": embed,
        "lstm_left": make_lstm_params(ks[2], EMB, HID),
        "lstm_epi": make_lstm_params(ks[1], EMB, HID),
        "lstm_right": make_lstm_params(ks[3], EMB, HID),
        "cls": cls,
    }


def build_fused_params(raw):
    """Pack the three LSTMs + classifier into the lane-aligned combined layout."""
    H = HID
    embed_pad = jnp.zeros((VOCAB_PAD, EMB), jnp.float32).at[:VOCAB].set(raw["embed"])
    streams = [raw["lstm_left"], raw["lstm_epi"], raw["lstm_right"]]  # concat order

    whh = jnp.zeros((HT, GATES * HT), jnp.float32)
    bias = jnp.zeros((1, GATES * HT), jnp.float32)
    tables = []
    for s, (w_ih, w_hh, b) in enumerate(streams):
        proj = embed_pad @ w_ih                      # (VOCAB_PAD, 4H), gate order [i,f,g,o]
        tbl = jnp.zeros((VOCAB_PAD, GATES * HT), jnp.float32)
        for g in range(GATES):
            col = g * HT + s * H
            tbl = tbl.at[:, col:col + H].set(proj[:, g * H:(g + 1) * H])
            whh = whh.at[s * H:(s + 1) * H, col:col + H].set(w_hh[:, g * H:(g + 1) * H])
            bias = bias.at[0, col:col + H].set(b[0, g * H:(g + 1) * H])
        tables.append(tbl)

    c = raw["cls"]
    fused = {
        "tbl_left": tables[0], "tbl_epi": tables[1], "tbl_right": tables[2],
        "whh": whh, "bias": bias,
        # classifier, zero-padded to full 128-lane slabs (pad columns stay exactly 0)
        "bn1_gamma": jnp.zeros((1, HT), jnp.float32).at[:, :C_IN].set(c["bn1_gamma"]),
        "bn1_beta": jnp.zeros((1, HT), jnp.float32).at[:, :C_IN].set(c["bn1_beta"]),
        "lin1_w": jnp.zeros((HT, C_MID_PAD), jnp.float32).at[:C_IN, :C_MID].set(c["lin1_w"]),
        "lin1_b": jnp.zeros((1, C_MID_PAD), jnp.float32).at[:, :C_MID].set(c["lin1_b"]),
        "bn2_gamma": jnp.zeros((1, C_MID_PAD), jnp.float32).at[:, :C_MID].set(c["bn2_gamma"]),
        "bn2_beta": jnp.zeros((1, C_MID_PAD), jnp.float32).at[:, :C_MID].set(c["bn2_beta"]),
        "lin2_w": jnp.zeros((C_MID_PAD, 1), jnp.float32).at[:C_MID, :].set(c["lin2_w"]),
        "lin2_b": c["lin2_b"],
    }
    return fused


# ------------------------------ pure-JAX reference ---------------------------
def reference_forward(raw, epitope_x, left_x, right_x):
    emb = raw["embed"]

    def lstm_last(tokens, w_ih, w_hh, b, lengths):
        x = emb[tokens]                                     # (B, L, E)
        Bn, Ln, _ = x.shape
        h = jnp.zeros((Bn, HID), jnp.float32)
        c = jnp.zeros((Bn, HID), jnp.float32)
        outs = []
        for t in range(Ln):
            gates = x[:, t] @ w_ih + h @ w_hh + b
            i = jax.nn.sigmoid(gates[:, 0 * HID:1 * HID])
            f = jax.nn.sigmoid(gates[:, 1 * HID:2 * HID])
            g = jnp.tanh(gates[:, 2 * HID:3 * HID])
            o = jax.nn.sigmoid(gates[:, 3 * HID:4 * HID])
            c = f * c + i * g
            h = o * jnp.tanh(c)
            outs.append(h)
        hs = jnp.stack(outs, axis=1)
        idx = jnp.clip(lengths - 1, 0, Ln - 1)
        return hs[jnp.arange(Bn), idx]

    epi_len = jnp.sum(epitope_x != PAD, axis=1).astype(jnp.int32)
    left_len = jnp.sum(left_x != PAD, axis=1).astype(jnp.int32)
    left_len = left_len + jnp.where(left_len == 0, 1, 0)
    right_len = jnp.sum(right_x != PAD, axis=1).astype(jnp.int32)
    right_len = right_len + jnp.where(right_len == 0, 1, 0)

    hL = lstm_last(left_x, *raw["lstm_left"], left_len)
    hE = lstm_last(epitope_x, *raw["lstm_epi"], epi_len)
    hR = lstm_last(right_x, *raw["lstm_right"], right_len)
    x = jnp.concatenate([hL, hE, hR], axis=-1)

    def bn(x, gamma, beta):
        m = x.mean(0, keepdims=True)
        v = ((x - m) ** 2).mean(0, keepdims=True)
        return (x - m) * jax.lax.rsqrt(v + 1e-5) * gamma + beta

    c = raw["cls"]
    x = bn(x, c["bn1_gamma"], c["bn1_beta"])
    x = x @ c["lin1_w"] + c["lin1_b"]
    x = bn(x, c["bn2_gamma"], c["bn2_beta"])
    return (x @ c["lin2_w"] + c["lin2_b"]).reshape(-1)


# ------------------------------- test inputs ---------------------------------
def make_tokens(key, batch, max_len, min_len):
    k_len, k_tok = jax.random.split(key)
    lengths = jax.random.randint(k_len, (batch,), min_len, max_len + 1)
    toks = jax.random.randint(k_tok, (batch, max_len), 0, 26)   # letters A..Z (0..25)
    pos = jnp.arange(max_len)[None, :]
    return jnp.where(pos < lengths[:, None], toks, PAD).astype(jnp.int32)


# ----------------------------------- main ------------------------------------
if __name__ == "__main__":
    key = jax.random.PRNGKey(0)
    k_par, k_epi, k_left, k_right, k_tot = jax.random.split(key, 5)

    raw = make_raw_params(k_par)
    fused = build_fused_params(raw)

    epitope_x = make_tokens(k_epi, B, L_EPI, 1)       # epitope length >= 1
    left_antigen_x = make_tokens(k_left, B, L_ANT, 0)
    right_antigen_x = make_tokens(k_right, B, L_ANT, 0)
    total_antigen_x = make_tokens(k_tot, B, L_ANT, 1)  # accepted but unused (matches ref)

    out = base_model_forward(fused, epitope_x, left_antigen_x,
                             right_antigen_x, total_antigen_x)
    out = jax.block_until_ready(out)

    assert out.shape == (B,), out.shape
    assert bool(jnp.all(jnp.isfinite(out)))

    ref = reference_forward(raw, epitope_x, left_antigen_x, right_antigen_x)
    assert bool(jnp.allclose(out, ref, atol=1e-2, rtol=1e-2)), (out, ref)

    print("KERNEL_OK")
</pallas_src>

<mosaic_0001>
module attributes {stable_mosaic.version = 11 : i64} {
  func.func @fused_kernel(%arg0: memref<128x1xi32, #tpu.memory_space<vmem>>, %arg1: memref<128x1xi32, #tpu.memory_space<vmem>>, %arg2: memref<128x1xi32, #tpu.memory_space<vmem>>, %arg3: memref<32x512xf32, #tpu.memory_space<vmem>>, %arg4: memref<32x512xf32, #tpu.memory_space<vmem>>, %arg5: memref<32x512xf32, #tpu.memory_space<vmem>>, %arg6: memref<128x512xf32, #tpu.memory_space<vmem>>, %arg7: memref<1x512xf32, #tpu.memory_space<vmem>>, %arg8: memref<8x128xi32, #tpu.memory_space<vmem>>, %arg9: memref<1x128xf32, #tpu.memory_space<vmem>>, %arg10: memref<1x128xf32, #tpu.memory_space<vmem>>, %arg11: memref<128x128xf32, #tpu.memory_space<vmem>>, %arg12: memref<1x128xf32, #tpu.memory_space<vmem>>, %arg13: memref<1x128xf32, #tpu.memory_space<vmem>>, %arg14: memref<1x128xf32, #tpu.memory_space<vmem>>, %arg15: memref<128x1xf32, #tpu.memory_space<vmem>>, %arg16: memref<1x1xf32, #tpu.memory_space<vmem>>, %arg17: memref<8x1xf32, #tpu.memory_space<vmem>>, %arg18: memref<128x512xf32, #tpu.memory_space<vmem>>) attributes {dimension_semantics = [], scalar_prefetch = 0 : i64, scratch_operands = 1 : i64, tpu.core_type = #tpu.core_type<tc>} {
    %0 = tpu.iota {dimensions = array<i32: 1>} : vector<128x32xi32>
    %c0 = arith.constant 0 : index
    %c0_0 = arith.constant 0 : index
    %1 = vector.load %arg0[%c0, %c0_0] : memref<128x1xi32, #tpu.memory_space<vmem>>, vector<128x1xi32>
    %2 = vector.broadcast %1 : vector<128x1xi32> to vector<128x32xi32>
    %3 = arith.cmpi eq, %2, %0 : vector<128x32xi32>
    %4 = arith.extui %3 : vector<128x32xi1> to vector<128x32xi32>
    %5 = arith.sitofp %4 : vector<128x32xi32> to vector<128x32xf32>
    %c0_1 = arith.constant 0 : index
    %c0_2 = arith.constant 0 : index
    %6 = vector.load %arg1[%c0_1, %c0_2] : memref<128x1xi32, #tpu.memory_space<vmem>>, vector<128x1xi32>
    %7 = vector.broadcast %6 : vector<128x1xi32> to vector<128x32xi32>
    %8 = arith.cmpi eq, %7, %0 : vector<128x32xi32>
    %9 = arith.extui %8 : vector<128x32xi1> to vector<128x32xi32>
    %10 = arith.sitofp %9 : vector<128x32xi32> to vector<128x32xf32>
    %c0_3 = arith.constant 0 : index
    %c0_4 = arith.constant 0 : index
    %11 = vector.load %arg2[%c0_3, %c0_4] : memref<128x1xi32, #tpu.memory_space<vmem>>, vector<128x1xi32>
    %12 = vector.broadcast %11 : vector<128x1xi32> to vector<128x32xi32>
    %13 = arith.cmpi eq, %12, %0 : vector<128x32xi32>
    %14 = arith.extui %13 : vector<128x32xi1> to vector<128x32xi32>
    %15 = arith.sitofp %14 : vector<128x32xi32> to vector<128x32xf32>
    %c0_5 = arith.constant 0 : index
    %c0_6 = arith.constant 0 : index
    %16 = vector.load %arg3[%c0_5, %c0_6] : memref<32x512xf32, #tpu.memory_space<vmem>>, vector<32x512xf32>
    %cst = arith.constant dense<0.000000e+00> : vector<128x512xf32>
    %17 = tpu.matmul %5, %16, %cst {dimension_numbers = #tpu.dot_dimension_numbers<[1], [0], [0], [1], [0, 0, 1, 1], [], []>} : vector<128x32xf32>, vector<32x512xf32>, vector<128x512xf32> -> vector<128x512xf32>
    %c0_7 = arith.constant 0 : index
    %c0_8 = arith.constant 0 : index
    %18 = vector.load %arg4[%c0_7, %c0_8] : memref<32x512xf32, #tpu.memory_space<vmem>>, vector<32x512xf32>
    %cst_9 = arith.constant dense<0.000000e+00> : vector<128x512xf32>
    %19 = tpu.matmul %10, %18, %cst_9 {dimension_numbers = #tpu.dot_dimension_numbers<[1], [0], [0], [1], [0, 0, 1, 1], [], []>} : vector<128x32xf32>, vector<32x512xf32>, vector<128x512xf32> -> vector<128x512xf32>
    %20 = arith.addf %17, %19 : vector<128x512xf32>
    %c0_10 = arith.constant 0 : index
    %c0_11 = arith.constant 0 : index
    %21 = vector.load %arg5[%c0_10, %c0_11] : memref<32x512xf32, #tpu.memory_space<vmem>>, vector<32x512xf32>
    %cst_12 = arith.constant dense<0.000000e+00> : vector<128x512xf32>
    %22 = tpu.matmul %15, %21, %cst_12 {dimension_numbers = #tpu.dot_dimension_numbers<[1], [0], [0], [1], [0, 0, 1, 1], [], []>} : vector<128x32xf32>, vector<32x512xf32>, vector<128x512xf32> -> vector<128x512xf32>
    %23 = arith.addf %20, %22 : vector<128x512xf32>
    %c0_13 = arith.constant 0 : index
    %c0_14 = arith.constant 0 : index
    %24 = vector.load %arg7[%c0_13, %c0_14] : memref<1x512xf32, #tpu.memory_space<vmem>>, vector<1x512xf32>
    %25 = vector.broadcast %24 : vector<1x512xf32> to vector<128x512xf32>
    %26 = arith.addf %23, %25 : vector<128x512xf32>
    %c0_15 = arith.constant 0 : index
    %c0_16 = arith.constant 0 : index
    %27 = vector.load %arg18[%c0_15, %c0_16] : memref<128x512xf32, #tpu.memory_space<vmem>>, vector<128x512xf32>
    tpu.vector_store %arg18[%c0_15, %c0_16], %26 {strides = array<i32>} : memref<128x512xf32, #tpu.memory_space<vmem>>, vector<128x512xf32>,
    %c0_17 = arith.constant 0 : index
    %c0_18 = arith.constant 0 : index
    %28 = vector.load %arg6[%c0_17, %c0_18] : memref<128x512xf32, #tpu.memory_space<vmem>>, vector<128x512xf32>
    %c0_19 = arith.constant 0 : index
    %c0_20 = arith.constant 0 : index
    %29 = vector.load %arg8[%c0_19, %c0_20] : memref<8x128xi32, #tpu.memory_space<vmem>>, vector<8x128xi32>
    %cst_21 = arith.constant 0.000000e+00 : f32
    %30 = vector.broadcast %cst_21 : f32 to vector<8x128xf32>
    %c0_i32 = arith.constant 0 : i32
    %c8_i32 = arith.constant 8 : i32
    %31 = arith.muli %c0_i32, %c8_i32 : i32
    %32 = tpu.assume_multiple %31, 8 : i32
    %cst_22 = arith.constant dense<0.000000e+00> : vector<8x512xf32>
    %33 = tpu.matmul %30, %28, %cst_22 {dimension_numbers = #tpu.dot_dimension_numbers<[1], [0], [0], [1], [0, 0, 1, 1], [], []>} : vector<8x128xf32>, vector<128x512xf32>, vector<8x512xf32> -> vector<8x512xf32>
    %34 = arith.index_cast %32 : i32 to index
    %c0_23 = arith.constant 0 : index
    %35 = vector.load %arg18[%34, %c0_23] : memref<128x512xf32, #tpu.memory_space<vmem>>, vector<8x512xf32>
    %36 = arith.addf %33, %35 : vector<8x512xf32>
    %37 = vector.extract_strided_slice %36 {offsets = [0, 0], sizes = [8, 128], strides = [1, 1]} : vector<8x512xf32> to vector<8x128xf32>
    %38 = arith.negf %37 : vector<8x128xf32>
    %39 = math.exp %38 : vector<8x128xf32>
    %cst_24 = arith.constant 1.000000e+00 : f32
    %40 = vector.broadcast %cst_24 : f32 to vector<8x128xf32>
    %41 = arith.addf %40, %39 : vector<8x128xf32>
    %42 = arith.divf %40, %41 : vector<8x128xf32>
    %43 = vector.extract_strided_slice %36 {offsets = [0, 128], sizes = [8, 128], strides = [1, 1]} : vector<8x512xf32> to vector<8x128xf32>
    %44 = arith.negf %43 : vector<8x128xf32>
    %45 = math.exp %44 : vector<8x128xf32>
    %cst_25 = arith.constant 1.000000e+00 : f32
    %46 = vector.broadcast %cst_25 : f32 to vector<8x128xf32>
    %47 = arith.addf %46, %45 : vector<8x128xf32>
    %48 = arith.divf %46, %47 : vector<8x128xf32>
    %49 = vector.extract_strided_slice %36 {offsets = [0, 256], sizes = [8, 128], strides = [1, 1]} : vector<8x512xf32> to vector<8x128xf32>
    %50 = math.tanh %49 : vector<8x128xf32>
    %51 = vector.extract_strided_slice %36 {offsets = [0, 384], sizes = [8, 128], strides = [1, 1]} : vector<8x512xf32> to vector<8x128xf32>
    %52 = arith.negf %51 : vector<8x128xf32>
    %53 = math.exp %52 : vector<8x128xf32>
    %cst_26 = arith.constant 1.000000e+00 : f32
    %54 = vector.broadcast %cst_26 : f32 to vector<8x128xf32>
    %55 = arith.addf %54, %53 : vector<8x128xf32>
    %56 = arith.divf %54, %55 : vector<8x128xf32>
    %57 = arith.mulf %48, %30 : vector<8x128xf32>
    %58 = arith.mulf %42, %50 : vector<8x128xf32>
    %59 = arith.addf %57, %58 : vector<8x128xf32>
    %60 = math.tanh %59 : vector<8x128xf32>
    %61 = arith.mulf %56, %60 : vector<8x128xf32>
    %62 = vector.broadcast %c0_i32 : i32 to vector<8x128xi32>
    %63 = arith.cmpi eq, %29, %62 : vector<8x128xi32>
    %64 = arith.select %63, %61, %30 : vector<8x128xi1>, vector<8x128xf32>
    %c1_i32 = arith.constant 1 : i32
    %c8_i32_27 = arith.constant 8 : i32
    %65 = arith.muli %c1_i32, %c8_i32_27 : i32
    %66 = tpu.assume_multiple %65, 8 : i32
    %cst_28 = arith.constant dense<0.000000e+00> : vector<8x512xf32>
    %67 = tpu.matmul %61, %28, %cst_28 {dimension_numbers = #tpu.dot_dimension_numbers<[1], [0], [0], [1], [0, 0, 1, 1], [], []>} : vector<8x128xf32>, vector<128x512xf32>, vector<8x512xf32> -> vector<8x512xf32>
    %68 = arith.index_cast %66 : i32 to index
    %c0_29 = arith.constant 0 : index
    %69 = vector.load %arg18[%68, %c0_29] : memref<128x512xf32, #tpu.memory_space<vmem>>, vector<8x512xf32>
    %70 = arith.addf %67, %69 : vector<8x512xf32>
    %71 = vector.extract_strided_slice %70 {offsets = [0, 0], sizes = [8, 128], strides = [1, 1]} : vector<8x512xf32> to vector<8x128xf32>
    %72 = arith.negf %71 : vector<8x128xf32>
    %73 = math.exp %72 : vector<8x128xf32>
    %cst_30 = arith.constant 1.000000e+00 : f32
    %74 = vector.broadcast %cst_30 : f32 to vector<8x128xf32>
    %75 = arith.addf %74, %73 : vector<8x128xf32>
    %76 = arith.divf %74, %75 : vector<8x128xf32>
    %77 = vector.extract_strided_slice %70 {offsets = [0, 128], sizes = [8, 128], strides = [1, 1]} : vector<8x512xf32> to vector<8x128xf32>
    %78 = arith.negf %77 : vector<8x128xf32>
    %79 = math.exp %78 : vector<8x128xf32>
    %cst_31 = arith.constant 1.000000e+00 : f32
    %80 = vector.broadcast %cst_31 : f32 to vector<8x128xf32>
    %81 = arith.addf %80, %79 : vector<8x128xf32>
    %82 = arith.divf %80, %81 : vector<8x128xf32>
    %83 = vector.extract_strided_slice %70 {offsets = [0, 256], sizes = [8, 128], strides = [1, 1]} : vector<8x512xf32> to vector<8x128xf32>
    %84 = math.tanh %83 : vector<8x128xf32>
    %85 = vector.extract_strided_slice %70 {offsets = [0, 384], sizes = [8, 128], strides = [1, 1]} : vector<8x512xf32> to vector<8x128xf32>
    %86 = arith.negf %85 : vector<8x128xf32>
    %87 = math.exp %86 : vector<8x128xf32>
    %cst_32 = arith.constant 1.000000e+00 : f32
    %88 = vector.broadcast %cst_32 : f32 to vector<8x128xf32>
    %89 = arith.addf %88, %87 : vector<8x128xf32>
    %90 = arith.divf %88, %89 : vector<8x128xf32>
    %91 = arith.mulf %82, %59 : vector<8x128xf32>
    %92 = arith.mulf %76, %84 : vector<8x128xf32>
    %93 = arith.addf %91, %92 : vector<8x128xf32>
    %94 = math.tanh %93 : vector<8x128xf32>
    %95 = arith.mulf %90, %94 : vector<8x128xf32>
    %96 = vector.broadcast %c1_i32 : i32 to vector<8x128xi32>
    %97 = arith.cmpi eq, %29, %96 : vector<8x128xi32>
    %98 = arith.select %97, %95, %64 : vector<8x128xi1>, vector<8x128xf32>
    %c2_i32 = arith.constant 2 : i32
    %c8_i32_33 = arith.constant 8 : i32
    %99 = arith.muli %c2_i32, %c8_i32_33 : i32
    %100 = tpu.assume_multiple %99, 8 : i32
    %cst_34 = arith.constant dense<0.000000e+00> : vector<8x512xf32>
    %101 = tpu.matmul %95, %28, %cst_34 {dimension_numbers = #tpu.dot_dimension_numbers<[1], [0], [0], [1], [0, 0, 1, 1], [], []>} : vector<8x128xf32>, vector<128x512xf32>, vector<8x512xf32> -> vector<8x512xf32>
    %102 = arith.index_cast %100 : i32 to index
    %c0_35 = arith.constant 0 : index
    %103 = vector.load %arg18[%102, %c0_35] : memref<128x512xf32, #tpu.memory_space<vmem>>, vector<8x512xf32>
    %104 = arith.addf %101, %103 : vector<8x512xf32>
    %105 = vector.extract_strided_slice %104 {offsets = [0, 0], sizes = [8, 128], strides = [1, 1]} : vector<8x512xf32> to vector<8x128xf32>
    %106 = arith.negf %105 : vector<8x128xf32>
    %107 = math.exp %106 : vector<8x128xf32>
    %cst_36 = arith.constant 1.000000e+00 : f32
    %108 = vector.broadcast %cst_36 : f32 to vector<8x128xf32>
    %109 = arith.addf %108, %107 : vector<8x128xf32>
    %110 = arith.divf %108, %109 : vector<8x128xf32>
    %111 = vector.extract_strided_slice %104 {offsets = [0, 128], sizes = [8, 128], strides = [1, 1]} : vector<8x512xf32> to vector<8x128xf32>
    %112 = arith.negf %111 : vector<8x128xf32>
    %113 = math.exp %112 : vector<8x128xf32>
    %cst_37 = arith.constant 1.000000e+00 : f32
    %114 = vector.broadcast %cst_37 : f32 to vector<8x128xf32>
    %115 = arith.addf %114, %113 : vector<8x128xf32>
    %116 = arith.divf %114, %115 : vector<8x128xf32>
    %117 = vector.extract_strided_slice %104 {offsets = [0, 256], sizes = [8, 128], strides = [1, 1]} : vector<8x512xf32> to vector<8x128xf32>
    %118 = math.tanh %117 : vector<8x128xf32>
    %119 = vector.extract_strided_slice %104 {offsets = [0, 384], sizes = [8, 128], strides = [1, 1]} : vector<8x512xf32> to vector<8x128xf32>
    %120 = arith.negf %119 : vector<8x128xf32>
    %121 = math.exp %120 : vector<8x128xf32>
    %cst_38 = arith.constant 1.000000e+00 : f32
    %122 = vector.broadcast %cst_38 : f32 to vector<8x128xf32>
    %123 = arith.addf %122, %121 : vector<8x128xf32>
    %124 = arith.divf %122, %123 : vector<8x128xf32>
    %125 = arith.mulf %116, %93 : vector<8x128xf32>
    %126 = arith.mulf %110, %118 : vector<8x128xf32>
    %127 = arith.addf %125, %126 : vector<8x128xf32>
    %128 = math.tanh %127 : vector<8x128xf32>
    %129 = arith.mulf %124, %128 : vector<8x128xf32>
    %130 = vector.broadcast %c2_i32 : i32 to vector<8x128xi32>
    %131 = arith.cmpi eq, %29, %130 : vector<8x128xi32>
    %132 = arith.select %131, %129, %98 : vector<8x128xi1>, vector<8x128xf32>
    %c3_i32 = arith.constant 3 : i32
    %c8_i32_39 = arith.constant 8 : i32
    %133 = arith.muli %c3_i32, %c8_i32_39 : i32
    %134 = tpu.assume_multiple %133, 8 : i32
    %cst_40 = arith.constant dense<0.000000e+00> : vector<8x512xf32>
    %135 = tpu.matmul %129, %28, %cst_40 {dimension_numbers = #tpu.dot_dimension_numbers<[1], [0], [0], [1], [0, 0, 1, 1], [], []>} : vector<8x128xf32>, vector<128x512xf32>, vector<8x512xf32> -> vector<8x512xf32>
    %136 = arith.index_cast %134 : i32 to index
    %c0_41 = arith.constant 0 : index
    %137 = vector.load %arg18[%136, %c0_41] : memref<128x512xf32, #tpu.memory_space<vmem>>, vector<8x512xf32>
    %138 = arith.addf %135, %137 : vector<8x512xf32>
    %139 = vector.extract_strided_slice %138 {offsets = [0, 0], sizes = [8, 128], strides = [1, 1]} : vector<8x512xf32> to vector<8x128xf32>
    %140 = arith.negf %139 : vector<8x128xf32>
    %141 = math.exp %140 : vector<8x128xf32>
    %cst_42 = arith.constant 1.000000e+00 : f32
    %142 = vector.broadcast %cst_42 : f32 to vector<8x128xf32>
    %143 = arith.addf %142, %141 : vector<8x128xf32>
    %144 = arith.divf %142, %143 : vector<8x128xf32>
    %145 = vector.extract_strided_slice %138 {offsets = [0, 128], sizes = [8, 128], strides = [1, 1]} : vector<8x512xf32> to vector<8x128xf32>
    %146 = arith.negf %145 : vector<8x128xf32>
    %147 = math.exp %146 : vector<8x128xf32>
    %cst_43 = arith.constant 1.000000e+00 : f32
    %148 = vector.broadcast %cst_43 : f32 to vector<8x128xf32>
    %149 = arith.addf %148, %147 : vector<8x128xf32>
    %150 = arith.divf %148, %149 : vector<8x128xf32>
    %151 = vector.extract_strided_slice %138 {offsets = [0, 256], sizes = [8, 128], strides = [1, 1]} : vector<8x512xf32> to vector<8x128xf32>
    %152 = math.tanh %151 : vector<8x128xf32>
    %153 = vector.extract_strided_slice %138 {offsets = [0, 384], sizes = [8, 128], strides = [1, 1]} : vector<8x512xf32> to vector<8x128xf32>
    %154 = arith.negf %153 : vector<8x128xf32>
    %155 = math.exp %154 : vector<8x128xf32>
    %cst_44 = arith.constant 1.000000e+00 : f32
    %156 = vector.broadcast %cst_44 : f32 to vector<8x128xf32>
    %157 = arith.addf %156, %155 : vector<8x128xf32>
    %158 = arith.divf %156, %157 : vector<8x128xf32>
    %159 = arith.mulf %150, %127 : vector<8x128xf32>
    %160 = arith.mulf %144, %152 : vector<8x128xf32>
    %161 = arith.addf %159, %160 : vector<8x128xf32>
    %162 = math.tanh %161 : vector<8x128xf32>
    %163 = arith.mulf %158, %162 : vector<8x128xf32>
    %164 = vector.broadcast %c3_i32 : i32 to vector<8x128xi32>
    %165 = arith.cmpi eq, %29, %164 : vector<8x128xi32>
    %166 = arith.select %165, %163, %132 : vector<8x128xi1>, vector<8x128xf32>
    %c4_i32 = arith.constant 4 : i32
    %c8_i32_45 = arith.constant 8 : i32
    %167 = arith.muli %c4_i32, %c8_i32_45 : i32
    %168 = tpu.assume_multiple %167, 8 : i32
    %cst_46 = arith.constant dense<0.000000e+00> : vector<8x512xf32>
    %169 = tpu.matmul %163, %28, %cst_46 {dimension_numbers = #tpu.dot_dimension_numbers<[1], [0], [0], [1], [0, 0, 1, 1], [], []>} : vector<8x128xf32>, vector<128x512xf32>, vector<8x512xf32> -> vector<8x512xf32>
    %170 = arith.index_cast %168 : i32 to index
    %c0_47 = arith.constant 0 : index
    %171 = vector.load %arg18[%170, %c0_47] : memref<128x512xf32, #tpu.memory_space<vmem>>, vector<8x512xf32>
    %172 = arith.addf %169, %171 : vector<8x512xf32>
    %173 = vector.extract_strided_slice %172 {offsets = [0, 0], sizes = [8, 128], strides = [1, 1]} : vector<8x512xf32> to vector<8x128xf32>
    %174 = arith.negf %173 : vector<8x128xf32>
    %175 = math.exp %174 : vector<8x128xf32>
    %cst_48 = arith.constant 1.000000e+00 : f32
    %176 = vector.broadcast %cst_48 : f32 to vector<8x128xf32>
    %177 = arith.addf %176, %175 : vector<8x128xf32>
    %178 = arith.divf %176, %177 : vector<8x128xf32>
    %179 = vector.extract_strided_slice %172 {offsets = [0, 128], sizes = [8, 128], strides = [1, 1]} : vector<8x512xf32> to vector<8x128xf32>
    %180 = arith.negf %179 : vector<8x128xf32>
    %181 = math.exp %180 : vector<8x128xf32>
    %cst_49 = arith.constant 1.000000e+00 : f32
    %182 = vector.broadcast %cst_49 : f32 to vector<8x128xf32>
    %183 = arith.addf %182, %181 : vector<8x128xf32>
    %184 = arith.divf %182, %183 : vector<8x128xf32>
    %185 = vector.extract_strided_slice %172 {offsets = [0, 256], sizes = [8, 128], strides = [1, 1]} : vector<8x512xf32> to vector<8x128xf32>
    %186 = math.tanh %185 : vector<8x128xf32>
    %187 = vector.extract_strided_slice %172 {offsets = [0, 384], sizes = [8, 128], strides = [1, 1]} : vector<8x512xf32> to vector<8x128xf32>
    %188 = arith.negf %187 : vector<8x128xf32>
    %189 = math.exp %188 : vector<8x128xf32>
    %cst_50 = arith.constant 1.000000e+00 : f32
    %190 = vector.broadcast %cst_50 : f32 to vector<8x128xf32>
    %191 = arith.addf %190, %189 : vector<8x128xf32>
    %192 = arith.divf %190, %191 : vector<8x128xf32>
    %193 = arith.mulf %184, %161 : vector<8x128xf32>
    %194 = arith.mulf %178, %186 : vector<8x128xf32>
    %195 = arith.addf %193, %194 : vector<8x128xf32>
    %196 = math.tanh %195 : vector<8x128xf32>
    %197 = arith.mulf %192, %196 : vector<8x128xf32>
    %198 = vector.broadcast %c4_i32 : i32 to vector<8x128xi32>
    %199 = arith.cmpi eq, %29, %198 : vector<8x128xi32>
    %200 = arith.select %199, %197, %166 : vector<8x128xi1>, vector<8x128xf32>
    %c5_i32 = arith.constant 5 : i32
    %c8_i32_51 = arith.constant 8 : i32
    %201 = arith.muli %c5_i32, %c8_i32_51 : i32
    %202 = tpu.assume_multiple %201, 8 : i32
    %cst_52 = arith.constant dense<0.000000e+00> : vector<8x512xf32>
    %203 = tpu.matmul %197, %28, %cst_52 {dimension_numbers = #tpu.dot_dimension_numbers<[1], [0], [0], [1], [0, 0, 1, 1], [], []>} : vector<8x128xf32>, vector<128x512xf32>, vector<8x512xf32> -> vector<8x512xf32>
    %204 = arith.index_cast %202 : i32 to index
    %c0_53 = arith.constant 0 : index
    %205 = vector.load %arg18[%204, %c0_53] : memref<128x512xf32, #tpu.memory_space<vmem>>, vector<8x512xf32>
    %206 = arith.addf %203, %205 : vector<8x512xf32>
    %207 = vector.extract_strided_slice %206 {offsets = [0, 0], sizes = [8, 128], strides = [1, 1]} : vector<8x512xf32> to vector<8x128xf32>
    %208 = arith.negf %207 : vector<8x128xf32>
    %209 = math.exp %208 : vector<8x128xf32>
    %cst_54 = arith.constant 1.000000e+00 : f32
    %210 = vector.broadcast %cst_54 : f32 to vector<8x128xf32>
    %211 = arith.addf %210, %209 : vector<8x128xf32>
    %212 = arith.divf %210, %211 : vector<8x128xf32>
    %213 = vector.extract_strided_slice %206 {offsets = [0, 128], sizes = [8, 128], strides = [1, 1]} : vector<8x512xf32> to vector<8x128xf32>
    %214 = arith.negf %213 : vector<8x128xf32>
    %215 = math.exp %214 : vector<8x128xf32>
    %cst_55 = arith.constant 1.000000e+00 : f32
    %216 = vector.broadcast %cst_55 : f32 to vector<8x128xf32>
    %217 = arith.addf %216, %215 : vector<8x128xf32>
    %218 = arith.divf %216, %217 : vector<8x128xf32>
    %219 = vector.extract_strided_slice %206 {offsets = [0, 256], sizes = [8, 128], strides = [1, 1]} : vector<8x512xf32> to vector<8x128xf32>
    %220 = math.tanh %219 : vector<8x128xf32>
    %221 = vector.extract_strided_slice %206 {offsets = [0, 384], sizes = [8, 128], strides = [1, 1]} : vector<8x512xf32> to vector<8x128xf32>
    %222 = arith.negf %221 : vector<8x128xf32>
    %223 = math.exp %222 : vector<8x128xf32>
    %cst_56 = arith.constant 1.000000e+00 : f32
    %224 = vector.broadcast %cst_56 : f32 to vector<8x128xf32>
    %225 = arith.addf %224, %223 : vector<8x128xf32>
    %226 = arith.divf %224, %225 : vector<8x128xf32>
    %227 = arith.mulf %218, %195 : vector<8x128xf32>
    %228 = arith.mulf %212, %220 : vector<8x128xf32>
    %229 = arith.addf %227, %228 : vector<8x128xf32>
    %230 = math.tanh %229 : vector<8x128xf32>
    %231 = arith.mulf %226, %230 : vector<8x128xf32>
    %232 = vector.broadcast %c5_i32 : i32 to vector<8x128xi32>
    %233 = arith.cmpi eq, %29, %232 : vector<8x128xi32>
    %234 = arith.select %233, %231, %200 : vector<8x128xi1>, vector<8x128xf32>
    %c6_i32 = arith.constant 6 : i32
    %c8_i32_57 = arith.constant 8 : i32
    %235 = arith.muli %c6_i32, %c8_i32_57 : i32
    %236 = tpu.assume_multiple %235, 8 : i32
    %cst_58 = arith.constant dense<0.000000e+00> : vector<8x512xf32>
    %237 = tpu.matmul %231, %28, %cst_58 {dimension_numbers = #tpu.dot_dimension_numbers<[1], [0], [0], [1], [0, 0, 1, 1], [], []>} : vector<8x128xf32>, vector<128x512xf32>, vector<8x512xf32> -> vector<8x512xf32>
    %238 = arith.index_cast %236 : i32 to index
    %c0_59 = arith.constant 0 : index
    %239 = vector.load %arg18[%238, %c0_59] : memref<128x512xf32, #tpu.memory_space<vmem>>, vector<8x512xf32>
    %240 = arith.addf %237, %239 : vector<8x512xf32>
    %241 = vector.extract_strided_slice %240 {offsets = [0, 0], sizes = [8, 128], strides = [1, 1]} : vector<8x512xf32> to vector<8x128xf32>
    %242 = arith.negf %241 : vector<8x128xf32>
    %243 = math.exp %242 : vector<8x128xf32>
    %cst_60 = arith.constant 1.000000e+00 : f32
    %244 = vector.broadcast %cst_60 : f32 to vector<8x128xf32>
    %245 = arith.addf %244, %243 : vector<8x128xf32>
    %246 = arith.divf %244, %245 : vector<8x128xf32>
    %247 = vector.extract_strided_slice %240 {offsets = [0, 128], sizes = [8, 128], strides = [1, 1]} : vector<8x512xf32> to vector<8x128xf32>
    %248 = arith.negf %247 : vector<8x128xf32>
    %249 = math.exp %248 : vector<8x128xf32>
    %cst_61 = arith.constant 1.000000e+00 : f32
    %250 = vector.broadcast %cst_61 : f32 to vector<8x128xf32>
    %251 = arith.addf %250, %249 : vector<8x128xf32>
    %252 = arith.divf %250, %251 : vector<8x128xf32>
    %253 = vector.extract_strided_slice %240 {offsets = [0, 256], sizes = [8, 128], strides = [1, 1]} : vector<8x512xf32> to vector<8x128xf32>
    %254 = math.tanh %253 : vector<8x128xf32>
    %255 = vector.extract_strided_slice %240 {offsets = [0, 384], sizes = [8, 128], strides = [1, 1]} : vector<8x512xf32> to vector<8x128xf32>
    %256 = arith.negf %255 : vector<8x128xf32>
    %257 = math.exp %256 : vector<8x128xf32>
    %cst_62 = arith.constant 1.000000e+00 : f32
    %258 = vector.broadcast %cst_62 : f32 to vector<8x128xf32>
    %259 = arith.addf %258, %257 : vector<8x128xf32>
    %260 = arith.divf %258, %259 : vector<8x128xf32>
    %261 = arith.mulf %252, %229 : vector<8x128xf32>
    %262 = arith.mulf %246, %254 : vector<8x128xf32>
    %263 = arith.addf %261, %262 : vector<8x128xf32>
    %264 = math.tanh %263 : vector<8x128xf32>
    %265 = arith.mulf %260, %264 : vector<8x128xf32>
    %266 = vector.broadcast %c6_i32 : i32 to vector<8x128xi32>
    %267 = arith.cmpi eq, %29, %266 : vector<8x128xi32>
    %268 = arith.select %267, %265, %234 : vector<8x128xi1>, vector<8x128xf32>
    %c7_i32 = arith.constant 7 : i32
    %c8_i32_63 = arith.constant 8 : i32
    %269 = arith.muli %c7_i32, %c8_i32_63 : i32
    %270 = tpu.assume_multiple %269, 8 : i32
    %cst_64 = arith.constant dense<0.000000e+00> : vector<8x512xf32>
    %271 = tpu.matmul %265, %28, %cst_64 {dimension_numbers = #tpu.dot_dimension_numbers<[1], [0], [0], [1], [0, 0, 1, 1], [], []>} : vector<8x128xf32>, vector<128x512xf32>, vector<8x512xf32> -> vector<8x512xf32>
    %272 = arith.index_cast %270 : i32 to index
    %c0_65 = arith.constant 0 : index
    %273 = vector.load %arg18[%272, %c0_65] : memref<128x512xf32, #tpu.memory_space<vmem>>, vector<8x512xf32>
    %274 = arith.addf %271, %273 : vector<8x512xf32>
    %275 = vector.extract_strided_slice %274 {offsets = [0, 0], sizes = [8, 128], strides = [1, 1]} : vector<8x512xf32> to vector<8x128xf32>
    %276 = arith.negf %275 : vector<8x128xf32>
    %277 = math.exp %276 : vector<8x128xf32>
    %cst_66 = arith.constant 1.000000e+00 : f32
    %278 = vector.broadcast %cst_66 : f32 to vector<8x128xf32>
    %279 = arith.addf %278, %277 : vector<8x128xf32>
    %280 = arith.divf %278, %279 : vector<8x128xf32>
    %281 = vector.extract_strided_slice %274 {offsets = [0, 128], sizes = [8, 128], strides = [1, 1]} : vector<8x512xf32> to vector<8x128xf32>
    %282 = arith.negf %281 : vector<8x128xf32>
    %283 = math.exp %282 : vector<8x128xf32>
    %cst_67 = arith.constant 1.000000e+00 : f32
    %284 = vector.broadcast %cst_67 : f32 to vector<8x128xf32>
    %285 = arith.addf %284, %283 : vector<8x128xf32>
    %286 = arith.divf %284, %285 : vector<8x128xf32>
    %287 = vector.extract_strided_slice %274 {offsets = [0, 256], sizes = [8, 128], strides = [1, 1]} : vector<8x512xf32> to vector<8x128xf32>
    %288 = math.tanh %287 : vector<8x128xf32>
    %289 = vector.extract_strided_slice %274 {offsets = [0, 384], sizes = [8, 128], strides = [1, 1]} : vector<8x512xf32> to vector<8x128xf32>
    %290 = arith.negf %289 : vector<8x128xf32>
    %291 = math.exp %290 : vector<8x128xf32>
    %cst_68 = arith.constant 1.000000e+00 : f32
    %292 = vector.broadcast %cst_68 : f32 to vector<8x128xf32>
    %293 = arith.addf %292, %291 : vector<8x128xf32>
    %294 = arith.divf %292, %293 : vector<8x128xf32>
    %295 = arith.mulf %286, %263 : vector<8x128xf32>
    %296 = arith.mulf %280, %288 : vector<8x128xf32>
    %297 = arith.addf %295, %296 : vector<8x128xf32>
    %298 = math.tanh %297 : vector<8x128xf32>
    %299 = arith.mulf %294, %298 : vector<8x128xf32>
    %300 = vector.broadcast %c7_i32 : i32 to vector<8x128xi32>
    %301 = arith.cmpi eq, %29, %300 : vector<8x128xi32>
    %302 = arith.select %301, %299, %268 : vector<8x128xi1>, vector<8x128xf32>
    %c8_i32_69 = arith.constant 8 : i32
    %c8_i32_70 = arith.constant 8 : i32
    %303 = arith.muli %c8_i32_69, %c8_i32_70 : i32
    %304 = tpu.assume_multiple %303, 8 : i32
    %cst_71 = arith.constant dense<0.000000e+00> : vector<8x512xf32>
    %305 = tpu.matmul %299, %28, %cst_71 {dimension_numbers = #tpu.dot_dimension_numbers<[1], [0], [0], [1], [0, 0, 1, 1], [], []>} : vector<8x128xf32>, vector<128x512xf32>, vector<8x512xf32> -> vector<8x512xf32>
    %306 = arith.index_cast %304 : i32 to index
    %c0_72 = arith.constant 0 : index
    %307 = vector.load %arg18[%306, %c0_72] : memref<128x512xf32, #tpu.memory_space<vmem>>, vector<8x512xf32>
    %308 = arith.addf %305, %307 : vector<8x512xf32>
    %309 = vector.extract_strided_slice %308 {offsets = [0, 0], sizes = [8, 128], strides = [1, 1]} : vector<8x512xf32> to vector<8x128xf32>
    %310 = arith.negf %309 : vector<8x128xf32>
    %311 = math.exp %310 : vector<8x128xf32>
    %cst_73 = arith.constant 1.000000e+00 : f32
    %312 = vector.broadcast %cst_73 : f32 to vector<8x128xf32>
    %313 = arith.addf %312, %311 : vector<8x128xf32>
    %314 = arith.divf %312, %313 : vector<8x128xf32>
    %315 = vector.extract_strided_slice %308 {offsets = [0, 128], sizes = [8, 128], strides = [1, 1]} : vector<8x512xf32> to vector<8x128xf32>
    %316 = arith.negf %315 : vector<8x128xf32>
    %317 = math.exp %316 : vector<8x128xf32>
    %cst_74 = arith.constant 1.000000e+00 : f32
    %318 = vector.broadcast %cst_74 : f32 to vector<8x128xf32>
    %319 = arith.addf %318, %317 : vector<8x128xf32>
    %320 = arith.divf %318, %319 : vector<8x128xf32>
    %321 = vector.extract_strided_slice %308 {offsets = [0, 256], sizes = [8, 128], strides = [1, 1]} : vector<8x512xf32> to vector<8x128xf32>
    %322 = math.tanh %321 : vector<8x128xf32>
    %323 = vector.extract_strided_slice %308 {offsets = [0, 384], sizes = [8, 128], strides = [1, 1]} : vector<8x512xf32> to vector<8x128xf32>
    %324 = arith.negf %323 : vector<8x128xf32>
    %325 = math.exp %324 : vector<8x128xf32>
    %cst_75 = arith.constant 1.000000e+00 : f32
    %326 = vector.broadcast %cst_75 : f32 to vector<8x128xf32>
    %327 = arith.addf %326, %325 : vector<8x128xf32>
    %328 = arith.divf %326, %327 : vector<8x128xf32>
    %329 = arith.mulf %320, %297 : vector<8x128xf32>
    %330 = arith.mulf %314, %322 : vector<8x128xf32>
    %331 = arith.addf %329, %330 : vector<8x128xf32>
    %332 = math.tanh %331 : vector<8x128xf32>
    %333 = arith.mulf %328, %332 : vector<8x128xf32>
    %334 = vector.broadcast %c8_i32_69 : i32 to vector<8x128xi32>
    %335 = arith.cmpi eq, %29, %334 : vector<8x128xi32>
    %336 = arith.select %335, %333, %302 : vector<8x128xi1>, vector<8x128xf32>
    %c9_i32 = arith.constant 9 : i32
    %c8_i32_76 = arith.constant 8 : i32
    %337 = arith.muli %c9_i32, %c8_i32_76 : i32
    %338 = tpu.assume_multiple %337, 8 : i32
    %cst_77 = arith.constant dense<0.000000e+00> : vector<8x512xf32>
    %339 = tpu.matmul %333, %28, %cst_77 {dimension_numbers = #tpu.dot_dimension_numbers<[1], [0], [0], [1], [0, 0, 1, 1], [], []>} : vector<8x128xf32>, vector<128x512xf32>, vector<8x512xf32> -> vector<8x512xf32>
    %340 = arith.index_cast %338 : i32 to index
    %c0_78 = arith.constant 0 : index
    %341 = vector.load %arg18[%340, %c0_78] : memref<128x512xf32, #tpu.memory_space<vmem>>, vector<8x512xf32>
    %342 = arith.addf %339, %341 : vector<8x512xf32>
    %343 = vector.extract_strided_slice %342 {offsets = [0, 0], sizes = [8, 128], strides = [1, 1]} : vector<8x512xf32> to vector<8x128xf32>
    %344 = arith.negf %343 : vector<8x128xf32>
    %345 = math.exp %344 : vector<8x128xf32>
    %cst_79 = arith.constant 1.000000e+00 : f32
    %346 = vector.broadcast %cst_79 : f32 to vector<8x128xf32>
    %347 = arith.addf %346, %345 : vector<8x128xf32>
    %348 = arith.divf %346, %347 : vector<8x128xf32>
    %349 = vector.extract_strided_slice %342 {offsets = [0, 128], sizes = [8, 128], strides = [1, 1]} : vector<8x512xf32> to vector<8x128xf32>
    %350 = arith.negf %349 : vector<8x128xf32>
    %351 = math.exp %350 : vector<8x128xf32>
    %cst_80 = arith.constant 1.000000e+00 : f32
    %352 = vector.broadcast %cst_80 : f32 to vector<8x128xf32>
    %353 = arith.addf %352, %351 : vector<8x128xf32>
    %354 = arith.divf %352, %353 : vector<8x128xf32>
    %355 = vector.extract_strided_slice %342 {offsets = [0, 256], sizes = [8, 128], strides = [1, 1]} : vector<8x512xf32> to vector<8x128xf32>
    %356 = math.tanh %355 : vector<8x128xf32>
    %357 = vector.extract_strided_slice %342 {offsets = [0, 384], sizes = [8, 128], strides = [1, 1]} : vector<8x512xf32> to vector<8x128xf32>
    %358 = arith.negf %357 : vector<8x128xf32>
    %359 = math.exp %358 : vector<8x128xf32>
    %cst_81 = arith.constant 1.000000e+00 : f32
    %360 = vector.broadcast %cst_81 : f32 to vector<8x128xf32>
    %361 = arith.addf %360, %359 : vector<8x128xf32>
    %362 = arith.divf %360, %361 : vector<8x128xf32>
    %363 = arith.mulf %354, %331 : vector<8x128xf32>
    %364 = arith.mulf %348, %356 : vector<8x128xf32>
    %365 = arith.addf %363, %364 : vector<8x128xf32>
    %366 = math.tanh %365 : vector<8x128xf32>
    %367 = arith.mulf %362, %366 : vector<8x128xf32>
    %368 = vector.broadcast %c9_i32 : i32 to vector<8x128xi32>
    %369 = arith.cmpi eq, %29, %368 : vector<8x128xi32>
    %370 = arith.select %369, %367, %336 : vector<8x128xi1>, vector<8x128xf32>
    %c10_i32 = arith.constant 10 : i32
    %c8_i32_82 = arith.constant 8 : i32
    %371 = arith.muli %c10_i32, %c8_i32_82 : i32
    %372 = tpu.assume_multiple %371, 8 : i32
    %cst_83 = arith.constant dense<0.000000e+00> : vector<8x512xf32>
    %373 = tpu.matmul %367, %28, %cst_83 {dimension_numbers = #tpu.dot_dimension_numbers<[1], [0], [0], [1], [0, 0, 1, 1], [], []>} : vector<8x128xf32>, vector<128x512xf32>, vector<8x512xf32> -> vector<8x512xf32>
    %374 = arith.index_cast %372 : i32 to index
    %c0_84 = arith.constant 0 : index
    %375 = vector.load %arg18[%374, %c0_84] : memref<128x512xf32, #tpu.memory_space<vmem>>, vector<8x512xf32>
    %376 = arith.addf %373, %375 : vector<8x512xf32>
    %377 = vector.extract_strided_slice %376 {offsets = [0, 0], sizes = [8, 128], strides = [1, 1]} : vector<8x512xf32> to vector<8x128xf32>
    %378 = arith.negf %377 : vector<8x128xf32>
    %379 = math.exp %378 : vector<8x128xf32>
    %cst_85 = arith.constant 1.000000e+00 : f32
    %380 = vector.broadcast %cst_85 : f32 to vector<8x128xf32>
    %381 = arith.addf %380, %379 : vector<8x128xf32>
    %382 = arith.divf %380, %381 : vector<8x128xf32>
    %383 = vector.extract_strided_slice %376 {offsets = [0, 128], sizes = [8, 128], strides = [1, 1]} : vector<8x512xf32> to vector<8x128xf32>
    %384 = arith.negf %383 : vector<8x128xf32>
    %385 = math.exp %384 : vector<8x128xf32>
    %cst_86 = arith.constant 1.000000e+00 : f32
    %386 = vector.broadcast %cst_86 : f32 to vector<8x128xf32>
    %387 = arith.addf %386, %385 : vector<8x128xf32>
    %388 = arith.divf %386, %387 : vector<8x128xf32>
    %389 = vector.extract_strided_slice %376 {offsets = [0, 256], sizes = [8, 128], strides = [1, 1]} : vector<8x512xf32> to vector<8x128xf32>
    %390 = math.tanh %389 : vector<8x128xf32>
    %391 = vector.extract_strided_slice %376 {offsets = [0, 384], sizes = [8, 128], strides = [1, 1]} : vector<8x512xf32> to vector<8x128xf32>
    %392 = arith.negf %391 : vector<8x128xf32>
    %393 = math.exp %392 : vector<8x128xf32>
    %cst_87 = arith.constant 1.000000e+00 : f32
    %394 = vector.broadcast %cst_87 : f32 to vector<8x128xf32>
    %395 = arith.addf %394, %393 : vector<8x128xf32>
    %396 = arith.divf %394, %395 : vector<8x128xf32>
    %397 = arith.mulf %388, %365 : vector<8x128xf32>
    %398 = arith.mulf %382, %390 : vector<8x128xf32>
    %399 = arith.addf %397, %398 : vector<8x128xf32>
    %400 = math.tanh %399 : vector<8x128xf32>
    %401 = arith.mulf %396, %400 : vector<8x128xf32>
    %402 = vector.broadcast %c10_i32 : i32 to vector<8x128xi32>
    %403 = arith.cmpi eq, %29, %402 : vector<8x128xi32>
    %404 = arith.select %403, %401, %370 : vector<8x128xi1>, vector<8x128xf32>
    %c11_i32 = arith.constant 11 : i32
    %c8_i32_88 = arith.constant 8 : i32
    %405 = arith.muli %c11_i32, %c8_i32_88 : i32
    %406 = tpu.assume_multiple %405, 8 : i32
    %cst_89 = arith.constant dense<0.000000e+00> : vector<8x512xf32>
    %407 = tpu.matmul %401, %28, %cst_89 {dimension_numbers = #tpu.dot_dimension_numbers<[1], [0], [0], [1], [0, 0, 1, 1], [], []>} : vector<8x128xf32>, vector<128x512xf32>, vector<8x512xf32> -> vector<8x512xf32>
    %408 = arith.index_cast %406 : i32 to index
    %c0_90 = arith.constant 0 : index
    %409 = vector.load %arg18[%408, %c0_90] : memref<128x512xf32, #tpu.memory_space<vmem>>, vector<8x512xf32>
    %410 = arith.addf %407, %409 : vector<8x512xf32>
    %411 = vector.extract_strided_slice %410 {offsets = [0, 0], sizes = [8, 128], strides = [1, 1]} : vector<8x512xf32> to vector<8x128xf32>
    %412 = arith.negf %411 : vector<8x128xf32>
    %413 = math.exp %412 : vector<8x128xf32>
    %cst_91 = arith.constant 1.000000e+00 : f32
    %414 = vector.broadcast %cst_91 : f32 to vector<8x128xf32>
    %415 = arith.addf %414, %413 : vector<8x128xf32>
    %416 = arith.divf %414, %415 : vector<8x128xf32>
    %417 = vector.extract_strided_slice %410 {offsets = [0, 128], sizes = [8, 128], strides = [1, 1]} : vector<8x512xf32> to vector<8x128xf32>
    %418 = arith.negf %417 : vector<8x128xf32>
    %419 = math.exp %418 : vector<8x128xf32>
    %cst_92 = arith.constant 1.000000e+00 : f32
    %420 = vector.broadcast %cst_92 : f32 to vector<8x128xf32>
    %421 = arith.addf %420, %419 : vector<8x128xf32>
    %422 = arith.divf %420, %421 : vector<8x128xf32>
    %423 = vector.extract_strided_slice %410 {offsets = [0, 256], sizes = [8, 128], strides = [1, 1]} : vector<8x512xf32> to vector<8x128xf32>
    %424 = math.tanh %423 : vector<8x128xf32>
    %425 = vector.extract_strided_slice %410 {offsets = [0, 384], sizes = [8, 128], strides = [1, 1]} : vector<8x512xf32> to vector<8x128xf32>
    %426 = arith.negf %425 : vector<8x128xf32>
    %427 = math.exp %426 : vector<8x128xf32>
    %cst_93 = arith.constant 1.000000e+00 : f32
    %428 = vector.broadcast %cst_93 : f32 to vector<8x128xf32>
    %429 = arith.addf %428, %427 : vector<8x128xf32>
    %430 = arith.divf %428, %429 : vector<8x128xf32>
    %431 = arith.mulf %422, %399 : vector<8x128xf32>
    %432 = arith.mulf %416, %424 : vector<8x128xf32>
    %433 = arith.addf %431, %432 : vector<8x128xf32>
    %434 = math.tanh %433 : vector<8x128xf32>
    %435 = arith.mulf %430, %434 : vector<8x128xf32>
    %436 = vector.broadcast %c11_i32 : i32 to vector<8x128xi32>
    %437 = arith.cmpi eq, %29, %436 : vector<8x128xi32>
    %438 = arith.select %437, %435, %404 : vector<8x128xi1>, vector<8x128xf32>
    %c12_i32 = arith.constant 12 : i32
    %c8_i32_94 = arith.constant 8 : i32
    %439 = arith.muli %c12_i32, %c8_i32_94 : i32
    %440 = tpu.assume_multiple %439, 8 : i32
    %cst_95 = arith.constant dense<0.000000e+00> : vector<8x512xf32>
    %441 = tpu.matmul %435, %28, %cst_95 {dimension_numbers = #tpu.dot_dimension_numbers<[1], [0], [0], [1], [0, 0, 1, 1], [], []>} : vector<8x128xf32>, vector<128x512xf32>, vector<8x512xf32> -> vector<8x512xf32>
    %442 = arith.index_cast %440 : i32 to index
    %c0_96 = arith.constant 0 : index
    %443 = vector.load %arg18[%442, %c0_96] : memref<128x512xf32, #tpu.memory_space<vmem>>, vector<8x512xf32>
    %444 = arith.addf %441, %443 : vector<8x512xf32>
    %445 = vector.extract_strided_slice %444 {offsets = [0, 0], sizes = [8, 128], strides = [1, 1]} : vector<8x512xf32> to vector<8x128xf32>
    %446 = arith.negf %445 : vector<8x128xf32>
    %447 = math.exp %446 : vector<8x128xf32>
    %cst_97 = arith.constant 1.000000e+00 : f32
    %448 = vector.broadcast %cst_97 : f32 to vector<8x128xf32>
    %449 = arith.addf %448, %447 : vector<8x128xf32>
    %450 = arith.divf %448, %449 : vector<8x128xf32>
    %451 = vector.extract_strided_slice %444 {offsets = [0, 128], sizes = [8, 128], strides = [1, 1]} : vector<8x512xf32> to vector<8x128xf32>
    %452 = arith.negf %451 : vector<8x128xf32>
    %453 = math.exp %452 : vector<8x128xf32>
    %cst_98 = arith.constant 1.000000e+00 : f32
    %454 = vector.broadcast %cst_98 : f32 to vector<8x128xf32>
    %455 = arith.addf %454, %453 : vector<8x128xf32>
    %456 = arith.divf %454, %455 : vector<8x128xf32>
    %457 = vector.extract_strided_slice %444 {offsets = [0, 256], sizes = [8, 128], strides = [1, 1]} : vector<8x512xf32> to vector<8x128xf32>
    %458 = math.tanh %457 : vector<8x128xf32>
    %459 = vector.extract_strided_slice %444 {offsets = [0, 384], sizes = [8, 128], strides = [1, 1]} : vector<8x512xf32> to vector<8x128xf32>
    %460 = arith.negf %459 : vector<8x128xf32>
    %461 = math.exp %460 : vector<8x128xf32>
    %cst_99 = arith.constant 1.000000e+00 : f32
    %462 = vector.broadcast %cst_99 : f32 to vector<8x128xf32>
    %463 = arith.addf %462, %461 : vector<8x128xf32>
    %464 = arith.divf %462, %463 : vector<8x128xf32>
    %465 = arith.mulf %456, %433 : vector<8x128xf32>
    %466 = arith.mulf %450, %458 : vector<8x128xf32>
    %467 = arith.addf %465, %466 : vector<8x128xf32>
    %468 = math.tanh %467 : vector<8x128xf32>
    %469 = arith.mulf %464, %468 : vector<8x128xf32>
    %470 = vector.broadcast %c12_i32 : i32 to vector<8x128xi32>
    %471 = arith.cmpi eq, %29, %470 : vector<8x128xi32>
    %472 = arith.select %471, %469, %438 : vector<8x128xi1>, vector<8x128xf32>
    %c13_i32 = arith.constant 13 : i32
    %c8_i32_100 = arith.constant 8 : i32
    %473 = arith.muli %c13_i32, %c8_i32_100 : i32
    %474 = tpu.assume_multiple %473, 8 : i32
    %cst_101 = arith.constant dense<0.000000e+00> : vector<8x512xf32>
    %475 = tpu.matmul %469, %28, %cst_101 {dimension_numbers = #tpu.dot_dimension_numbers<[1], [0], [0], [1], [0, 0, 1, 1], [], []>} : vector<8x128xf32>, vector<128x512xf32>, vector<8x512xf32> -> vector<8x512xf32>
    %476 = arith.index_cast %474 : i32 to index
    %c0_102 = arith.constant 0 : index
    %477 = vector.load %arg18[%476, %c0_102] : memref<128x512xf32, #tpu.memory_space<vmem>>, vector<8x512xf32>
    %478 = arith.addf %475, %477 : vector<8x512xf32>
    %479 = vector.extract_strided_slice %478 {offsets = [0, 0], sizes = [8, 128], strides = [1, 1]} : vector<8x512xf32> to vector<8x128xf32>
    %480 = arith.negf %479 : vector<8x128xf32>
    %481 = math.exp %480 : vector<8x128xf32>
    %cst_103 = arith.constant 1.000000e+00 : f32
    %482 = vector.broadcast %cst_103 : f32 to vector<8x128xf32>
    %483 = arith.addf %482, %481 : vector<8x128xf32>
    %484 = arith.divf %482, %483 : vector<8x128xf32>
    %485 = vector.extract_strided_slice %478 {offsets = [0, 128], sizes = [8, 128], strides = [1, 1]} : vector<8x512xf32> to vector<8x128xf32>
    %486 = arith.negf %485 : vector<8x128xf32>
    %487 = math.exp %486 : vector<8x128xf32>
    %cst_104 = arith.constant 1.000000e+00 : f32
    %488 = vector.broadcast %cst_104 : f32 to vector<8x128xf32>
    %489 = arith.addf %488, %487 : vector<8x128xf32>
    %490 = arith.divf %488, %489 : vector<8x128xf32>
    %491 = vector.extract_strided_slice %478 {offsets = [0, 256], sizes = [8, 128], strides = [1, 1]} : vector<8x512xf32> to vector<8x128xf32>
    %492 = math.tanh %491 : vector<8x128xf32>
    %493 = vector.extract_strided_slice %478 {offsets = [0, 384], sizes = [8, 128], strides = [1, 1]} : vector<8x512xf32> to vector<8x128xf32>
    %494 = arith.negf %493 : vector<8x128xf32>
    %495 = math.exp %494 : vector<8x128xf32>
    %cst_105 = arith.constant 1.000000e+00 : f32
    %496 = vector.broadcast %cst_105 : f32 to vector<8x128xf32>
    %497 = arith.addf %496, %495 : vector<8x128xf32>
    %498 = arith.divf %496, %497 : vector<8x128xf32>
    %499 = arith.mulf %490, %467 : vector<8x128xf32>
    %500 = arith.mulf %484, %492 : vector<8x128xf32>
    %501 = arith.addf %499, %500 : vector<8x128xf32>
    %502 = math.tanh %501 : vector<8x128xf32>
    %503 = arith.mulf %498, %502 : vector<8x128xf32>
    %504 = vector.broadcast %c13_i32 : i32 to vector<8x128xi32>
    %505 = arith.cmpi eq, %29, %504 : vector<8x128xi32>
    %506 = arith.select %505, %503, %472 : vector<8x128xi1>, vector<8x128xf32>
    %c14_i32 = arith.constant 14 : i32
    %c8_i32_106 = arith.constant 8 : i32
    %507 = arith.muli %c14_i32, %c8_i32_106 : i32
    %508 = tpu.assume_multiple %507, 8 : i32
    %cst_107 = arith.constant dense<0.000000e+00> : vector<8x512xf32>
    %509 = tpu.matmul %503, %28, %cst_107 {dimension_numbers = #tpu.dot_dimension_numbers<[1], [0], [0], [1], [0, 0, 1, 1], [], []>} : vector<8x128xf32>, vector<128x512xf32>, vector<8x512xf32> -> vector<8x512xf32>
    %510 = arith.index_cast %508 : i32 to index
    %c0_108 = arith.constant 0 : index
    %511 = vector.load %arg18[%510, %c0_108] : memref<128x512xf32, #tpu.memory_space<vmem>>, vector<8x512xf32>
    %512 = arith.addf %509, %511 : vector<8x512xf32>
    %513 = vector.extract_strided_slice %512 {offsets = [0, 0], sizes = [8, 128], strides = [1, 1]} : vector<8x512xf32> to vector<8x128xf32>
    %514 = arith.negf %513 : vector<8x128xf32>
    %515 = math.exp %514 : vector<8x128xf32>
    %cst_109 = arith.constant 1.000000e+00 : f32
    %516 = vector.broadcast %cst_109 : f32 to vector<8x128xf32>
    %517 = arith.addf %516, %515 : vector<8x128xf32>
    %518 = arith.divf %516, %517 : vector<8x128xf32>
    %519 = vector.extract_strided_slice %512 {offsets = [0, 128], sizes = [8, 128], strides = [1, 1]} : vector<8x512xf32> to vector<8x128xf32>
    %520 = arith.negf %519 : vector<8x128xf32>
    %521 = math.exp %520 : vector<8x128xf32>
    %cst_110 = arith.constant 1.000000e+00 : f32
    %522 = vector.broadcast %cst_110 : f32 to vector<8x128xf32>
    %523 = arith.addf %522, %521 : vector<8x128xf32>
    %524 = arith.divf %522, %523 : vector<8x128xf32>
    %525 = vector.extract_strided_slice %512 {offsets = [0, 256], sizes = [8, 128], strides = [1, 1]} : vector<8x512xf32> to vector<8x128xf32>
    %526 = math.tanh %525 : vector<8x128xf32>
    %527 = vector.extract_strided_slice %512 {offsets = [0, 384], sizes = [8, 128], strides = [1, 1]} : vector<8x512xf32> to vector<8x128xf32>
    %528 = arith.negf %527 : vector<8x128xf32>
    %529 = math.exp %528 : vector<8x128xf32>
    %cst_111 = arith.constant 1.000000e+00 : f32
    %530 = vector.broadcast %cst_111 : f32 to vector<8x128xf32>
    %531 = arith.addf %530, %529 : vector<8x128xf32>
    %532 = arith.divf %530, %531 : vector<8x128xf32>
    %533 = arith.mulf %524, %501 : vector<8x128xf32>
    %534 = arith.mulf %518, %526 : vector<8x128xf32>
    %535 = arith.addf %533, %534 : vector<8x128xf32>
    %536 = math.tanh %535 : vector<8x128xf32>
    %537 = arith.mulf %532, %536 : vector<8x128xf32>
    %538 = vector.broadcast %c14_i32 : i32 to vector<8x128xi32>
    %539 = arith.cmpi eq, %29, %538 : vector<8x128xi32>
    %540 = arith.select %539, %537, %506 : vector<8x128xi1>, vector<8x128xf32>
    %c15_i32 = arith.constant 15 : i32
    %c8_i32_112 = arith.constant 8 : i32
    %541 = arith.muli %c15_i32, %c8_i32_112 : i32
    %542 = tpu.assume_multiple %541, 8 : i32
    %cst_113 = arith.constant dense<0.000000e+00> : vector<8x512xf32>
    %543 = tpu.matmul %537, %28, %cst_113 {dimension_numbers = #tpu.dot_dimension_numbers<[1], [0], [0], [1], [0, 0, 1, 1], [], []>} : vector<8x128xf32>, vector<128x512xf32>, vector<8x512xf32> -> vector<8x512xf32>
    %544 = arith.index_cast %542 : i32 to index
    %c0_114 = arith.constant 0 : index
    %545 = vector.load %arg18[%544, %c0_114] : memref<128x512xf32, #tpu.memory_space<vmem>>, vector<8x512xf32>
    %546 = arith.addf %543, %545 : vector<8x512xf32>
    %547 = vector.extract_strided_slice %546 {offsets = [0, 0], sizes = [8, 128], strides = [1, 1]} : vector<8x512xf32> to vector<8x128xf32>
    %548 = arith.negf %547 : vector<8x128xf32>
    %549 = math.exp %548 : vector<8x128xf32>
    %cst_115 = arith.constant 1.000000e+00 : f32
    %550 = vector.broadcast %cst_115 : f32 to vector<8x128xf32>
    %551 = arith.addf %550, %549 : vector<8x128xf32>
    %552 = arith.divf %550, %551 : vector<8x128xf32>
    %553 = vector.extract_strided_slice %546 {offsets = [0, 128], sizes = [8, 128], strides = [1, 1]} : vector<8x512xf32> to vector<8x128xf32>
    %554 = arith.negf %553 : vector<8x128xf32>
    %555 = math.exp %554 : vector<8x128xf32>
    %cst_116 = arith.constant 1.000000e+00 : f32
    %556 = vector.broadcast %cst_116 : f32 to vector<8x128xf32>
    %557 = arith.addf %556, %555 : vector<8x128xf32>
    %558 = arith.divf %556, %557 : vector<8x128xf32>
    %559 = vector.extract_strided_slice %546 {offsets = [0, 256], sizes = [8, 128], strides = [1, 1]} : vector<8x512xf32> to vector<8x128xf32>
    %560 = math.tanh %559 : vector<8x128xf32>
    %561 = vector.extract_strided_slice %546 {offsets = [0, 384], sizes = [8, 128], strides = [1, 1]} : vector<8x512xf32> to vector<8x128xf32>
    %562 = arith.negf %561 : vector<8x128xf32>
    %563 = math.exp %562 : vector<8x128xf32>
    %cst_117 = arith.constant 1.000000e+00 : f32
    %564 = vector.broadcast %cst_117 : f32 to vector<8x128xf32>
    %565 = arith.addf %564, %563 : vector<8x128xf32>
    %566 = arith.divf %564, %565 : vector<8x128xf32>
    %567 = arith.mulf %558, %535 : vector<8x128xf32>
    %568 = arith.mulf %552, %560 : vector<8x128xf32>
    %569 = arith.addf %567, %568 : vector<8x128xf32>
    %570 = math.tanh %569 : vector<8x128xf32>
    %571 = arith.mulf %566, %570 : vector<8x128xf32>
    %572 = vector.broadcast %c15_i32 : i32 to vector<8x128xi32>
    %573 = arith.cmpi eq, %29, %572 : vector<8x128xi32>
    %574 = arith.select %573, %571, %540 : vector<8x128xi1>, vector<8x128xf32>
    %c16_i32 = arith.constant 16 : i32
    %cst_118 = arith.constant dense<0.000000e+00> : vector<128xf32>
    %575 = vector.multi_reduction <add>, %574, %cst_118 [0] : vector<8x128xf32> to vector<128xf32>
    %576 = vector.shape_cast %575 : vector<128xf32> to vector<1x128xf32>
    %cst_119 = arith.constant 8.000000e+00 : f32
    %577 = vector.broadcast %cst_119 : f32 to vector<1x128xf32>
    %578 = arith.divf %576, %577 : vector<1x128xf32>
    %579 = vector.broadcast %578 : vector<1x128xf32> to vector<8x128xf32>
    %580 = arith.subf %574, %579 : vector<8x128xf32>
    %581 = arith.mulf %580, %580 : vector<8x128xf32>
    %cst_120 = arith.constant dense<0.000000e+00> : vector<128xf32>
    %582 = vector.multi_reduction <add>, %581, %cst_120 [0] : vector<8x128xf32> to vector<128xf32>
    %583 = vector.shape_cast %582 : vector<128xf32> to vector<1x128xf32>
    %cst_121 = arith.constant 8.000000e+00 : f32
    %584 = vector.broadcast %cst_121 : f32 to vector<1x128xf32>
    %585 = arith.divf %583, %584 : vector<1x128xf32>
    %586 = vector.broadcast %578 : vector<1x128xf32> to vector<8x128xf32>
    %587 = arith.subf %574, %586 : vector<8x128xf32>
    %cst_122 = arith.constant 9.99999974E-6 : f32
    %588 = vector.broadcast %cst_122 : f32 to vector<1x128xf32>
    %589 = arith.addf %585, %588 : vector<1x128xf32>
    %590 = math.rsqrt %589 : vector<1x128xf32>
    %591 = vector.broadcast %590 : vector<1x128xf32> to vector<8x128xf32>
    %592 = arith.mulf %587, %591 : vector<8x128xf32>
    %c0_123 = arith.constant 0 : index
    %c0_124 = arith.constant 0 : index
    %593 = vector.load %arg9[%c0_123, %c0_124] : memref<1x128xf32, #tpu.memory_space<vmem>>, vector<1x128xf32>
    %594 = vector.broadcast %593 : vector<1x128xf32> to vector<8x128xf32>
    %595 = arith.mulf %592, %594 : vector<8x128xf32>
    %c0_125 = arith.constant 0 : index
    %c0_126 = arith.constant 0 : index
    %596 = vector.load %arg10[%c0_125, %c0_126] : memref<1x128xf32, #tpu.memory_space<vmem>>, vector<1x128xf32>
    %597 = vector.broadcast %596 : vector<1x128xf32> to vector<8x128xf32>
    %598 = arith.addf %595, %597 : vector<8x128xf32>
    %c0_127 = arith.constant 0 : index
    %c0_128 = arith.constant 0 : index
    %599 = vector.load %arg11[%c0_127, %c0_128] : memref<128x128xf32, #tpu.memory_space<vmem>>, vector<128x128xf32>
    %cst_129 = arith.constant dense<0.000000e+00> : vector<8x128xf32>
    %600 = tpu.matmul %598, %599, %cst_129 {dimension_numbers = #tpu.dot_dimension_numbers<[1], [0], [0], [1], [0, 0, 1, 1], [], []>} : vector<8x128xf32>, vector<128x128xf32>, vector<8x128xf32> -> vector<8x128xf32>
    %c0_130 = arith.constant 0 : index
    %c0_131 = arith.constant 0 : index
    %601 = vector.load %arg12[%c0_130, %c0_131] : memref<1x128xf32, #tpu.memory_space<vmem>>, vector<1x128xf32>
    %602 = vector.broadcast %601 : vector<1x128xf32> to vector<8x128xf32>
    %603 = arith.addf %600, %602 : vector<8x128xf32>
    %cst_132 = arith.constant dense<0.000000e+00> : vector<128xf32>
    %604 = vector.multi_reduction <add>, %603, %cst_132 [0] : vector<8x128xf32> to vector<128xf32>
    %605 = vector.shape_cast %604 : vector<128xf32> to vector<1x128xf32>
    %cst_133 = arith.constant 8.000000e+00 : f32
    %606 = vector.broadcast %cst_133 : f32 to vector<1x128xf32>
    %607 = arith.divf %605, %606 : vector<1x128xf32>
    %608 = vector.broadcast %607 : vector<1x128xf32> to vector<8x128xf32>
    %609 = arith.subf %603, %608 : vector<8x128xf32>
    %610 = arith.mulf %609, %609 : vector<8x128xf32>
    %cst_134 = arith.constant dense<0.000000e+00> : vector<128xf32>
    %611 = vector.multi_reduction <add>, %610, %cst_134 [0] : vector<8x128xf32> to vector<128xf32>
    %612 = vector.shape_cast %611 : vector<128xf32> to vector<1x128xf32>
    %cst_135 = arith.constant 8.000000e+00 : f32
    %613 = vector.broadcast %cst_135 : f32 to vector<1x128xf32>
    %614 = arith.divf %612, %613 : vector<1x128xf32>
    %615 = vector.broadcast %607 : vector<1x128xf32> to vector<8x128xf32>
    %616 = arith.subf %603, %615 : vector<8x128xf32>
    %cst_136 = arith.constant 9.99999974E-6 : f32
    %617 = vector.broadcast %cst_136 : f32 to vector<1x128xf32>
    %618 = arith.addf %614, %617 : vector<1x128xf32>
    %619 = math.rsqrt %618 : vector<1x128xf32>
    %620 = vector.broadcast %619 : vector<1x128xf32> to vector<8x128xf32>
    %621 = arith.mulf %616, %620 : vector<8x128xf32>
    %c0_137 = arith.constant 0 : index
    %c0_138 = arith.constant 0 : index
    %622 = vector.load %arg13[%c0_137, %c0_138] : memref<1x128xf32, #tpu.memory_space<vmem>>, vector<1x128xf32>
    %623 = vector.broadcast %622 : vector<1x128xf32> to vector<8x128xf32>
    %624 = arith.mulf %621, %623 : vector<8x128xf32>
    %c0_139 = arith.constant 0 : index
    %c0_140 = arith.constant 0 : index
    %625 = vector.load %arg14[%c0_139, %c0_140] : memref<1x128xf32, #tpu.memory_space<vmem>>, vector<1x128xf32>
    %626 = vector.broadcast %625 : vector<1x128xf32> to vector<8x128xf32>
    %627 = arith.addf %624, %626 : vector<8x128xf32>
    %c0_141 = arith.constant 0 : index
    %c0_142 = arith.constant 0 : index
    %628 = vector.load %arg15[%c0_141, %c0_142] : memref<128x1xf32, #tpu.memory_space<vmem>>, vector<128x1xf32>
    %cst_143 = arith.constant dense<0.000000e+00> : vector<8x1xf32>
    %629 = tpu.matmul %627, %628, %cst_143 {dimension_numbers = #tpu.dot_dimension_numbers<[1], [0], [0], [1], [0, 0, 1, 1], [], []>} : vector<8x128xf32>, vector<128x1xf32>, vector<8x1xf32> -> vector<8x1xf32>
    %c0_144 = arith.constant 0 : index
    %c0_145 = arith.constant 0 : index
    %630 = vector.load %arg16[%c0_144, %c0_145] : memref<1x1xf32, #tpu.memory_space<vmem>>, vector<1x1xf32>
    %631 = vector.broadcast %630 : vector<1x1xf32> to vector<8x1xf32>
    %632 = arith.addf %629, %631 : vector<8x1xf32>
    %c0_146 = arith.constant 0 : index
    %c0_147 = arith.constant 0 : index
    %633 = vector.load %arg17[%c0_146, %c0_147] : memref<8x1xf32, #tpu.memory_space<vmem>>, vector<8x1xf32>
    tpu.vector_store %arg17[%c0_146, %c0_147], %632 {strides = array<i32>} : memref<8x1xf32, #tpu.memory_space<vmem>>, vector<8x1xf32>,
    return
  }
}

</mosaic_0001>

<llo_original>
// kernel: base_model_forward.1
$region0: #{base_model_forward.1}
  #allocation0 [shape = 'u32[]', space=smem, size = 0x4, offset = 0x4, fixed_abs, tag = 'smem constant byte address 0x4 - core index']
  #allocation1 [shape = 'u32[144,128]{1,0:T(1,128)}', space=vmem, size = 0x12000, scoped, tag = 'internal scratch']
  #allocation2 [shape = 'f32[128,512]{1,0:T(8,128)}', space=vmem, size = 0x40000, scoped, tag = 'scratch operand']
  #allocation3 [shape = 'f32[1,1]{1,0:T(1,128)S(1)}', space=vmem, size = 0x200, scoped, tag = 'scoped memory for base_model_forward.1']
  %s0 = inlined_call_operand.vmem [shape: s32[128,1], index: 0, kind: input, shape index: {}]
  %s1 = inlined_call_operand.vmem [shape: s32[128,1], index: 1, kind: input, shape index: {}]
  %s2 = inlined_call_operand.vmem [shape: s32[128,1], index: 2, kind: input, shape index: {}]
  %s3 = inlined_call_operand.vmem [shape: f32[32,512], index: 3, kind: input, shape index: {}]
  %s4 = inlined_call_operand.vmem [shape: f32[32,512], index: 4, kind: input, shape index: {}]
  %s5 = inlined_call_operand.hbm [shape: f32[32,512], index: 5, kind: input, shape index: {}]
  %s6 = inlined_call_operand.vmem [shape: f32[128,512], index: 6, kind: input, shape index: {}]
  %s7 = inlined_call_operand.vmem [shape: f32[1,512], index: 7, kind: input, shape index: {}]
  %s8 = inlined_call_operand.vmem [shape: s32[8,128], index: 8, kind: input, shape index: {}]
  %s9 = inlined_call_operand.vmem [shape: f32[1,128], index: 9, kind: input, shape index: {}]
  %s10 = inlined_call_operand.vmem [shape: f32[1,128], index: 10, kind: input, shape index: {}]
  %s11 = inlined_call_operand.hbm [shape: f32[128,128], index: 11, kind: input, shape index: {}]
  %s12 = inlined_call_operand.vmem [shape: f32[1,128], index: 12, kind: input, shape index: {}]
  %s13 = inlined_call_operand.vmem [shape: f32[1,128], index: 13, kind: input, shape index: {}]
  %s14 = inlined_call_operand.vmem [shape: f32[1,128], index: 14, kind: input, shape index: {}]
  %s15 = inlined_call_operand.vmem [shape: f32[128,1], index: 15, kind: input, shape index: {}]
  %s16 = inlined_call_operand.<no memory space> [shape: f32[1,1], index: 16, kind: input, shape index: {}]
  %s17 = inlined_call_operand.vmem [shape: f32[8,1], index: 17, kind: output, shape index: {}]
  %s18 = sld [smem:[#allocation0]]
  $region86: #{base_model_forward.1} parent=0
    _
  %s20 = ssub.s32 1, %s18
  %s21 = scalar_select 0, %s20, %s18
  %v22 = vstv %s16
  %23 = vst [vmem:[#allocation3] sm:$0x1] %v22
  $region1: #{base_model_forward.1} parent=0
    #allocation4 [shape = 'u8[65536]{0}', space=vmem, size = 0x10000, scoped, tag = 'input window, operand 5, single buffered']
    #allocation5 [shape = 's32[1]{0}', space=sflag, size = 0x4, scoped, tag = 'scoped memory for base_model_forward.1']
    #allocation6 [shape = 'u8[65536]{0}', space=vmem, size = 0x10000, scoped, tag = 'input window, operand 11, single buffered']
    #allocation7 [shape = 's32[1]{0}', space=sflag, size = 0x4, scoped, tag = 'scoped memory for base_model_forward.1']
    %24 = vsyncpa [#allocation5], 0
    %25 = vsyncpa [#allocation7], 0
    // Predicated region
    $region2: #{base_model_forward.1} parent=1 // pred_check
      _
    $region3: #{base_model_forward.1} parent=1 // pred_check_branch
      %27 = sbr.rel (0) target = $region5
    $region4: #{base_model_forward.1} parent=1 // pred_region
      _
    $region5: #{base_model_forward.1} parent=1 // pred_fallthru
      _
    // Predicated region
    $region6: #{base_model_forward.1} parent=1 // pred_check
      _
    $region7: #{base_model_forward.1} parent=1 // pred_check_branch
      %29 = sbr.rel (0) target = $region9
    $region8: #{base_model_forward.1} parent=1 // pred_region
      _
    $region9: #{base_model_forward.1} parent=1 // pred_fallthru
      _
    // Predicated region
    $region10: #{base_model_forward.1} parent=1 // pred_check
      _
    $region11: #{base_model_forward.1} parent=1 // pred_check_branch
      %31 = sbr.rel (0) target = $region13
    $region12: #{base_model_forward.1} parent=1 // pred_region
      _
    $region13: #{base_model_forward.1} parent=1 // pred_fallthru
      _
    // Predicated region
    $region14: #{base_model_forward.1} parent=1 // pred_check
      _
    $region15: #{base_model_forward.1} parent=1 // pred_check_branch
      %33 = sbr.rel (0) target = $region17
    $region16: #{base_model_forward.1} parent=1 // pred_region
      _
    $region17: #{base_model_forward.1} parent=1 // pred_fallthru
      _
    // Predicated region
    $region18: #{base_model_forward.1} parent=1 // pred_check
      _
    $region19: #{base_model_forward.1} parent=1 // pred_check_branch
      %35 = sbr.rel (0) target = $region21
    $region20: #{base_model_forward.1} parent=1 // pred_region
      _
    $region21: #{base_model_forward.1} parent=1 // pred_fallthru
      _
    // Predicated region
    $region22: #{base_model_forward.1} parent=1 // pred_check
      _
    $region23: #{base_model_forward.1} parent=1 // pred_check_branch
      %37 = sbr.rel (0) target = $region25
    $region24: #{base_model_forward.1} parent=1 // pred_region
      %s39 = ssub.s32 2048, 2048
      %40 = vsyncadd [#allocation5], %s39
      %s41 = sshll.u32 [#allocation4], 4
      %s42 = int_to_ptr.vmem [resolvable:$true] %s41
      %47 = dma.hbm_to_vmem [thread:$0]  %s5, 2048, %s42, [#allocation5], 512, 512, 32
    $region25: #{base_model_forward.1} parent=1 // pred_fallthru
      _
    // Predicated region
    $region26: #{base_model_forward.1} parent=1 // pred_check
      _
    $region27: #{base_model_forward.1} parent=1 // pred_check_branch
      %49 = sbr.rel (0) target = $region29
    $region28: #{base_model_forward.1} parent=1 // pred_region
      _
    $region29: #{base_model_forward.1} parent=1 // pred_fallthru
      _
    // Predicated region
    $region30: #{base_model_forward.1} parent=1 // pred_check
      _
    $region31: #{base_model_forward.1} parent=1 // pred_check_branch
      %51 = sbr.rel (0) target = $region33
    $region32: #{base_model_forward.1} parent=1 // pred_region
      _
    $region33: #{base_model_forward.1} parent=1 // pred_fallthru
      _
    // Predicated region
    $region34: #{base_model_forward.1} parent=1 // pred_check
      _
    $region35: #{base_model_forward.1} parent=1 // pred_check_branch
      %53 = sbr.rel (0) target = $region37
    $region36: #{base_model_forward.1} parent=1 // pred_region
      _
    $region37: #{base_model_forward.1} parent=1 // pred_fallthru
      _
    // Predicated region
    $region38: #{base_model_forward.1} parent=1 // pred_check
      _
    $region39: #{base_model_forward.1} parent=1 // pred_check_branch
      %55 = sbr.rel (0) target = $region41
    $region40: #{base_model_forward.1} parent=1 // pred_region
      _
    $region41: #{base_model_forward.1} parent=1 // pred_fallthru
      _
    // Predicated region
    $region42: #{base_model_forward.1} parent=1 // pred_check
      _
    $region43: #{base_model_forward.1} parent=1 // pred_check_branch
      %57 = sbr.rel (0) target = $region45
    $region44: #{base_model_forward.1} parent=1 // pred_region
      _
    $region45: #{base_model_forward.1} parent=1 // pred_fallthru
      _
    // Predicated region
    $region46: #{base_model_forward.1} parent=1 // pred_check
      _
    $region47: #{base_model_forward.1} parent=1 // pred_check_branch
      %59 = sbr.rel (0) target = $region49
    $region48: #{base_model_forward.1} parent=1 // pred_region
      %s61 = ssub.s32 2048, 2048
      %62 = vsyncadd [#allocation7], %s61
      %s63 = sshll.u32 [#allocation6], 4
      %s64 = int_to_ptr.vmem [resolvable:$true] %s63
      %69 = dma.hbm_to_vmem [thread:$0]  %s11, 2048, %s64, [#allocation7], 128, 128, 8
    $region49: #{base_model_forward.1} parent=1 // pred_fallthru
      _
    // Predicated region
    $region50: #{base_model_forward.1} parent=1 // pred_check
      _
    $region51: #{base_model_forward.1} parent=1 // pred_check_branch
      %71 = sbr.rel (0) target = $region53
    $region52: #{base_model_forward.1} parent=1 // pred_region
      _
    $region53: #{base_model_forward.1} parent=1 // pred_fallthru
      _
    // Predicated region
    $region54: #{base_model_forward.1} parent=1 // pred_check
      _
    $region55: #{base_model_forward.1} parent=1 // pred_check_branch
      %73 = sbr.rel (0) target = $region57
    $region56: #{base_model_forward.1} parent=1 // pred_region
      _
    $region57: #{base_model_forward.1} parent=1 // pred_fallthru
      _
    // Predicated region
    $region58: #{base_model_forward.1} parent=1 // pred_check
      _
    $region59: #{base_model_forward.1} parent=1 // pred_check_branch
      %75 = sbr.rel (0) target = $region61
    $region60: #{base_model_forward.1} parent=1 // pred_region
      _
    $region61: #{base_model_forward.1} parent=1 // pred_fallthru
      _
    // Predicated region
    $region62: #{base_model_forward.1} parent=1 // pred_check
      _
    $region63: #{base_model_forward.1} parent=1 // pred_check_branch
      %77 = sbr.rel (0) target = $region65
    $region64: #{base_model_forward.1} parent=1 // pred_region
      _
    $region65: #{base_model_forward.1} parent=1 // pred_fallthru
      _
    // Predicated region
    $region66: #{base_model_forward.1} parent=1 // pred_check
      _
    $region67: #{base_model_forward.1} parent=1 // pred_check_branch
      %79 = sbr.rel (0) target = $region69
    $region68: #{base_model_forward.1} parent=1 // pred_region
      _
    $region69: #{base_model_forward.1} parent=1 // pred_fallthru
      _
    // Predicated region
    $region70: #{base_model_forward.1} parent=1 // pred_check
      _
    $region71: #{base_model_forward.1} parent=1 // pred_check_branch
      %81 = sbr.rel (0) target = $region73
    $region72: #{base_model_forward.1} parent=1 // pred_region
      %82 = dma.done [#allocation5], 2048
    $region73: #{base_model_forward.1} parent=1 // pred_fallthru
      _
    // Predicated region
    $region74: #{base_model_forward.1} parent=1 // pred_check
      _
    $region75: #{base_model_forward.1} parent=1 // pred_check_branch
      %84 = sbr.rel (0) target = $region77
    $region76: #{base_model_forward.1} parent=1 // pred_region
      %85 = dma.done [#allocation7], 2048
    $region77: #{base_model_forward.1} parent=1 // pred_fallthru
      _
    %v86 = vlaneseq
    %v87 = vand.u32 %v86, 127
    %v88 = vld [vmem:[%s0] sm:$0xff]
    %v89 = vld [vmem:[%s0 + $0x8] sm:$0xff]
    %v90 = vld [vmem:[%s0 + $0x10] sm:$0xff]
    %v91 = vld [vmem:[%s0 + $0x18] sm:$0xff]
    %v92 = vld [vmem:[%s0 + $0x20] sm:$0xff]
    %v93 = vld [vmem:[%s0 + $0x28] sm:$0xff]
    %v94 = vld [vmem:[%s0 + $0x30] sm:$0xff]
    %v95 = vld [vmem:[%s0 + $0x38] sm:$0xff]
    %v96 = vld [vmem:[%s0 + $0x40] sm:$0xff]
    %v97 = vld [vmem:[%s0 + $0x48] sm:$0xff]
    %v98 = vld [vmem:[%s0 + $0x50] sm:$0xff]
    %v99 = vld [vmem:[%s0 + $0x58] sm:$0xff]
    %v100 = vld [vmem:[%s0 + $0x60] sm:$0xff]
    %v101 = vld [vmem:[%s0 + $0x68] sm:$0xff]
    %v102 = vld [vmem:[%s0 + $0x70] sm:$0xff]
    %v103 = vld [vmem:[%s0 + $0x78] sm:$0xff]
    %104 = vset.pattern.permute.xlu0 0
    %105 = vperm.xlu0 %104, %v88
    %v106 = vpop.permute.xlu0 %105
    %107 = vset.pattern.permute.xlu0 0
    %108 = vperm.xlu0 %107, %v89
    %v109 = vpop.permute.xlu0 %108
    %110 = vset.pattern.permute.xlu0 0
    %111 = vperm.xlu0 %110, %v90
    %v112 = vpop.permute.xlu0 %111
    %113 = vset.pattern.permute.xlu0 0
    %114 = vperm.xlu0 %113, %v91
    %v115 = vpop.permute.xlu0 %114
    %116 = vset.pattern.permute.xlu0 0
    %117 = vperm.xlu0 %116, %v92
    %v118 = vpop.permute.xlu0 %117
    %119 = vset.pattern.permute.xlu0 0
    %120 = vperm.xlu0 %119, %v93
    %v121 = vpop.permute.xlu0 %120
    %122 = vset.pattern.permute.xlu0 0
    %123 = vperm.xlu0 %122, %v94
    %v124 = vpop.permute.xlu0 %123
    %125 = vset.pattern.permute.xlu0 0
    %126 = vperm.xlu0 %125, %v95
    %v127 = vpop.permute.xlu0 %126
    %128 = vset.pattern.permute.xlu0 0
    %129 = vperm.xlu0 %128, %v96
    %v130 = vpop.permute.xlu0 %129
    %131 = vset.pattern.permute.xlu0 0
    %132 = vperm.xlu0 %131, %v97
    %v133 = vpop.permute.xlu0 %132
    %134 = vset.pattern.permute.xlu0 0
    %135 = vperm.xlu0 %134, %v98
    %v136 = vpop.permute.xlu0 %135
    %137 = vset.pattern.permute.xlu0 0
    %138 = vperm.xlu0 %137, %v99
    %v139 = vpop.permute.xlu0 %138
    %140 = vset.pattern.permute.xlu0 0
    %141 = vperm.xlu0 %140, %v100
    %v142 = vpop.permute.xlu0 %141
    %143 = vset.pattern.permute.xlu0 0
    %144 = vperm.xlu0 %143, %v101
    %v145 = vpop.permute.xlu0 %144
    %146 = vset.pattern.permute.xlu0 0
    %147 = vperm.xlu0 %146, %v102
    %v148 = vpop.permute.xlu0 %147
    %149 = vset.pattern.permute.xlu0 0
    %150 = vperm.xlu0 %149, %v103
    %v151 = vpop.permute.xlu0 %150
    %vm152 = vcmp.eq.s32.totalorder %v106, %v87
    %vm153 = vcmp.eq.s32.totalorder %v109, %v87
    %vm154 = vcmp.eq.s32.totalorder %v112, %v87
    %vm155 = vcmp.eq.s32.totalorder %v115, %v87
    %vm156 = vcmp.eq.s32.totalorder %v118, %v87
    %vm157 = vcmp.eq.s32.totalorder %v121, %v87
    %vm158 = vcmp.eq.s32.totalorder %v124, %v87
    %vm159 = vcmp.eq.s32.totalorder %v127, %v87
    %vm160 = vcmp.eq.s32.totalorder %v130, %v87
    %vm161 = vcmp.eq.s32.totalorder %v133, %v87
    %vm162 = vcmp.eq.s32.totalorder %v136, %v87
    %vm163 = vcmp.eq.s32.totalorder %v139, %v87
    %vm164 = vcmp.eq.s32.totalorder %v142, %v87
    %vm165 = vcmp.eq.s32.totalorder %v145, %v87
    %vm166 = vcmp.eq.s32.totalorder %v148, %v87
    %vm167 = vcmp.eq.s32.totalorder %v151, %v87
    %v168 = vsel %vm152, 1, 0
    %v169 = vsel %vm153, 1, 0
    %v170 = vsel %vm154, 1, 0
    %v171 = vsel %vm155, 1, 0
    %v172 = vsel %vm156, 1, 0
    %v173 = vsel %vm157, 1, 0
    %v174 = vsel %vm158, 1, 0
    %v175 = vsel %vm159, 1, 0
    %v176 = vsel %vm160, 1, 0
    %v177 = vsel %vm161, 1, 0
    %v178 = vsel %vm162, 1, 0
    %v179 = vsel %vm163, 1, 0
    %v180 = vsel %vm164, 1, 0
    %v181 = vsel %vm165, 1, 0
    %v182 = vsel %vm166, 1, 0
    %v183 = vsel %vm167, 1, 0
    %v184 = vcvt.s32.f32 %v168
    %v185 = vcvt.s32.f32 %v169
    %v186 = vcvt.s32.f32 %v170
    %v187 = vcvt.s32.f32 %v171
    %v188 = vcvt.s32.f32 %v172
    %v189 = vcvt.s32.f32 %v173
    %v190 = vcvt.s32.f32 %v174
    %v191 = vcvt.s32.f32 %v175
    %v192 = vcvt.s32.f32 %v176
    %v193 = vcvt.s32.f32 %v177
    %v194 = vcvt.s32.f32 %v178
    %v195 = vcvt.s32.f32 %v179
    %v196 = vcvt.s32.f32 %v180
    %v197 = vcvt.s32.f32 %v181
    %v198 = vcvt.s32.f32 %v182
    %v199 = vcvt.s32.f32 %v183
    %v200 = vld [vmem:[%s1] sm:$0xff]
    %v201 = vld [vmem:[%s1 + $0x8] sm:$0xff]
    %v202 = vld [vmem:[%s1 + $0x10] sm:$0xff]
    %v203 = vld [vmem:[%s1 + $0x18] sm:$0xff]
    %v204 = vld [vmem:[%s1 + $0x20] sm:$0xff]
    %v205 = vld [vmem:[%s1 + $0x28] sm:$0xff]
    %v206 = vld [vmem:[%s1 + $0x30] sm:$0xff]
    %v207 = vld [vmem:[%s1 + $0x38] sm:$0xff]
    %v208 = vld [vmem:[%s1 + $0x40] sm:$0xff]
    %v209 = vld [vmem:[%s1 + $0x48] sm:$0xff]
    %v210 = vld [vmem:[%s1 + $0x50] sm:$0xff]
    %v211 = vld [vmem:[%s1 + $0x58] sm:$0xff]
    %v212 = vld [vmem:[%s1 + $0x60] sm:$0xff]
    %v213 = vld [vmem:[%s1 + $0x68] sm:$0xff]
    %v214 = vld [vmem:[%s1 + $0x70] sm:$0xff]
    %v215 = vld [vmem:[%s1 + $0x78] sm:$0xff]
    %216 = vset.pattern.permute.xlu0 0
    %217 = vperm.xlu0 %216, %v200
    %v218 = vpop.permute.xlu0 %217
    %219 = vset.pattern.permute.xlu0 0
    %220 = vperm.xlu0 %219, %v201
    %v221 = vpop.permute.xlu0 %220
    %222 = vset.pattern.permute.xlu0 0
    %223 = vperm.xlu0 %222, %v202
    %v224 = vpop.permute.xlu0 %223
    %225 = vset.pattern.permute.xlu0 0
    %226 = vperm.xlu0 %225, %v203
    %v227 = vpop.permute.xlu0 %226
    %228 = vset.pattern.permute.xlu0 0
    %229 = vperm.xlu0 %228, %v204
    %v230 = vpop.permute.xlu0 %229
    %231 = vset.pattern.permute.xlu0 0
    %232 = vperm.xlu0 %231, %v205
    %v233 = vpop.permute.xlu0 %232
    %234 = vset.pattern.permute.xlu0 0
    %235 = vperm.xlu0 %234, %v206
    %v236 = vpop.permute.xlu0 %235
    %237 = vset.pattern.permute.xlu0 0
    %238 = vperm.xlu0 %237, %v207
    %v239 = vpop.permute.xlu0 %238
    %240 = vset.pattern.permute.xlu0 0
    %241 = vperm.xlu0 %240, %v208
    %v242 = vpop.permute.xlu0 %241
    %243 = vset.pattern.permute.xlu0 0
    %244 = vperm.xlu0 %243, %v209
    %v245 = vpop.permute.xlu0 %244
    %246 = vset.pattern.permute.xlu0 0
    %247 = vperm.xlu0 %246, %v210
    %v248 = vpop.permute.xlu0 %247
    %249 = vset.pattern.permute.xlu0 0
    %250 = vperm.xlu0 %249, %v211
    %v251 = vpop.permute.xlu0 %250
    %252 = vset.pattern.permute.xlu0 0
    %253 = vperm.xlu0 %252, %v212
    %v254 = vpop.permute.xlu0 %253
    %255 = vset.pattern.permute.xlu0 0
    %256 = vperm.xlu0 %255, %v213
    %v257 = vpop.permute.xlu0 %256
    %258 = vset.pattern.permute.xlu0 0
    %259 = vperm.xlu0 %258, %v214
    %v260 = vpop.permute.xlu0 %259
    %261 = vset.pattern.permute.xlu0 0
    %262 = vperm.xlu0 %261, %v215
    %v263 = vpop.permute.xlu0 %262
    %vm264 = vcmp.eq.s32.totalorder %v218, %v87
    %vm265 = vcmp.eq.s32.totalorder %v221, %v87
    %vm266 = vcmp.eq.s32.totalorder %v224, %v87
    %vm267 = vcmp.eq.s32.totalorder %v227, %v87
    %vm268 = vcmp.eq.s32.totalorder %v230, %v87
    %vm269 = vcmp.eq.s32.totalorder %v233, %v87
    %vm270 = vcmp.eq.s32.totalorder %v236, %v87
    %vm271 = vcmp.eq.s32.totalorder %v239, %v87
    %vm272 = vcmp.eq.s32.totalorder %v242, %v87
    %vm273 = vcmp.eq.s32.totalorder %v245, %v87
    %vm274 = vcmp.eq.s32.totalorder %v248, %v87
    %vm275 = vcmp.eq.s32.totalorder %v251, %v87
    %vm276 = vcmp.eq.s32.totalorder %v254, %v87
    %vm277 = vcmp.eq.s32.totalorder %v257, %v87
    %vm278 = vcmp.eq.s32.totalorder %v260, %v87
    %vm279 = vcmp.eq.s32.totalorder %v263, %v87
    %v280 = vsel %vm264, 1, 0
    %v281 = vsel %vm265, 1, 0
    %v282 = vsel %vm266, 1, 0
    %v283 = vsel %vm267, 1, 0
    %v284 = vsel %vm268, 1, 0
    %v285 = vsel %vm269, 1, 0
    %v286 = vsel %vm270, 1, 0
    %v287 = vsel %vm271, 1, 0
    %v288 = vsel %vm272, 1, 0
    %v289 = vsel %vm273, 1, 0
    %v290 = vsel %vm274, 1, 0
    %v291 = vsel %vm275, 1, 0
    %v292 = vsel %vm276, 1, 0
    %v293 = vsel %vm277, 1, 0
    %v294 = vsel %vm278, 1, 0
    %v295 = vsel %vm279, 1, 0
    %v296 = vcvt.s32.f32 %v280
    %v297 = vcvt.s32.f32 %v281
    %v298 = vcvt.s32.f32 %v282
    %v299 = vcvt.s32.f32 %v283
    %v300 = vcvt.s32.f32 %v284
    %v301 = vcvt.s32.f32 %v285
    %v302 = vcvt.s32.f32 %v286
    %v303 = vcvt.s32.f32 %v287
    %v304 = vcvt.s32.f32 %v288
    %v305 = vcvt.s32.f32 %v289
    %v306 = vcvt.s32.f32 %v290
    %v307 = vcvt.s32.f32 %v291
    %v308 = vcvt.s32.f32 %v292
    %v309 = vcvt.s32.f32 %v293
    %v310 = vcvt.s32.f32 %v294
    %v311 = vcvt.s32.f32 %v295
    %v312 = vld [vmem:[%s2] sm:$0xff]
    %v313 = vld [vmem:[%s2 + $0x8] sm:$0xff]
    %v314 = vld [vmem:[%s2 + $0x10] sm:$0xff]
    %v315 = vld [vmem:[%s2 + $0x18] sm:$0xff]
    %v316 = vld [vmem:[%s2 + $0x20] sm:$0xff]
    %v317 = vld [vmem:[%s2 + $0x28] sm:$0xff]
    %v318 = vld [vmem:[%s2 + $0x30] sm:$0xff]
    %v319 = vld [vmem:[%s2 + $0x38] sm:$0xff]
    %v320 = vld [vmem:[%s2 + $0x40] sm:$0xff]
    %v321 = vld [vmem:[%s2 + $0x48] sm:$0xff]
    %v322 = vld [vmem:[%s2 + $0x50] sm:$0xff]
    %v323 = vld [vmem:[%s2 + $0x58] sm:$0xff]
    %v324 = vld [vmem:[%s2 + $0x60] sm:$0xff]
    %v325 = vld [vmem:[%s2 + $0x68] sm:$0xff]
    %v326 = vld [vmem:[%s2 + $0x70] sm:$0xff]
    %v327 = vld [vmem:[%s2 + $0x78] sm:$0xff]
    %328 = vset.pattern.permute.xlu0 0
    %329 = vperm.xlu0 %328, %v312
    %v330 = vpop.permute.xlu0 %329
    %331 = vset.pattern.permute.xlu0 0
    %332 = vperm.xlu0 %331, %v313
    %v333 = vpop.permute.xlu0 %332
    %334 = vset.pattern.permute.xlu0 0
    %335 = vperm.xlu0 %334, %v314
    %v336 = vpop.permute.xlu0 %335
    %337 = vset.pattern.permute.xlu0 0
    %338 = vperm.xlu0 %337, %v315
    %v339 = vpop.permute.xlu0 %338
    %340 = vset.pattern.permute.xlu0 0
    %341 = vperm.xlu0 %340, %v316
    %v342 = vpop.permute.xlu0 %341
    %343 = vset.pattern.permute.xlu0 0
    %344 = vperm.xlu0 %343, %v317
    %v345 = vpop.permute.xlu0 %344
    %346 = vset.pattern.permute.xlu0 0
    %347 = vperm.xlu0 %346, %v318
    %v348 = vpop.permute.xlu0 %347
    %349 = vset.pattern.permute.xlu0 0
    %350 = vperm.xlu0 %349, %v319
    %v351 = vpop.permute.xlu0 %350
    %352 = vset.pattern.permute.xlu0 0
    %353 = vperm.xlu0 %352, %v320
    %v354 = vpop.permute.xlu0 %353
    %355 = vset.pattern.permute.xlu0 0
    %356 = vperm.xlu0 %355, %v321
    %v357 = vpop.permute.xlu0 %356
    %358 = vset.pattern.permute.xlu0 0
    %359 = vperm.xlu0 %358, %v322
    %v360 = vpop.permute.xlu0 %359
    %361 = vset.pattern.permute.xlu0 0
    %362 = vperm.xlu0 %361, %v323
    %v363 = vpop.permute.xlu0 %362
    %364 = vset.pattern.permute.xlu0 0
    %365 = vperm.xlu0 %364, %v324
    %v366 = vpop.permute.xlu0 %365
    %367 = vset.pattern.permute.xlu0 0
    %368 = vperm.xlu0 %367, %v325
    %v369 = vpop.permute.xlu0 %368
    %370 = vset.pattern.permute.xlu0 0
    %371 = vperm.xlu0 %370, %v326
    %v372 = vpop.permute.xlu0 %371
    %373 = vset.pattern.permute.xlu0 0
    %374 = vperm.xlu0 %373, %v327
    %v375 = vpop.permute.xlu0 %374
    %vm376 = vcmp.eq.s32.totalorder %v330, %v87
    %vm377 = vcmp.eq.s32.totalorder %v333, %v87
    %vm378 = vcmp.eq.s32.totalorder %v336, %v87
    %vm379 = vcmp.eq.s32.totalorder %v339, %v87
    %vm380 = vcmp.eq.s32.totalorder %v342, %v87
    %vm381 = vcmp.eq.s32.totalorder %v345, %v87
    %vm382 = vcmp.eq.s32.totalorder %v348, %v87
    %vm383 = vcmp.eq.s32.totalorder %v351, %v87
    %vm384 = vcmp.eq.s32.totalorder %v354, %v87
    %vm385 = vcmp.eq.s32.totalorder %v357, %v87
    %vm386 = vcmp.eq.s32.totalorder %v360, %v87
    %vm387 = vcmp.eq.s32.totalorder %v363, %v87
    %vm388 = vcmp.eq.s32.totalorder %v366, %v87
    %vm389 = vcmp.eq.s32.totalorder %v369, %v87
    %vm390 = vcmp.eq.s32.totalorder %v372, %v87
    %vm391 = vcmp.eq.s32.totalorder %v375, %v87
    %v392 = vsel %vm376, 1, 0
    %v393 = vsel %vm377, 1, 0
    %v394 = vsel %vm378, 1, 0
    %v395 = vsel %vm379, 1, 0
    %v396 = vsel %vm380, 1, 0
    %v397 = vsel %vm381, 1, 0
    %v398 = vsel %vm382, 1, 0
    %v399 = vsel %vm383, 1, 0
    %v400 = vsel %vm384, 1, 0
    %v401 = vsel %vm385, 1, 0
    %v402 = vsel %vm386, 1, 0
    %v403 = vsel %vm387, 1, 0
    %v404 = vsel %vm388, 1, 0
    %v405 = vsel %vm389, 1, 0
    %v406 = vsel %vm390, 1, 0
    %v407 = vsel %vm391, 1, 0
    %v408 = vcvt.s32.f32 %v392
    %v409 = vcvt.s32.f32 %v393
    %v410 = vcvt.s32.f32 %v394
    %v411 = vcvt.s32.f32 %v395
    %v412 = vcvt.s32.f32 %v396
    %v413 = vcvt.s32.f32 %v397
    %v414 = vcvt.s32.f32 %v398
    %v415 = vcvt.s32.f32 %v399
    %v416 = vcvt.s32.f32 %v400
    %v417 = vcvt.s32.f32 %v401
    %v418 = vcvt.s32.f32 %v402
    %v419 = vcvt.s32.f32 %v403
    %v420 = vcvt.s32.f32 %v404
    %v421 = vcvt.s32.f32 %v405
    %v422 = vcvt.s32.f32 %v406
    %v423 = vcvt.s32.f32 %v407
    %v424 = vld [vmem:[%s3] sm:$0xff]
    %v425 = vld [vmem:[%s3 + $0x8] sm:$0xff]
    %v426 = vld [vmem:[%s3 + $0x10] sm:$0xff]
    %v427 = vld [vmem:[%s3 + $0x18] sm:$0xff]
    %v428 = vld [vmem:[%s3 + $0x20] sm:$0xff]
    %v429 = vld [vmem:[%s3 + $0x28] sm:$0xff]
    %v430 = vld [vmem:[%s3 + $0x30] sm:$0xff]
    %v431 = vld [vmem:[%s3 + $0x38] sm:$0xff]
    %v432 = vld [vmem:[%s3 + $0x40] sm:$0xff]
    %v433 = vld [vmem:[%s3 + $0x48] sm:$0xff]
    %v434 = vld [vmem:[%s3 + $0x50] sm:$0xff]
    %v435 = vld [vmem:[%s3 + $0x58] sm:$0xff]
    %v436 = vld [vmem:[%s3 + $0x60] sm:$0xff]
    %v437 = vld [vmem:[%s3 + $0x68] sm:$0xff]
    %v438 = vld [vmem:[%s3 + $0x70] sm:$0xff]
    %v439 = vld [vmem:[%s3 + $0x78] sm:$0xff]
    %v440 = vld [vmem:[%s4] sm:$0xff]
    %v441 = vld [vmem:[%s4 + $0x8] sm:$0xff]
    %v442 = vld [vmem:[%s4 + $0x10] sm:$0xff]
    %v443 = vld [vmem:[%s4 + $0x18] sm:$0xff]
    %v444 = vld [vmem:[%s4 + $0x20] sm:$0xff]
    %v445 = vld [vmem:[%s4 + $0x28] sm:$0xff]
    %v446 = vld [vmem:[%s4 + $0x30] sm:$0xff]
    %v447 = vld [vmem:[%s4 + $0x38] sm:$0xff]
    %v448 = vld [vmem:[%s4 + $0x40] sm:$0xff]
    %v449 = vld [vmem:[%s4 + $0x48] sm:$0xff]
    %v450 = vld [vmem:[%s4 + $0x50] sm:$0xff]
    %v451 = vld [vmem:[%s4 + $0x58] sm:$0xff]
    %v452 = vld [vmem:[%s4 + $0x60] sm:$0xff]
    %v453 = vld [vmem:[%s4 + $0x68] sm:$0xff]
    %v454 = vld [vmem:[%s4 + $0x70] sm:$0xff]
    %v455 = vld [vmem:[%s4 + $0x78] sm:$0xff]
    %vm456 = vcmask 261120
    %v458 = vsel %vm456, %v296, 0
    %v461 = vsel %vm456, %v297, 0
    %v464 = vsel %vm456, %v298, 0
    %v467 = vsel %vm456, %v299, 0
    %v470 = vsel %vm456, %v300, 0
    %v473 = vsel %vm456, %v301, 0
    %v476 = vsel %vm456, %v302, 0
    %v479 = vsel %vm456, %v303, 0
    %v482 = vsel %vm456, %v304, 0
    %v485 = vsel %vm456, %v305, 0
    %v488 = vsel %vm456, %v306, 0
    %v491 = vsel %vm456, %v307, 0
    %v494 = vsel %vm456, %v308, 0
    %v497 = vsel %vm456, %v309, 0
    %v500 = vsel %vm456, %v310, 0
    %v503 = vsel %vm456, %v311, 0
    %505 = vmatprep.subr.mxu0 0.0
    %506 = vmatpush1.msra.mxu0 0.0
    %507 = vmatprep.subr.mxu0 0.0
    %508 = vmatpush1.msra.mxu0 0.0
    %509 = vmatprep.subr.mxu0 0.0
    %510 = vmatpush1.msra.mxu0 0.0
    %511 = vmatprep.subr.mxu0 0.0
    %512 = vmatpush1.msra.mxu0 0.0
    %513 = vmatprep.subr.mxu0 0.0
    %514 = vmatpush1.msra.mxu0 0.0
    %515 = vmatprep.subr.mxu0 0.0
    %516 = vmatpush1.msra.mxu0 0.0
    %517 = vmatprep.subr.mxu0 0.0
    %518 = vmatpush1.msra.mxu0 0.0
    %519 = vmatprep.subr.mxu0 0.0
    %520 = vmatpush1.msra.mxu0 0.0
    %521 = vmatprep.subr.mxu0 0.0
    %522 = vmatpush1.msra.mxu0 0.0
    %523 = vmatprep.subr.mxu0 0.0
    %524 = vmatpush1.msra.mxu0 0.0
    %525 = vmatprep.subr.mxu0 0.0
    %526 = vmatpush1.msra.mxu0 0.0
    %527 = vmatprep.subr.mxu0 0.0
    %528 = vmatpush1.msra.mxu0 0.0
    %529 = vmatprep.subr.mxu0 %v453
    %530 = vmatpush1.msra.mxu0 %v452
    %531 = vmatprep.subr.mxu0 %v449
    %532 = vmatpush1.msra.mxu0 %v448
    %533 = vmatprep.subr.mxu0 %v445
    %534 = vmatpush1.msra.mxu0 %v444
    %535 = vmatprep.subr.mxu0 %v441
    %536 = vmatpush1.msra.mxu0 %v440
    %537 = vmatprep.subr.mxu0 0.0
    %538 = vmatpush2.msra.mxu0 0.0
    %539 = vmatprep.subr.mxu0 0.0
    %540 = vmatpush2.msra.mxu0 0.0
    %541 = vmatprep.subr.mxu0 0.0
    %542 = vmatpush2.msra.mxu0 0.0
    %543 = vmatprep.subr.mxu0 0.0
    %544 = vmatpush2.msra.mxu0 0.0
    %545 = vmatprep.subr.mxu0 0.0
    %546 = vmatpush2.msra.mxu0 0.0
    %547 = vmatprep.subr.mxu0 0.0
    %548 = vmatpush2.msra.mxu0 0.0
    %549 = vmatprep.subr.mxu0 0.0
    %550 = vmatpush2.msra.mxu0 0.0
    %551 = vmatprep.subr.mxu0 0.0
    %552 = vmatpush2.msra.mxu0 0.0
    %553 = vmatprep.subr.mxu0 0.0
    %554 = vmatpush2.msra.mxu0 0.0
    %555 = vmatprep.subr.mxu0 0.0
    %556 = vmatpush2.msra.mxu0 0.0
    %557 = vmatprep.subr.mxu0 0.0
    %558 = vmatpush2.msra.mxu0 0.0
    %559 = vmatprep.subr.mxu0 0.0
    %560 = vmatpush2.msra.mxu0 0.0
    %561 = vmatprep.subr.mxu0 0.0
    %562 = vmatpush2.msra.mxu0 0.0
    %563 = vmatprep.subr.mxu0 0.0
    %564 = vmatpush2.msra.mxu0 0.0
    %565 = vmatprep.subr.mxu0 0.0
    %566 = vmatpush2.msra.mxu0 0.0
    %567 = vmatprep.subr.mxu0 0.0
    %568 = vmatpush2.msra.mxu0 0.0
    %569 = vmatprep.mubr.f32.mxu0 0.0
    %570 = vmatmul.mubr.f32.gmra.mxu0 %v458
    %v571 = vpop.f32.mrf.mxu0
    %v572 = vadd.f32 0.0, %v571
    %v573 = vpop.f32.mrf.mxu0
    %v574 = vadd.f32 0.0, %v573
    %575 = vmatprep.mubr.f32.mxu0 0.0
    %576 = vmatmul.mubr.f32.gmra.mxu0 %v461
    %v577 = vpop.f32.mrf.mxu0
    %v578 = vadd.f32 0.0, %v577
    %v579 = vpop.f32.mrf.mxu0
    %v580 = vadd.f32 0.0, %v579
    %581 = vmatprep.mubr.f32.mxu0 0.0
    %582 = vmatmul.mubr.f32.gmra.mxu0 %v464
    %v583 = vpop.f32.mrf.mxu0
    %v584 = vadd.f32 0.0, %v583
    %v585 = vpop.f32.mrf.mxu0
    %v586 = vadd.f32 0.0, %v585
    %587 = vmatprep.mubr.f32.mxu0 0.0
    %588 = vmatmul.mubr.f32.gmra.mxu0 %v467
    %v589 = vpop.f32.mrf.mxu0
    %v590 = vadd.f32 0.0, %v589
    %v591 = vpop.f32.mrf.mxu0
    %v592 = vadd.f32 0.0, %v591
    %593 = vmatprep.mubr.f32.mxu0 0.0
    %594 = vmatmul.mubr.f32.gmra.mxu0 %v470
    %v595 = vpop.f32.mrf.mxu0
    %v596 = vadd.f32 0.0, %v595
    %v597 = vpop.f32.mrf.mxu0
    %v598 = vadd.f32 0.0, %v597
    %599 = vmatprep.mubr.f32.mxu0 0.0
    %600 = vmatmul.mubr.f32.gmra.mxu0 %v473
    %v601 = vpop.f32.mrf.mxu0
    %v602 = vadd.f32 0.0, %v601
    %v603 = vpop.f32.mrf.mxu0
    %v604 = vadd.f32 0.0, %v603
    %605 = vmatprep.mubr.f32.mxu0 0.0
    %606 = vmatmul.mubr.f32.gmra.mxu0 %v476
    %v607 = vpop.f32.mrf.mxu0
    %v608 = vadd.f32 0.0, %v607
    %v609 = vpop.f32.mrf.mxu0
    %v610 = vadd.f32 0.0, %v609
    %611 = vmatprep.mubr.f32.mxu0 0.0
    %612 = vmatmul.mubr.f32.gmra.mxu0 %v479
    %v613 = vpop.f32.mrf.mxu0
    %v614 = vadd.f32 0.0, %v613
    %v615 = vpop.f32.mrf.mxu0
    %v616 = vadd.f32 0.0, %v615
    %617 = vmatprep.mubr.f32.mxu0 0.0
    %618 = vmatmul.mubr.f32.gmra.mxu0 %v482
    %v619 = vpop.f32.mrf.mxu0
    %v620 = vadd.f32 0.0, %v619
    %v621 = vpop.f32.mrf.mxu0
    %v622 = vadd.f32 0.0, %v621
    %623 = vmatprep.mubr.f32.mxu0 0.0
    %624 = vmatmul.mubr.f32.gmra.mxu0 %v485
    %v625 = vpop.f32.mrf.mxu0
    %v626 = vadd.f32 0.0, %v625
    %v627 = vpop.f32.mrf.mxu0
    %v628 = vadd.f32 0.0, %v627
    %629 = vmatprep.mubr.f32.mxu0 0.0
    %630 = vmatmul.mubr.f32.gmra.mxu0 %v488
    %v631 = vpop.f32.mrf.mxu0
    %v632 = vadd.f32 0.0, %v631
    %v633 = vpop.f32.mrf.mxu0
    %v634 = vadd.f32 0.0, %v633
    %635 = vmatprep.mubr.f32.mxu0 0.0
    %636 = vmatmul.mubr.f32.gmra.mxu0 %v491
    %v637 = vpop.f32.mrf.mxu0
    %v638 = vadd.f32 0.0, %v637
    %v639 = vpop.f32.mrf.mxu0
    %v640 = vadd.f32 0.0, %v639
    %641 = vmatprep.mubr.f32.mxu0 0.0
    %642 = vmatmul.mubr.f32.gmra.mxu0 %v494
    %v643 = vpop.f32.mrf.mxu0
    %v644 = vadd.f32 0.0, %v643
    %v645 = vpop.f32.mrf.mxu0
    %v646 = vadd.f32 0.0, %v645
    %647 = vmatprep.mubr.f32.mxu0 0.0
    %648 = vmatmul.mubr.f32.gmra.mxu0 %v497
    %v649 = vpop.f32.mrf.mxu0
    %v650 = vadd.f32 0.0, %v649
    %v651 = vpop.f32.mrf.mxu0
    %v652 = vadd.f32 0.0, %v651
    %653 = vmatprep.mubr.f32.mxu0 0.0
    %654 = vmatmul.mubr.f32.gmra.mxu0 %v500
    %v655 = vpop.f32.mrf.mxu0
    %v656 = vadd.f32 0.0, %v655
    %v657 = vpop.f32.mrf.mxu0
    %v658 = vadd.f32 0.0, %v657
    %659 = vmatprep.mubr.f32.mxu0 0.0
    %660 = vmatmul.mubr.f32.gmra.mxu0 %v503
    %v661 = vpop.f32.mrf.mxu0
    %v662 = vadd.f32 0.0, %v661
    %v663 = vpop.f32.mrf.mxu0
    %v664 = vadd.f32 0.0, %v663
    %665 = vdwg.mxu0
    %666 = vmatprep.subr.mxu0 0.0
    %667 = vmatpush1.msra.mxu0 0.0
    %668 = vmatprep.subr.mxu0 0.0
    %669 = vmatpush1.msra.mxu0 0.0
    %670 = vmatprep.subr.mxu0 0.0
    %671 = vmatpush1.msra.mxu0 0.0
    %672 = vmatprep.subr.mxu0 0.0
    %673 = vmatpush1.msra.mxu0 0.0
    %674 = vmatprep.subr.mxu0 0.0
    %675 = vmatpush1.msra.mxu0 0.0
    %676 = vmatprep.subr.mxu0 0.0
    %677 = vmatpush1.msra.mxu0 0.0
    %678 = vmatprep.subr.mxu0 0.0
    %679 = vmatpush1.msra.mxu0 0.0
    %680 = vmatprep.subr.mxu0 0.0
    %681 = vmatpush1.msra.mxu0 0.0
    %682 = vmatprep.subr.mxu0 0.0
    %683 = vmatpush1.msra.mxu0 0.0
    %684 = vmatprep.subr.mxu0 0.0
    %685 = vmatpush1.msra.mxu0 0.0
    %686 = vmatprep.subr.mxu0 0.0
    %687 = vmatpush1.msra.mxu0 0.0
    %688 = vmatprep.subr.mxu0 0.0
    %689 = vmatpush1.msra.mxu0 0.0
    %690 = vmatprep.subr.mxu0 %v455
    %691 = vmatpush1.msra.mxu0 %v454
    %692 = vmatprep.subr.mxu0 %v451
    %693 = vmatpush1.msra.mxu0 %v450
    %694 = vmatprep.subr.mxu0 %v447
    %695 = vmatpush1.msra.mxu0 %v446
    %696 = vmatprep.subr.mxu0 %v443
    %697 = vmatpush1.msra.mxu0 %v442
    %698 = vmatprep.subr.mxu0 0.0
    %699 = vmatpush2.msra.mxu0 0.0
    %700 = vmatprep.subr.mxu0 0.0
    %701 = vmatpush2.msra.mxu0 0.0
    %702 = vmatprep.subr.mxu0 0.0
    %703 = vmatpush2.msra.mxu0 0.0
    %704 = vmatprep.subr.mxu0 0.0
    %705 = vmatpush2.msra.mxu0 0.0
    %706 = vmatprep.subr.mxu0 0.0
    %707 = vmatpush2.msra.mxu0 0.0
    %708 = vmatprep.subr.mxu0 0.0
    %709 = vmatpush2.msra.mxu0 0.0
    %710 = vmatprep.subr.mxu0 0.0
    %711 = vmatpush2.msra.mxu0 0.0
    %712 = vmatprep.subr.mxu0 0.0
    %713 = vmatpush2.msra.mxu0 0.0
    %714 = vmatprep.subr.mxu0 0.0
    %715 = vmatpush2.msra.mxu0 0.0
    %716 = vmatprep.subr.mxu0 0.0
    %717 = vmatpush2.msra.mxu0 0.0
    %718 = vmatprep.subr.mxu0 0.0
    %719 = vmatpush2.msra.mxu0 0.0
    %720 = vmatprep.subr.mxu0 0.0
    %721 = vmatpush2.msra.mxu0 0.0
    %722 = vmatprep.subr.mxu0 0.0
    %723 = vmatpush2.msra.mxu0 0.0
    %724 = vmatprep.subr.mxu0 0.0
    %725 = vmatpush2.msra.mxu0 0.0
    %726 = vmatprep.subr.mxu0 0.0
    %727 = vmatpush2.msra.mxu0 0.0
    %728 = vmatprep.subr.mxu0 0.0
    %729 = vmatpush2.msra.mxu0 0.0
    %730 = vmatprep.mubr.f32.mxu0 0.0
    %731 = vmatmul.mubr.f32.gmra.mxu0 %v458
    %v732 = vpop.f32.mrf.mxu0
    %v733 = vadd.f32 0.0, %v732
    %v734 = vpop.f32.mrf.mxu0
    %v735 = vadd.f32 0.0, %v734
    %736 = vmatprep.mubr.f32.mxu0 0.0
    %737 = vmatmul.mubr.f32.gmra.mxu0 %v461
    %v738 = vpop.f32.mrf.mxu0
    %v739 = vadd.f32 0.0, %v738
    %v740 = vpop.f32.mrf.mxu0
    %v741 = vadd.f32 0.0, %v740
    %742 = vmatprep.mubr.f32.mxu0 0.0
    %743 = vmatmul.mubr.f32.gmra.mxu0 %v464
    %v744 = vpop.f32.mrf.mxu0
    %v745 = vadd.f32 0.0, %v744
    %v746 = vpop.f32.mrf.mxu0
    %v747 = vadd.f32 0.0, %v746
    %748 = vmatprep.mubr.f32.mxu0 0.0
    %749 = vmatmul.mubr.f32.gmra.mxu0 %v467
    %v750 = vpop.f32.mrf.mxu0
    %v751 = vadd.f32 0.0, %v750
    %v752 = vpop.f32.mrf.mxu0
    %v753 = vadd.f32 0.0, %v752
    %754 = vmatprep.mubr.f32.mxu0 0.0
    %755 = vmatmul.mubr.f32.gmra.mxu0 %v470
    %v756 = vpop.f32.mrf.mxu0
    %v757 = vadd.f32 0.0, %v756
    %v758 = vpop.f32.mrf.mxu0
    %v759 = vadd.f32 0.0, %v758
    %760 = vmatprep.mubr.f32.mxu0 0.0
    %761 = vmatmul.mubr.f32.gmra.mxu0 %v473
    %v762 = vpop.f32.mrf.mxu0
    %v763 = vadd.f32 0.0, %v762
    %v764 = vpop.f32.mrf.mxu0
    %v765 = vadd.f32 0.0, %v764
    %766 = vmatprep.mubr.f32.mxu0 0.0
    %767 = vmatmul.mubr.f32.gmra.mxu0 %v476
    %v768 = vpop.f32.mrf.mxu0
    %v769 = vadd.f32 0.0, %v768
    %v770 = vpop.f32.mrf.mxu0
    %v771 = vadd.f32 0.0, %v770
    %772 = vmatprep.mubr.f32.mxu0 0.0
    %773 = vmatmul.mubr.f32.gmra.mxu0 %v479
    %v774 = vpop.f32.mrf.mxu0
    %v775 = vadd.f32 0.0, %v774
    %v776 = vpop.f32.mrf.mxu0
    %v777 = vadd.f32 0.0, %v776
    %778 = vmatprep.mubr.f32.mxu0 0.0
    %779 = vmatmul.mubr.f32.gmra.mxu0 %v482
    %v780 = vpop.f32.mrf.mxu0
    %v781 = vadd.f32 0.0, %v780
    %v782 = vpop.f32.mrf.mxu0
    %v783 = vadd.f32 0.0, %v782
    %784 = vmatprep.mubr.f32.mxu0 0.0
    %785 = vmatmul.mubr.f32.gmra.mxu0 %v485
    %v786 = vpop.f32.mrf.mxu0
    %v787 = vadd.f32 0.0, %v786
    %v788 = vpop.f32.mrf.mxu0
    %v789 = vadd.f32 0.0, %v788
    %790 = vmatprep.mubr.f32.mxu0 0.0
    %791 = vmatmul.mubr.f32.gmra.mxu0 %v488
    %v792 = vpop.f32.mrf.mxu0
    %v793 = vadd.f32 0.0, %v792
    %v794 = vpop.f32.mrf.mxu0
    %v795 = vadd.f32 0.0, %v794
    %796 = vmatprep.mubr.f32.mxu0 0.0
    %797 = vmatmul.mubr.f32.gmra.mxu0 %v491
    %v798 = vpop.f32.mrf.mxu0
    %v799 = vadd.f32 0.0, %v798
    %v800 = vpop.f32.mrf.mxu0
    %v801 = vadd.f32 0.0, %v800
    %802 = vmatprep.mubr.f32.mxu0 0.0
    %803 = vmatmul.mubr.f32.gmra.mxu0 %v494
    %v804 = vpop.f32.mrf.mxu0
    %v805 = vadd.f32 0.0, %v804
    %v806 = vpop.f32.mrf.mxu0
    %v807 = vadd.f32 0.0, %v806
    %808 = vmatprep.mubr.f32.mxu0 0.0
    %809 = vmatmul.mubr.f32.gmra.mxu0 %v497
    %v810 = vpop.f32.mrf.mxu0
    %v811 = vadd.f32 0.0, %v810
    %v812 = vpop.f32.mrf.mxu0
    %v813 = vadd.f32 0.0, %v812
    %814 = vmatprep.mubr.f32.mxu0 0.0
    %815 = vmatmul.mubr.f32.gmra.mxu0 %v500
    %v816 = vpop.f32.mrf.mxu0
    %v817 = vadd.f32 0.0, %v816
    %v818 = vpop.f32.mrf.mxu0
    %v819 = vadd.f32 0.0, %v818
    %820 = vmatprep.mubr.f32.mxu0 0.0
    %821 = vmatmul.mubr.f32.gmra.mxu0 %v503
    %v822 = vpop.f32.mrf.mxu0
    %v823 = vadd.f32 0.0, %v822
    %v824 = vpop.f32.mrf.mxu0
    %v825 = vadd.f32 0.0, %v824
    %826 = vdwg.mxu0
    %v828 = vsel %vm456, %v184, 0
    %v831 = vsel %vm456, %v185, 0
    %v834 = vsel %vm456, %v186, 0
    %v837 = vsel %vm456, %v187, 0
    %v840 = vsel %vm456, %v188, 0
    %v843 = vsel %vm456, %v189, 0
    %v846 = vsel %vm456, %v190, 0
    %v849 = vsel %vm456, %v191, 0
    %v852 = vsel %vm456, %v192, 0
    %v855 = vsel %vm456, %v193, 0
    %v858 = vsel %vm456, %v194, 0
    %v861 = vsel %vm456, %v195, 0
    %v864 = vsel %vm456, %v196, 0
    %v867 = vsel %vm456, %v197, 0
    %v870 = vsel %vm456, %v198, 0
    %v873 = vsel %vm456, %v199, 0
    %875 = vmatprep.subr.mxu0 0.0
    %876 = vmatpush1.msra.mxu0 0.0
    %877 = vmatprep.subr.mxu0 0.0
    %878 = vmatpush1.msra.mxu0 0.0
    %879 = vmatprep.subr.mxu0 0.0
    %880 = vmatpush1.msra.mxu0 0.0
    %881 = vmatprep.subr.mxu0 0.0
    %882 = vmatpush1.msra.mxu0 0.0
    %883 = vmatprep.subr.mxu0 0.0
    %884 = vmatpush1.msra.mxu0 0.0
    %885 = vmatprep.subr.mxu0 0.0
    %886 = vmatpush1.msra.mxu0 0.0
    %887 = vmatprep.subr.mxu0 0.0
    %888 = vmatpush1.msra.mxu0 0.0
    %889 = vmatprep.subr.mxu0 0.0
    %890 = vmatpush1.msra.mxu0 0.0
    %891 = vmatprep.subr.mxu0 0.0
    %892 = vmatpush1.msra.mxu0 0.0
    %893 = vmatprep.subr.mxu0 0.0
    %894 = vmatpush1.msra.mxu0 0.0
    %895 = vmatprep.subr.mxu0 0.0
    %896 = vmatpush1.msra.mxu0 0.0
    %897 = vmatprep.subr.mxu0 0.0
    %898 = vmatpush1.msra.mxu0 0.0
    %899 = vmatprep.subr.mxu0 %v437
    %900 = vmatpush1.msra.mxu0 %v436
    %901 = vmatprep.subr.mxu0 %v433
    %902 = vmatpush1.msra.mxu0 %v432
    %903 = vmatprep.subr.mxu0 %v429
    %904 = vmatpush1.msra.mxu0 %v428
    %905 = vmatprep.subr.mxu0 %v425
    %906 = vmatpush1.msra.mxu0 %v424
    %907 = vmatprep.subr.mxu0 0.0
    %908 = vmatpush2.msra.mxu0 0.0
    %909 = vmatprep.subr.mxu0 0.0
    %910 = vmatpush2.msra.mxu0 0.0
    %911 = vmatprep.subr.mxu0 0.0
    %912 = vmatpush2.msra.mxu0 0.0
    %913 = vmatprep.subr.mxu0 0.0
    %914 = vmatpush2.msra.mxu0 0.0
    %915 = vmatprep.subr.mxu0 0.0
    %916 = vmatpush2.msra.mxu0 0.0
    %917 = vmatprep.subr.mxu0 0.0
    %918 = vmatpush2.msra.mxu0 0.0
    %919 = vmatprep.subr.mxu0 0.0
    %920 = vmatpush2.msra.mxu0 0.0
    %921 = vmatprep.subr.mxu0 0.0
    %922 = vmatpush2.msra.mxu0 0.0
    %923 = vmatprep.subr.mxu0 0.0
    %924 = vmatpush2.msra.mxu0 0.0
    %925 = vmatprep.subr.mxu0 0.0
    %926 = vmatpush2.msra.mxu0 0.0
    %927 = vmatprep.subr.mxu0 0.0
    %928 = vmatpush2.msra.mxu0 0.0
    %929 = vmatprep.subr.mxu0 0.0
    %930 = vmatpush2.msra.mxu0 0.0
    %931 = vmatprep.subr.mxu0 0.0
    %932 = vmatpush2.msra.mxu0 0.0
    %933 = vmatprep.subr.mxu0 0.0
    %934 = vmatpush2.msra.mxu0 0.0
    %935 = vmatprep.subr.mxu0 0.0
    %936 = vmatpush2.msra.mxu0 0.0
    %937 = vmatprep.subr.mxu0 0.0
    %938 = vmatpush2.msra.mxu0 0.0
    %939 = vmatprep.mubr.f32.mxu0 0.0
    %940 = vmatmul.mubr.f32.gmra.mxu0 %v828
    %v941 = vpop.f32.mrf.mxu0
    %v942 = vadd.f32 %v572, %v941
    %v943 = vpop.f32.mrf.mxu0
    %v944 = vadd.f32 %v574, %v943
    %945 = vmatprep.mubr.f32.mxu0 0.0
    %946 = vmatmul.mubr.f32.gmra.mxu0 %v831
    %v947 = vpop.f32.mrf.mxu0
    %v948 = vadd.f32 %v578, %v947
    %v949 = vpop.f32.mrf.mxu0
    %v950 = vadd.f32 %v580, %v949
    %951 = vmatprep.mubr.f32.mxu0 0.0
    %952 = vmatmul.mubr.f32.gmra.mxu0 %v834
    %v953 = vpop.f32.mrf.mxu0
    %v954 = vadd.f32 %v584, %v953
    %v955 = vpop.f32.mrf.mxu0
    %v956 = vadd.f32 %v586, %v955
    %957 = vmatprep.mubr.f32.mxu0 0.0
    %958 = vmatmul.mubr.f32.gmra.mxu0 %v837
    %v959 = vpop.f32.mrf.mxu0
    %v960 = vadd.f32 %v590, %v959
    %v961 = vpop.f32.mrf.mxu0
    %v962 = vadd.f32 %v592, %v961
    %963 = vmatprep.mubr.f32.mxu0 0.0
    %964 = vmatmul.mubr.f32.gmra.mxu0 %v840
    %v965 = vpop.f32.mrf.mxu0
    %v966 = vadd.f32 %v596, %v965
    %v967 = vpop.f32.mrf.mxu0
    %v968 = vadd.f32 %v598, %v967
    %969 = vmatprep.mubr.f32.mxu0 0.0
    %970 = vmatmul.mubr.f32.gmra.mxu0 %v843
    %v971 = vpop.f32.mrf.mxu0
    %v972 = vadd.f32 %v602, %v971
    %v973 = vpop.f32.mrf.mxu0
    %v974 = vadd.f32 %v604, %v973
    %975 = vmatprep.mubr.f32.mxu0 0.0
    %976 = vmatmul.mubr.f32.gmra.mxu0 %v846
    %v977 = vpop.f32.mrf.mxu0
    %v978 = vadd.f32 %v608, %v977
    %v979 = vpop.f32.mrf.mxu0
    %v980 = vadd.f32 %v610, %v979
    %981 = vmatprep.mubr.f32.mxu0 0.0
    %982 = vmatmul.mubr.f32.gmra.mxu0 %v849
    %v983 = vpop.f32.mrf.mxu0
    %v984 = vadd.f32 %v614, %v983
    %v985 = vpop.f32.mrf.mxu0
    %v986 = vadd.f32 %v616, %v985
    %987 = vmatprep.mubr.f32.mxu0 0.0
    %988 = vmatmul.mubr.f32.gmra.mxu0 %v852
    %v989 = vpop.f32.mrf.mxu0
    %v990 = vadd.f32 %v620, %v989
    %v991 = vpop.f32.mrf.mxu0
    %v992 = vadd.f32 %v622, %v991
    %993 = vmatprep.mubr.f32.mxu0 0.0
    %994 = vmatmul.mubr.f32.gmra.mxu0 %v855
    %v995 = vpop.f32.mrf.mxu0
    %v996 = vadd.f32 %v626, %v995
    %v997 = vpop.f32.mrf.mxu0
    %v998 = vadd.f32 %v628, %v997
    %999 = vmatprep.mubr.f32.mxu0 0.0
    %1000 = vmatmul.mubr.f32.gmra.mxu0 %v858
    %v1001 = vpop.f32.mrf.mxu0
    %v1002 = vadd.f32 %v632, %v1001
    %v1003 = vpop.f32.mrf.mxu0
    %v1004 = vadd.f32 %v634, %v1003
    %1005 = vmatprep.mubr.f32.mxu0 0.0
    %1006 = vmatmul.mubr.f32.gmra.mxu0 %v861
    %v1007 = vpop.f32.mrf.mxu0
    %v1008 = vadd.f32 %v638, %v1007
    %v1009 = vpop.f32.mrf.mxu0
    %v1010 = vadd.f32 %v640, %v1009
    %1011 = vmatprep.mubr.f32.mxu0 0.0
    %1012 = vmatmul.mubr.f32.gmra.mxu0 %v864
    %v1013 = vpop.f32.mrf.mxu0
    %v1014 = vadd.f32 %v644, %v1013
    %v1015 = vpop.f32.mrf.mxu0
    %v1016 = vadd.f32 %v646, %v1015
    %1017 = vmatprep.mubr.f32.mxu0 0.0
    %1018 = vmatmul.mubr.f32.gmra.mxu0 %v867
    %v1019 = vpop.f32.mrf.mxu0
    %v1020 = vadd.f32 %v650, %v1019
    %v1021 = vpop.f32.mrf.mxu0
    %v1022 = vadd.f32 %v652, %v1021
    %1023 = vmatprep.mubr.f32.mxu0 0.0
    %1024 = vmatmul.mubr.f32.gmra.mxu0 %v870
    %v1025 = vpop.f32.mrf.mxu0
    %v1026 = vadd.f32 %v656, %v1025
    %v1027 = vpop.f32.mrf.mxu0
    %v1028 = vadd.f32 %v658, %v1027
    %1029 = vmatprep.mubr.f32.mxu0 0.0
    %1030 = vmatmul.mubr.f32.gmra.mxu0 %v873
    %v1031 = vpop.f32.mrf.mxu0
    %v1032 = vadd.f32 %v662, %v1031
    %v1033 = vpop.f32.mrf.mxu0
    %v1034 = vadd.f32 %v664, %v1033
    %1035 = vdwg.mxu0
    %1036 = vmatprep.subr.mxu0 0.0
    %1037 = vmatpush1.msra.mxu0 0.0
    %1038 = vmatprep.subr.mxu0 0.0
    %1039 = vmatpush1.msra.mxu0 0.0
    %1040 = vmatprep.subr.mxu0 0.0
    %1041 = vmatpush1.msra.mxu0 0.0
    %1042 = vmatprep.subr.mxu0 0.0
    %1043 = vmatpush1.msra.mxu0 0.0
    %1044 = vmatprep.subr.mxu0 0.0
    %1045 = vmatpush1.msra.mxu0 0.0
    %1046 = vmatprep.subr.mxu0 0.0
    %1047 = vmatpush1.msra.mxu0 0.0
    %1048 = vmatprep.subr.mxu0 0.0
    %1049 = vmatpush1.msra.mxu0 0.0
    %1050 = vmatprep.subr.mxu0 0.0
    %1051 = vmatpush1.msra.mxu0 0.0
    %1052 = vmatprep.subr.mxu0 0.0
    %1053 = vmatpush1.msra.mxu0 0.0
    %1054 = vmatprep.subr.mxu0 0.0
    %1055 = vmatpush1.msra.mxu0 0.0
    %1056 = vmatprep.subr.mxu0 0.0
    %1057 = vmatpush1.msra.mxu0 0.0
    %1058 = vmatprep.subr.mxu0 0.0
    %1059 = vmatpush1.msra.mxu0 0.0
    %1060 = vmatprep.subr.mxu0 %v439
    %1061 = vmatpush1.msra.mxu0 %v438
    %1062 = vmatprep.subr.mxu0 %v435
    %1063 = vmatpush1.msra.mxu0 %v434
    %1064 = vmatprep.subr.mxu0 %v431
    %1065 = vmatpush1.msra.mxu0 %v430
    %1066 = vmatprep.subr.mxu0 %v427
    %1067 = vmatpush1.msra.mxu0 %v426
    %1068 = vmatprep.subr.mxu0 0.0
    %1069 = vmatpush2.msra.mxu0 0.0
    %1070 = vmatprep.subr.mxu0 0.0
    %1071 = vmatpush2.msra.mxu0 0.0
    %1072 = vmatprep.subr.mxu0 0.0
    %1073 = vmatpush2.msra.mxu0 0.0
    %1074 = vmatprep.subr.mxu0 0.0
    %1075 = vmatpush2.msra.mxu0 0.0
    %1076 = vmatprep.subr.mxu0 0.0
    %1077 = vmatpush2.msra.mxu0 0.0
    %1078 = vmatprep.subr.mxu0 0.0
    %1079 = vmatpush2.msra.mxu0 0.0
    %1080 = vmatprep.subr.mxu0 0.0
    %1081 = vmatpush2.msra.mxu0 0.0
    %1082 = vmatprep.subr.mxu0 0.0
    %1083 = vmatpush2.msra.mxu0 0.0
    %1084 = vmatprep.subr.mxu0 0.0
    %1085 = vmatpush2.msra.mxu0 0.0
    %1086 = vmatprep.subr.mxu0 0.0
    %1087 = vmatpush2.msra.mxu0 0.0
    %1088 = vmatprep.subr.mxu0 0.0
    %1089 = vmatpush2.msra.mxu0 0.0
    %1090 = vmatprep.subr.mxu0 0.0
    %1091 = vmatpush2.msra.mxu0 0.0
    %1092 = vmatprep.subr.mxu0 0.0
    %1093 = vmatpush2.msra.mxu0 0.0
    %1094 = vmatprep.subr.mxu0 0.0
    %1095 = vmatpush2.msra.mxu0 0.0
    %1096 = vmatprep.subr.mxu0 0.0
    %1097 = vmatpush2.msra.mxu0 0.0
    %1098 = vmatprep.subr.mxu0 0.0
    %1099 = vmatpush2.msra.mxu0 0.0
    %1100 = vmatprep.mubr.f32.mxu0 0.0
    %1101 = vmatmul.mubr.f32.gmra.mxu0 %v828
    %v1102 = vpop.f32.mrf.mxu0
    %v1103 = vadd.f32 %v733, %v1102
    %v1104 = vpop.f32.mrf.mxu0
    %v1105 = vadd.f32 %v735, %v1104
    %1106 = vmatprep.mubr.f32.mxu0 0.0
    %1107 = vmatmul.mubr.f32.gmra.mxu0 %v831
    %v1108 = vpop.f32.mrf.mxu0
    %v1109 = vadd.f32 %v739, %v1108
    %v1110 = vpop.f32.mrf.mxu0
    %v1111 = vadd.f32 %v741, %v1110
    %1112 = vmatprep.mubr.f32.mxu0 0.0
    %1113 = vmatmul.mubr.f32.gmra.mxu0 %v834
    %v1114 = vpop.f32.mrf.mxu0
    %v1115 = vadd.f32 %v745, %v1114
    %v1116 = vpop.f32.mrf.mxu0
    %v1117 = vadd.f32 %v747, %v1116
    %1118 = vmatprep.mubr.f32.mxu0 0.0
    %1119 = vmatmul.mubr.f32.gmra.mxu0 %v837
    %v1120 = vpop.f32.mrf.mxu0
    %v1121 = vadd.f32 %v751, %v1120
    %v1122 = vpop.f32.mrf.mxu0
    %v1123 = vadd.f32 %v753, %v1122
    %1124 = vmatprep.mubr.f32.mxu0 0.0
    %1125 = vmatmul.mubr.f32.gmra.mxu0 %v840
    %v1126 = vpop.f32.mrf.mxu0
    %v1127 = vadd.f32 %v757, %v1126
    %v1128 = vpop.f32.mrf.mxu0
    %v1129 = vadd.f32 %v759, %v1128
    %1130 = vmatprep.mubr.f32.mxu0 0.0
    %1131 = vmatmul.mubr.f32.gmra.mxu0 %v843
    %v1132 = vpop.f32.mrf.mxu0
    %v1133 = vadd.f32 %v763, %v1132
    %v1134 = vpop.f32.mrf.mxu0
    %v1135 = vadd.f32 %v765, %v1134
    %1136 = vmatprep.mubr.f32.mxu0 0.0
    %1137 = vmatmul.mubr.f32.gmra.mxu0 %v846
    %v1138 = vpop.f32.mrf.mxu0
    %v1139 = vadd.f32 %v769, %v1138
    %v1140 = vpop.f32.mrf.mxu0
    %v1141 = vadd.f32 %v771, %v1140
    %1142 = vmatprep.mubr.f32.mxu0 0.0
    %1143 = vmatmul.mubr.f32.gmra.mxu0 %v849
    %v1144 = vpop.f32.mrf.mxu0
    %v1145 = vadd.f32 %v775, %v1144
    %v1146 = vpop.f32.mrf.mxu0
    %v1147 = vadd.f32 %v777, %v1146
    %1148 = vmatprep.mubr.f32.mxu0 0.0
    %1149 = vmatmul.mubr.f32.gmra.mxu0 %v852
    %v1150 = vpop.f32.mrf.mxu0
    %v1151 = vadd.f32 %v781, %v1150
    %v1152 = vpop.f32.mrf.mxu0
    %v1153 = vadd.f32 %v783, %v1152
    %1154 = vmatprep.mubr.f32.mxu0 0.0
    %1155 = vmatmul.mubr.f32.gmra.mxu0 %v855
    %v1156 = vpop.f32.mrf.mxu0
    %v1157 = vadd.f32 %v787, %v1156
    %v1158 = vpop.f32.mrf.mxu0
    %v1159 = vadd.f32 %v789, %v1158
    %1160 = vmatprep.mubr.f32.mxu0 0.0
    %1161 = vmatmul.mubr.f32.gmra.mxu0 %v858
    %v1162 = vpop.f32.mrf.mxu0
    %v1163 = vadd.f32 %v793, %v1162
    %v1164 = vpop.f32.mrf.mxu0
    %v1165 = vadd.f32 %v795, %v1164
    %1166 = vmatprep.mubr.f32.mxu0 0.0
    %1167 = vmatmul.mubr.f32.gmra.mxu0 %v861
    %v1168 = vpop.f32.mrf.mxu0
    %v1169 = vadd.f32 %v799, %v1168
    %v1170 = vpop.f32.mrf.mxu0
    %v1171 = vadd.f32 %v801, %v1170
    %1172 = vmatprep.mubr.f32.mxu0 0.0
    %1173 = vmatmul.mubr.f32.gmra.mxu0 %v864
    %v1174 = vpop.f32.mrf.mxu0
    %v1175 = vadd.f32 %v805, %v1174
    %v1176 = vpop.f32.mrf.mxu0
    %v1177 = vadd.f32 %v807, %v1176
    %1178 = vmatprep.mubr.f32.mxu0 0.0
    %1179 = vmatmul.mubr.f32.gmra.mxu0 %v867
    %v1180 = vpop.f32.mrf.mxu0
    %v1181 = vadd.f32 %v811, %v1180
    %v1182 = vpop.f32.mrf.mxu0
    %v1183 = vadd.f32 %v813, %v1182
    %1184 = vmatprep.mubr.f32.mxu0 0.0
    %1185 = vmatmul.mubr.f32.gmra.mxu0 %v870
    %v1186 = vpop.f32.mrf.mxu0
    %v1187 = vadd.f32 %v817, %v1186
    %v1188 = vpop.f32.mrf.mxu0
    %v1189 = vadd.f32 %v819, %v1188
    %1190 = vmatprep.mubr.f32.mxu0 0.0
    %1191 = vmatmul.mubr.f32.gmra.mxu0 %v873
    %v1192 = vpop.f32.mrf.mxu0
    %v1193 = vadd.f32 %v823, %v1192
    %v1194 = vpop.f32.mrf.mxu0
    %v1195 = vadd.f32 %v825, %v1194
    %1196 = vdwg.mxu0
    %v1197 = vld [vmem:[#allocation4] sm:$0xff]
    %v1198 = vld [vmem:[#allocation4 + $0x8] sm:$0xff]
    %v1199 = vld [vmem:[#allocation4 + $0x10] sm:$0xff]
    %v1200 = vld [vmem:[#allocation4 + $0x18] sm:$0xff]
    %v1201 = vld [vmem:[#allocation4 + $0x20] sm:$0xff]
    %v1202 = vld [vmem:[#allocation4 + $0x28] sm:$0xff]
    %v1203 = vld [vmem:[#allocation4 + $0x30] sm:$0xff]
    %v1204 = vld [vmem:[#allocation4 + $0x38] sm:$0xff]
    %v1205 = vld [vmem:[#allocation4 + $0x40] sm:$0xff]
    %v1206 = vld [vmem:[#allocation4 + $0x48] sm:$0xff]
    %v1207 = vld [vmem:[#allocation4 + $0x50] sm:$0xff]
    %v1208 = vld [vmem:[#allocation4 + $0x58] sm:$0xff]
    %v1209 = vld [vmem:[#allocation4 + $0x60] sm:$0xff]
    %v1210 = vld [vmem:[#allocation4 + $0x68] sm:$0xff]
    %v1211 = vld [vmem:[#allocation4 + $0x70] sm:$0xff]
    %v1212 = vld [vmem:[#allocation4 + $0x78] sm:$0xff]
    %v1214 = vsel %vm456, %v408, 0
    %v1217 = vsel %vm456, %v409, 0
    %v1220 = vsel %vm456, %v410, 0
    %v1223 = vsel %vm456, %v411, 0
    %v1226 = vsel %vm456, %v412, 0
    %v1229 = vsel %vm456, %v413, 0
    %v1232 = vsel %vm456, %v414, 0
    %v1235 = vsel %vm456, %v415, 0
    %v1238 = vsel %vm456, %v416, 0
    %v1241 = vsel %vm456, %v417, 0
    %v1244 = vsel %vm456, %v418, 0
    %v1247 = vsel %vm456, %v419, 0
    %v1250 = vsel %vm456, %v420, 0
    %v1253 = vsel %vm456, %v421, 0
    %v1256 = vsel %vm456, %v422, 0
    %v1259 = vsel %vm456, %v423, 0
    %1261 = vmatprep.subr.mxu0 0.0
    %1262 = vmatpush1.msra.mxu0 0.0
    %1263 = vmatprep.subr.mxu0 0.0
    %1264 = vmatpush1.msra.mxu0 0.0
    %1265 = vmatprep.subr.mxu0 0.0
    %1266 = vmatpush1.msra.mxu0 0.0
    %1267 = vmatprep.subr.mxu0 0.0
    %1268 = vmatpush1.msra.mxu0 0.0
    %1269 = vmatprep.subr.mxu0 0.0
    %1270 = vmatpush1.msra.mxu0 0.0
    %1271 = vmatprep.subr.mxu0 0.0
    %1272 = vmatpush1.msra.mxu0 0.0
    %1273 = vmatprep.subr.mxu0 0.0
    %1274 = vmatpush1.msra.mxu0 0.0
    %1275 = vmatprep.subr.mxu0 0.0
    %1276 = vmatpush1.msra.mxu0 0.0
    %1277 = vmatprep.subr.mxu0 0.0
    %1278 = vmatpush1.msra.mxu0 0.0
    %1279 = vmatprep.subr.mxu0 0.0
    %1280 = vmatpush1.msra.mxu0 0.0
    %1281 = vmatprep.subr.mxu0 0.0
    %1282 = vmatpush1.msra.mxu0 0.0
    %1283 = vmatprep.subr.mxu0 0.0
    %1284 = vmatpush1.msra.mxu0 0.0
    %1285 = vmatprep.subr.mxu0 %v1210
    %1286 = vmatpush1.msra.mxu0 %v1209
    %1287 = vmatprep.subr.mxu0 %v1206
    %1288 = vmatpush1.msra.mxu0 %v1205
    %1289 = vmatprep.subr.mxu0 %v1202
    %1290 = vmatpush1.msra.mxu0 %v1201
    %1291 = vmatprep.subr.mxu0 %v1198
    %1292 = vmatpush1.msra.mxu0 %v1197
    %1293 = vmatprep.subr.mxu0 0.0
    %1294 = vmatpush2.msra.mxu0 0.0
    %1295 = vmatprep.subr.mxu0 0.0
    %1296 = vmatpush2.msra.mxu0 0.0
    %1297 = vmatprep.subr.mxu0 0.0
    %1298 = vmatpush2.msra.mxu0 0.0
    %1299 = vmatprep.subr.mxu0 0.0
    %1300 = vmatpush2.msra.mxu0 0.0
    %1301 = vmatprep.subr.mxu0 0.0
    %1302 = vmatpush2.msra.mxu0 0.0
    %1303 = vmatprep.subr.mxu0 0.0
    %1304 = vmatpush2.msra.mxu0 0.0
    %1305 = vmatprep.subr.mxu0 0.0
    %1306 = vmatpush2.msra.mxu0 0.0
    %1307 = vmatprep.subr.mxu0 0.0
    %1308 = vmatpush2.msra.mxu0 0.0
    %1309 = vmatprep.subr.mxu0 0.0
    %1310 = vmatpush2.msra.mxu0 0.0
    %1311 = vmatprep.subr.mxu0 0.0
    %1312 = vmatpush2.msra.mxu0 0.0
    %1313 = vmatprep.subr.mxu0 0.0
    %1314 = vmatpush2.msra.mxu0 0.0
    %1315 = vmatprep.subr.mxu0 0.0
    %1316 = vmatpush2.msra.mxu0 0.0
    %1317 = vmatprep.subr.mxu0 0.0
    %1318 = vmatpush2.msra.mxu0 0.0
    %1319 = vmatprep.subr.mxu0 0.0
    %1320 = vmatpush2.msra.mxu0 0.0
    %1321 = vmatprep.subr.mxu0 0.0
    %1322 = vmatpush2.msra.mxu0 0.0
    %1323 = vmatprep.subr.mxu0 0.0
    %1324 = vmatpush2.msra.mxu0 0.0
    %1325 = vmatprep.mubr.f32.mxu0 0.0
    %1326 = vmatmul.mubr.f32.gmra.mxu0 %v1214
    %v1327 = vpop.f32.mrf.mxu0
    %v1328 = vadd.f32 0.0, %v1327
    %v1329 = vpop.f32.mrf.mxu0
    %v1330 = vadd.f32 0.0, %v1329
    %1331 = vmatprep.mubr.f32.mxu0 0.0
    %1332 = vmatmul.mubr.f32.gmra.mxu0 %v1217
    %v1333 = vpop.f32.mrf.mxu0
    %v1334 = vadd.f32 0.0, %v1333
    %v1335 = vpop.f32.mrf.mxu0
    %v1336 = vadd.f32 0.0, %v1335
    %1337 = vmatprep.mubr.f32.mxu0 0.0
    %1338 = vmatmul.mubr.f32.gmra.mxu0 %v1220
    %v1339 = vpop.f32.mrf.mxu0
    %v1340 = vadd.f32 0.0, %v1339
    %v1341 = vpop.f32.mrf.mxu0
    %v1342 = vadd.f32 0.0, %v1341
    %1343 = vmatprep.mubr.f32.mxu0 0.0
    %1344 = vmatmul.mubr.f32.gmra.mxu0 %v1223
    %v1345 = vpop.f32.mrf.mxu0
    %v1346 = vadd.f32 0.0, %v1345
    %v1347 = vpop.f32.mrf.mxu0
    %v1348 = vadd.f32 0.0, %v1347
    %1349 = vmatprep.mubr.f32.mxu0 0.0
    %1350 = vmatmul.mubr.f32.gmra.mxu0 %v1226
    %v1351 = vpop.f32.mrf.mxu0
    %v1352 = vadd.f32 0.0, %v1351
    %v1353 = vpop.f32.mrf.mxu0
    %v1354 = vadd.f32 0.0, %v1353
    %1355 = vmatprep.mubr.f32.mxu0 0.0
    %1356 = vmatmul.mubr.f32.gmra.mxu0 %v1229
    %v1357 = vpop.f32.mrf.mxu0
    %v1358 = vadd.f32 0.0, %v1357
    %v1359 = vpop.f32.mrf.mxu0
    %v1360 = vadd.f32 0.0, %v1359
    %1361 = vmatprep.mubr.f32.mxu0 0.0
    %1362 = vmatmul.mubr.f32.gmra.mxu0 %v1232
    %v1363 = vpop.f32.mrf.mxu0
    %v1364 = vadd.f32 0.0, %v1363
    %v1365 = vpop.f32.mrf.mxu0
    %v1366 = vadd.f32 0.0, %v1365
    %1367 = vmatprep.mubr.f32.mxu0 0.0
    %1368 = vmatmul.mubr.f32.gmra.mxu0 %v1235
    %v1369 = vpop.f32.mrf.mxu0
    %v1370 = vadd.f32 0.0, %v1369
    %v1371 = vpop.f32.mrf.mxu0
    %v1372 = vadd.f32 0.0, %v1371
    %1373 = vmatprep.mubr.f32.mxu0 0.0
    %1374 = vmatmul.mubr.f32.gmra.mxu0 %v1238
    %v1375 = vpop.f32.mrf.mxu0
    %v1376 = vadd.f32 0.0, %v1375
    %v1377 = vpop.f32.mrf.mxu0
    %v1378 = vadd.f32 0.0, %v1377
    %1379 = vmatprep.mubr.f32.mxu0 0.0
    %1380 = vmatmul.mubr.f32.gmra.mxu0 %v1241
    %v1381 = vpop.f32.mrf.mxu0
    %v1382 = vadd.f32 0.0, %v1381
    %v1383 = vpop.f32.mrf.mxu0
    %v1384 = vadd.f32 0.0, %v1383
    %1385 = vmatprep.mubr.f32.mxu0 0.0
    %1386 = vmatmul.mubr.f32.gmra.mxu0 %v1244
    %v1387 = vpop.f32.mrf.mxu0
    %v1388 = vadd.f32 0.0, %v1387
    %v1389 = vpop.f32.mrf.mxu0
    %v1390 = vadd.f32 0.0, %v1389
    %1391 = vmatprep.mubr.f32.mxu0 0.0
    %1392 = vmatmul.mubr.f32.gmra.mxu0 %v1247
    %v1393 = vpop.f32.mrf.mxu0
    %v1394 = vadd.f32 0.0, %v1393
    %v1395 = vpop.f32.mrf.mxu0
    %v1396 = vadd.f32 0.0, %v1395
    %1397 = vmatprep.mubr.f32.mxu0 0.0
    %1398 = vmatmul.mubr.f32.gmra.mxu0 %v1250
    %v1399 = vpop.f32.mrf.mxu0
    %v1400 = vadd.f32 0.0, %v1399
    %v1401 = vpop.f32.mrf.mxu0
    %v1402 = vadd.f32 0.0, %v1401
    %1403 = vmatprep.mubr.f32.mxu0 0.0
    %1404 = vmatmul.mubr.f32.gmra.mxu0 %v1253
    %v1405 = vpop.f32.mrf.mxu0
    %v1406 = vadd.f32 0.0, %v1405
    %v1407 = vpop.f32.mrf.mxu0
    %v1408 = vadd.f32 0.0, %v1407
    %1409 = vmatprep.mubr.f32.mxu0 0.0
    %1410 = vmatmul.mubr.f32.gmra.mxu0 %v1256
    %v1411 = vpop.f32.mrf.mxu0
    %v1412 = vadd.f32 0.0, %v1411
    %v1413 = vpop.f32.mrf.mxu0
    %v1414 = vadd.f32 0.0, %v1413
    %1415 = vmatprep.mubr.f32.mxu0 0.0
    %1416 = vmatmul.mubr.f32.gmra.mxu0 %v1259
    %v1417 = vpop.f32.mrf.mxu0
    %v1418 = vadd.f32 0.0, %v1417
    %v1419 = vpop.f32.mrf.mxu0
    %v1420 = vadd.f32 0.0, %v1419
    %1421 = vdwg.mxu0
    %1422 = vmatprep.subr.mxu0 0.0
    %1423 = vmatpush1.msra.mxu0 0.0
    %1424 = vmatprep.subr.mxu0 0.0
    %1425 = vmatpush1.msra.mxu0 0.0
    %1426 = vmatprep.subr.mxu0 0.0
    %1427 = vmatpush1.msra.mxu0 0.0
    %1428 = vmatprep.subr.mxu0 0.0
    %1429 = vmatpush1.msra.mxu0 0.0
    %1430 = vmatprep.subr.mxu0 0.0
    %1431 = vmatpush1.msra.mxu0 0.0
    %1432 = vmatprep.subr.mxu0 0.0
    %1433 = vmatpush1.msra.mxu0 0.0
    %1434 = vmatprep.subr.mxu0 0.0
    %1435 = vmatpush1.msra.mxu0 0.0
    %1436 = vmatprep.subr.mxu0 0.0
    %1437 = vmatpush1.msra.mxu0 0.0
    %1438 = vmatprep.subr.mxu0 0.0
    %1439 = vmatpush1.msra.mxu0 0.0
    %1440 = vmatprep.subr.mxu0 0.0
    %1441 = vmatpush1.msra.mxu0 0.0
    %1442 = vmatprep.subr.mxu0 0.0
    %1443 = vmatpush1.msra.mxu0 0.0
    %1444 = vmatprep.subr.mxu0 0.0
    %1445 = vmatpush1.msra.mxu0 0.0
    %1446 = vmatprep.subr.mxu0 %v1212
    %1447 = vmatpush1.msra.mxu0 %v1211
    %1448 = vmatprep.subr.mxu0 %v1208
    %1449 = vmatpush1.msra.mxu0 %v1207
    %1450 = vmatprep.subr.mxu0 %v1204
    %1451 = vmatpush1.msra.mxu0 %v1203
    %1452 = vmatprep.subr.mxu0 %v1200
    %1453 = vmatpush1.msra.mxu0 %v1199
    %1454 = vmatprep.subr.mxu0 0.0
    %1455 = vmatpush2.msra.mxu0 0.0
    %1456 = vmatprep.subr.mxu0 0.0
    %1457 = vmatpush2.msra.mxu0 0.0
    %1458 = vmatprep.subr.mxu0 0.0
    %1459 = vmatpush2.msra.mxu0 0.0
    %1460 = vmatprep.subr.mxu0 0.0
    %1461 = vmatpush2.msra.mxu0 0.0
    %1462 = vmatprep.subr.mxu0 0.0
    %1463 = vmatpush2.msra.mxu0 0.0
    %1464 = vmatprep.subr.mxu0 0.0
    %1465 = vmatpush2.msra.mxu0 0.0
    %1466 = vmatprep.subr.mxu0 0.0
    %1467 = vmatpush2.msra.mxu0 0.0
    %1468 = vmatprep.subr.mxu0 0.0
    %1469 = vmatpush2.msra.mxu0 0.0
    %1470 = vmatprep.subr.mxu0 0.0
    %1471 = vmatpush2.msra.mxu0 0.0
    %1472 = vmatprep.subr.mxu0 0.0
    %1473 = vmatpush2.msra.mxu0 0.0
    %1474 = vmatprep.subr.mxu0 0.0
    %1475 = vmatpush2.msra.mxu0 0.0
    %1476 = vmatprep.subr.mxu0 0.0
    %1477 = vmatpush2.msra.mxu0 0.0
    %1478 = vmatprep.subr.mxu0 0.0
    %1479 = vmatpush2.msra.mxu0 0.0
    %1480 = vmatprep.subr.mxu0 0.0
    %1481 = vmatpush2.msra.mxu0 0.0
    %1482 = vmatprep.subr.mxu0 0.0
    %1483 = vmatpush2.msra.mxu0 0.0
    %1484 = vmatprep.subr.mxu0 0.0
    %1485 = vmatpush2.msra.mxu0 0.0
    %1486 = vmatprep.mubr.f32.mxu0 0.0
    %1487 = vmatmul.mubr.f32.gmra.mxu0 %v1214
    %v1488 = vpop.f32.mrf.mxu0
    %v1489 = vadd.f32 0.0, %v1488
    %v1490 = vpop.f32.mrf.mxu0
    %v1491 = vadd.f32 0.0, %v1490
    %1492 = vmatprep.mubr.f32.mxu0 0.0
    %1493 = vmatmul.mubr.f32.gmra.mxu0 %v1217
    %v1494 = vpop.f32.mrf.mxu0
    %v1495 = vadd.f32 0.0, %v1494
    %v1496 = vpop.f32.mrf.mxu0
    %v1497 = vadd.f32 0.0, %v1496
    %1498 = vmatprep.mubr.f32.mxu0 0.0
    %1499 = vmatmul.mubr.f32.gmra.mxu0 %v1220
    %v1500 = vpop.f32.mrf.mxu0
    %v1501 = vadd.f32 0.0, %v1500
    %v1502 = vpop.f32.mrf.mxu0
    %v1503 = vadd.f32 0.0, %v1502
    %1504 = vmatprep.mubr.f32.mxu0 0.0
    %1505 = vmatmul.mubr.f32.gmra.mxu0 %v1223
    %v1506 = vpop.f32.mrf.mxu0
    %v1507 = vadd.f32 0.0, %v1506
    %v1508 = vpop.f32.mrf.mxu0
    %v1509 = vadd.f32 0.0, %v1508
    %1510 = vmatprep.mubr.f32.mxu0 0.0
    %1511 = vmatmul.mubr.f32.gmra.mxu0 %v1226
    %v1512 = vpop.f32.mrf.mxu0
    %v1513 = vadd.f32 0.0, %v1512
    %v1514 = vpop.f32.mrf.mxu0
    %v1515 = vadd.f32 0.0, %v1514
    %1516 = vmatprep.mubr.f32.mxu0 0.0
    %1517 = vmatmul.mubr.f32.gmra.mxu0 %v1229
    %v1518 = vpop.f32.mrf.mxu0
    %v1519 = vadd.f32 0.0, %v1518
    %v1520 = vpop.f32.mrf.mxu0
    %v1521 = vadd.f32 0.0, %v1520
    %1522 = vmatprep.mubr.f32.mxu0 0.0
    %1523 = vmatmul.mubr.f32.gmra.mxu0 %v1232
    %v1524 = vpop.f32.mrf.mxu0
    %v1525 = vadd.f32 0.0, %v1524
    %v1526 = vpop.f32.mrf.mxu0
    %v1527 = vadd.f32 0.0, %v1526
    %1528 = vmatprep.mubr.f32.mxu0 0.0
    %1529 = vmatmul.mubr.f32.gmra.mxu0 %v1235
    %v1530 = vpop.f32.mrf.mxu0
    %v1531 = vadd.f32 0.0, %v1530
    %v1532 = vpop.f32.mrf.mxu0
    %v1533 = vadd.f32 0.0, %v1532
    %1534 = vmatprep.mubr.f32.mxu0 0.0
    %1535 = vmatmul.mubr.f32.gmra.mxu0 %v1238
    %v1536 = vpop.f32.mrf.mxu0
    %v1537 = vadd.f32 0.0, %v1536
    %v1538 = vpop.f32.mrf.mxu0
    %v1539 = vadd.f32 0.0, %v1538
    %1540 = vmatprep.mubr.f32.mxu0 0.0
    %1541 = vmatmul.mubr.f32.gmra.mxu0 %v1241
    %v1542 = vpop.f32.mrf.mxu0
    %v1543 = vadd.f32 0.0, %v1542
    %v1544 = vpop.f32.mrf.mxu0
    %v1545 = vadd.f32 0.0, %v1544
    %1546 = vmatprep.mubr.f32.mxu0 0.0
    %1547 = vmatmul.mubr.f32.gmra.mxu0 %v1244
    %v1548 = vpop.f32.mrf.mxu0
    %v1549 = vadd.f32 0.0, %v1548
    %v1550 = vpop.f32.mrf.mxu0
    %v1551 = vadd.f32 0.0, %v1550
    %1552 = vmatprep.mubr.f32.mxu0 0.0
    %1553 = vmatmul.mubr.f32.gmra.mxu0 %v1247
    %v1554 = vpop.f32.mrf.mxu0
    %v1555 = vadd.f32 0.0, %v1554
    %v1556 = vpop.f32.mrf.mxu0
    %v1557 = vadd.f32 0.0, %v1556
    %1558 = vmatprep.mubr.f32.mxu0 0.0
    %1559 = vmatmul.mubr.f32.gmra.mxu0 %v1250
    %v1560 = vpop.f32.mrf.mxu0
    %v1561 = vadd.f32 0.0, %v1560
    %v1562 = vpop.f32.mrf.mxu0
    %v1563 = vadd.f32 0.0, %v1562
    %1564 = vmatprep.mubr.f32.mxu0 0.0
    %1565 = vmatmul.mubr.f32.gmra.mxu0 %v1253
    %v1566 = vpop.f32.mrf.mxu0
    %v1567 = vadd.f32 0.0, %v1566
    %v1568 = vpop.f32.mrf.mxu0
    %v1569 = vadd.f32 0.0, %v1568
    %1570 = vmatprep.mubr.f32.mxu0 0.0
    %1571 = vmatmul.mubr.f32.gmra.mxu0 %v1256
    %v1572 = vpop.f32.mrf.mxu0
    %v1573 = vadd.f32 0.0, %v1572
    %v1574 = vpop.f32.mrf.mxu0
    %v1575 = vadd.f32 0.0, %v1574
    %1576 = vmatprep.mubr.f32.mxu0 0.0
    %1577 = vmatmul.mubr.f32.gmra.mxu0 %v1259
    %v1578 = vpop.f32.mrf.mxu0
    %v1579 = vadd.f32 0.0, %v1578
    %v1580 = vpop.f32.mrf.mxu0
    %v1581 = vadd.f32 0.0, %v1580
    %1582 = vdwg.mxu0
    %v1583 = vadd.f32 %v942, %v1328
    %v1584 = vadd.f32 %v944, %v1330
    %v1585 = vadd.f32 %v1103, %v1489
    %v1586 = vadd.f32 %v1105, %v1491
    %v1587 = vadd.f32 %v948, %v1334
    %v1588 = vadd.f32 %v950, %v1336
    %v1589 = vadd.f32 %v1109, %v1495
    %v1590 = vadd.f32 %v1111, %v1497
    %v1591 = vadd.f32 %v954, %v1340
    %v1592 = vadd.f32 %v956, %v1342
    %v1593 = vadd.f32 %v1115, %v1501
    %v1594 = vadd.f32 %v1117, %v1503
    %v1595 = vadd.f32 %v960, %v1346
    %v1596 = vadd.f32 %v962, %v1348
    %v1597 = vadd.f32 %v1121, %v1507
    %v1598 = vadd.f32 %v1123, %v1509
    %v1599 = vadd.f32 %v966, %v1352
    %v1600 = vadd.f32 %v968, %v1354
    %v1601 = vadd.f32 %v1127, %v1513
    %v1602 = vadd.f32 %v1129, %v1515
    %v1603 = vadd.f32 %v972, %v1358
    %v1604 = vadd.f32 %v974, %v1360
    %v1605 = vadd.f32 %v1133, %v1519
    %v1606 = vadd.f32 %v1135, %v1521
    %v1607 = vadd.f32 %v978, %v1364
    %v1608 = vadd.f32 %v980, %v1366
    %v1609 = vadd.f32 %v1139, %v1525
    %v1610 = vadd.f32 %v1141, %v1527
    %v1611 = vadd.f32 %v984, %v1370
    %v1612 = vadd.f32 %v986, %v1372
    %v1613 = vadd.f32 %v1145, %v1531
    %v1614 = vadd.f32 %v1147, %v1533
    %v1615 = vadd.f32 %v990, %v1376
    %v1616 = vadd.f32 %v992, %v1378
    %v1617 = vadd.f32 %v1151, %v1537
    %v1618 = vadd.f32 %v1153, %v1539
    %v1619 = vadd.f32 %v996, %v1382
    %v1620 = vadd.f32 %v998, %v1384
    %v1621 = vadd.f32 %v1157, %v1543
    %v1622 = vadd.f32 %v1159, %v1545
    %v1623 = vadd.f32 %v1002, %v1388
    %v1624 = vadd.f32 %v1004, %v1390
    %v1625 = vadd.f32 %v1163, %v1549
    %v1626 = vadd.f32 %v1165, %v1551
    %v1627 = vadd.f32 %v1008, %v1394
    %v1628 = vadd.f32 %v1010, %v1396
    %v1629 = vadd.f32 %v1169, %v1555
    %v1630 = vadd.f32 %v1171, %v1557
    %v1631 = vadd.f32 %v1014, %v1400
    %v1632 = vadd.f32 %v1016, %v1402
    %v1633 = vadd.f32 %v1175, %v1561
    %v1634 = vadd.f32 %v1177, %v1563
    %v1635 = vadd.f32 %v1020, %v1406
    %v1636 = vadd.f32 %v1022, %v1408
    %v1637 = vadd.f32 %v1181, %v1567
    %v1638 = vadd.f32 %v1183, %v1569
    %v1639 = vadd.f32 %v1026, %v1412
    %v1640 = vadd.f32 %v1028, %v1414
    %v1641 = vadd.f32 %v1187, %v1573
    %v1642 = vadd.f32 %v1189, %v1575
    %v1643 = vadd.f32 %v1032, %v1418
    %v1644 = vadd.f32 %v1034, %v1420
    %v1645 = vadd.f32 %v1193, %v1579
    %v1646 = vadd.f32 %v1195, %v1581
    %v1647 = vld [vmem:[%s7] sm:$0xf]
    %v1649 = vlaneseq
    %v1650 = vshrl.u32 %v1649, 7
    %v1651 = vsub.s32 0, %v1650
    %v1652 = vrot.slane %v1647, %v1651
    %v1653 = vlaneseq
    %v1654 = vshrl.u32 %v1653, 7
    %v1655 = vsub.s32 1, %v1654
    %v1656 = vrot.slane %v1647, %v1655
    %v1657 = vlaneseq
    %v1658 = vshrl.u32 %v1657, 7
    %v1659 = vsub.s32 2, %v1658
    %v1660 = vrot.slane %v1647, %v1659
    %v1661 = vlaneseq
    %v1662 = vshrl.u32 %v1661, 7
    %v1663 = vsub.s32 3, %v1662
    %v1664 = vrot.slane %v1647, %v1663
    %v1669 = vadd.f32 %v1583, %v1652
    %v1670 = vadd.f32 %v1584, %v1656
    %v1671 = vadd.f32 %v1585, %v1660
    %v1672 = vadd.f32 %v1586, %v1664
    %v1673 = vadd.f32 %v1587, %v1652
    %v1674 = vadd.f32 %v1588, %v1656
    %v1675 = vadd.f32 %v1589, %v1660
    %v1676 = vadd.f32 %v1590, %v1664
    %v1677 = vadd.f32 %v1591, %v1652
    %v1678 = vadd.f32 %v1592, %v1656
    %v1679 = vadd.f32 %v1593, %v1660
    %v1680 = vadd.f32 %v1594, %v1664
    %v1681 = vadd.f32 %v1595, %v1652
    %v1682 = vadd.f32 %v1596, %v1656
    %v1683 = vadd.f32 %v1597, %v1660
    %v1684 = vadd.f32 %v1598, %v1664
    %v1685 = vadd.f32 %v1599, %v1652
    %v1686 = vadd.f32 %v1600, %v1656
    %v1687 = vadd.f32 %v1601, %v1660
    %v1688 = vadd.f32 %v1602, %v1664
    %v1689 = vadd.f32 %v1603, %v1652
    %v1690 = vadd.f32 %v1604, %v1656
    %v1691 = vadd.f32 %v1605, %v1660
    %v1692 = vadd.f32 %v1606, %v1664
    %v1693 = vadd.f32 %v1607, %v1652
    %v1694 = vadd.f32 %v1608, %v1656
    %v1695 = vadd.f32 %v1609, %v1660
    %v1696 = vadd.f32 %v1610, %v1664
    %v1697 = vadd.f32 %v1611, %v1652
    %v1698 = vadd.f32 %v1612, %v1656
    %v1699 = vadd.f32 %v1613, %v1660
    %v1700 = vadd.f32 %v1614, %v1664
    %v1701 = vadd.f32 %v1615, %v1652
    %v1702 = vadd.f32 %v1616, %v1656
    %v1703 = vadd.f32 %v1617, %v1660
    %v1704 = vadd.f32 %v1618, %v1664
    %v1705 = vadd.f32 %v1619, %v1652
    %v1706 = vadd.f32 %v1620, %v1656
    %v1707 = vadd.f32 %v1621, %v1660
    %v1708 = vadd.f32 %v1622, %v1664
    %v1709 = vadd.f32 %v1623, %v1652
    %v1710 = vadd.f32 %v1624, %v1656
    %v1711 = vadd.f32 %v1625, %v1660
    %v1712 = vadd.f32 %v1626, %v1664
    %v1713 = vadd.f32 %v1627, %v1652
    %v1714 = vadd.f32 %v1628, %v1656
    %v1715 = vadd.f32 %v1629, %v1660
    %v1716 = vadd.f32 %v1630, %v1664
    %v1717 = vadd.f32 %v1631, %v1652
    %v1718 = vadd.f32 %v1632, %v1656
    %v1719 = vadd.f32 %v1633, %v1660
    %v1720 = vadd.f32 %v1634, %v1664
    %v1721 = vadd.f32 %v1635, %v1652
    %v1722 = vadd.f32 %v1636, %v1656
    %v1723 = vadd.f32 %v1637, %v1660
    %v1724 = vadd.f32 %v1638, %v1664
    %v1725 = vadd.f32 %v1639, %v1652
    %v1726 = vadd.f32 %v1640, %v1656
    %v1727 = vadd.f32 %v1641, %v1660
    %v1728 = vadd.f32 %v1642, %v1664
    %v1729 = vadd.f32 %v1643, %v1652
    %v1730 = vadd.f32 %v1644, %v1656
    %v1731 = vadd.f32 %v1645, %v1660
    %v1732 = vadd.f32 %v1646, %v1664
    %1733 = vst [vmem:[#allocation2] sm:$0xff] %v1669
    %1734 = vst [vmem:[#allocation2 + $0x8] sm:$0xff] %v1670
    %1735 = vst [vmem:[#allocation2 + $0x10] sm:$0xff] %v1671
    %1736 = vst [vmem:[#allocation2 + $0x18] sm:$0xff] %v1672
    %1737 = vst [vmem:[#allocation2 + $0x20] sm:$0xff] %v1673
    %1738 = vst [vmem:[#allocation2 + $0x28] sm:$0xff] %v1674
    %1739 = vst [vmem:[#allocation2 + $0x30] sm:$0xff] %v1675
    %1740 = vst [vmem:[#allocation2 + $0x38] sm:$0xff] %v1676
    %1741 = vst [vmem:[#allocation2 + $0x40] sm:$0xff] %v1677
    %1742 = vst [vmem:[#allocation2 + $0x48] sm:$0xff] %v1678
    %1743 = vst [vmem:[#allocation2 + $0x50] sm:$0xff] %v1679
    %1744 = vst [vmem:[#allocation2 + $0x58] sm:$0xff] %v1680
    %1745 = vst [vmem:[#allocation2 + $0x60] sm:$0xff] %v1681
    %1746 = vst [vmem:[#allocation2 + $0x68] sm:$0xff] %v1682
    %1747 = vst [vmem:[#allocation2 + $0x70] sm:$0xff] %v1683
    %1748 = vst [vmem:[#allocation2 + $0x78] sm:$0xff] %v1684
    %1749 = vst [vmem:[#allocation2 + $0x80] sm:$0xff] %v1685
    %1750 = vst [vmem:[#allocation2 + $0x88] sm:$0xff] %v1686
    %1751 = vst [vmem:[#allocation2 + $0x90] sm:$0xff] %v1687
    %1752 = vst [vmem:[#allocation2 + $0x98] sm:$0xff] %v1688
    %1753 = vst [vmem:[#allocation2 + $0xa0] sm:$0xff] %v1689
    %1754 = vst [vmem:[#allocation2 + $0xa8] sm:$0xff] %v1690
    %1755 = vst [vmem:[#allocation2 + $0xb0] sm:$0xff] %v1691
    %1756 = vst [vmem:[#allocation2 + $0xb8] sm:$0xff] %v1692
    %1757 = vst [vmem:[#allocation2 + $0xc0] sm:$0xff] %v1693
    %1758 = vst [vmem:[#allocation2 + $0xc8] sm:$0xff] %v1694
    %1759 = vst [vmem:[#allocation2 + $0xd0] sm:$0xff] %v1695
    %1760 = vst [vmem:[#allocation2 + $0xd8] sm:$0xff] %v1696
    %1761 = vst [vmem:[#allocation2 + $0xe0] sm:$0xff] %v1697
    %1762 = vst [vmem:[#allocation2 + $0xe8] sm:$0xff] %v1698
    %1763 = vst [vmem:[#allocation2 + $0xf0] sm:$0xff] %v1699
    %1764 = vst [vmem:[#allocation2 + $0xf8] sm:$0xff] %v1700
    %1765 = vst [vmem:[#allocation2 + $0x100] sm:$0xff] %v1701
    %1766 = vst [vmem:[#allocation2 + $0x108] sm:$0xff] %v1702
    %1767 = vst [vmem:[#allocation2 + $0x110] sm:$0xff] %v1703
    %1768 = vst [vmem:[#allocation2 + $0x118] sm:$0xff] %v1704
    %1769 = vst [vmem:[#allocation2 + $0x120] sm:$0xff] %v1705
    %1770 = vst [vmem:[#allocation2 + $0x128] sm:$0xff] %v1706
    %1771 = vst [vmem:[#allocation2 + $0x130] sm:$0xff] %v1707
    %1772 = vst [vmem:[#allocation2 + $0x138] sm:$0xff] %v1708
    %1773 = vst [vmem:[#allocation2 + $0x140] sm:$0xff] %v1709
    %1774 = vst [vmem:[#allocation2 + $0x148] sm:$0xff] %v1710
    %1775 = vst [vmem:[#allocation2 + $0x150] sm:$0xff] %v1711
    %1776 = vst [vmem:[#allocation2 + $0x158] sm:$0xff] %v1712
    %1777 = vst [vmem:[#allocation2 + $0x160] sm:$0xff] %v1713
    %1778 = vst [vmem:[#allocation2 + $0x168] sm:$0xff] %v1714
    %1779 = vst [vmem:[#allocation2 + $0x170] sm:$0xff] %v1715
    %1780 = vst [vmem:[#allocation2 + $0x178] sm:$0xff] %v1716
    %1781 = vst [vmem:[#allocation2 + $0x180] sm:$0xff] %v1717
    %1782 = vst [vmem:[#allocation2 + $0x188] sm:$0xff] %v1718
    %1783 = vst [vmem:[#allocation2 + $0x190] sm:$0xff] %v1719
    %1784 = vst [vmem:[#allocation2 + $0x198] sm:$0xff] %v1720
    %1785 = vst [vmem:[#allocation2 + $0x1a0] sm:$0xff] %v1721
    %1786 = vst [vmem:[#allocation2 + $0x1a8] sm:$0xff] %v1722
    %1787 = vst [vmem:[#allocation2 + $0x1b0] sm:$0xff] %v1723
    %1788 = vst [vmem:[#allocation2 + $0x1b8] sm:$0xff] %v1724
    %1789 = vst [vmem:[#allocation2 + $0x1c0] sm:$0xff] %v1725
    %1790 = vst [vmem:[#allocation2 + $0x1c8] sm:$0xff] %v1726
    %1791 = vst [vmem:[#allocation2 + $0x1d0] sm:$0xff] %v1727
    %1792 = vst [vmem:[#allocation2 + $0x1d8] sm:$0xff] %v1728
    %1793 = vst [vmem:[#allocation2 + $0x1e0] sm:$0xff] %v1729
    %1794 = vst [vmem:[#allocation2 + $0x1e8] sm:$0xff] %v1730
    %1795 = vst [vmem:[#allocation2 + $0x1f0] sm:$0xff] %v1731
    %1796 = vst [vmem:[#allocation2 + $0x1f8] sm:$0xff] %v1732
    %v1797 = vld [vmem:[%s6] sm:$0xff]
    %v1798 = vld [vmem:[%s6 + $0x8] sm:$0xff]
    %v1799 = vld [vmem:[%s6 + $0x10] sm:$0xff]
    %v1800 = vld [vmem:[%s6 + $0x18] sm:$0xff]
    %v1801 = vld [vmem:[%s6 + $0x20] sm:$0xff]
    %v1802 = vld [vmem:[%s6 + $0x28] sm:$0xff]
    %v1803 = vld [vmem:[%s6 + $0x30] sm:$0xff]
    %v1804 = vld [vmem:[%s6 + $0x38] sm:$0xff]
    %v1805 = vld [vmem:[%s6 + $0x40] sm:$0xff]
    %v1806 = vld [vmem:[%s6 + $0x48] sm:$0xff]
    %v1807 = vld [vmem:[%s6 + $0x50] sm:$0xff]
    %v1808 = vld [vmem:[%s6 + $0x58] sm:$0xff]
    %v1809 = vld [vmem:[%s6 + $0x60] sm:$0xff]
    %v1810 = vld [vmem:[%s6 + $0x68] sm:$0xff]
    %v1811 = vld [vmem:[%s6 + $0x70] sm:$0xff]
    %v1812 = vld [vmem:[%s6 + $0x78] sm:$0xff]
    %v1813 = vld [vmem:[%s6 + $0x80] sm:$0xff]
    %v1814 = vld [vmem:[%s6 + $0x88] sm:$0xff]
    %v1815 = vld [vmem:[%s6 + $0x90] sm:$0xff]
    %v1816 = vld [vmem:[%s6 + $0x98] sm:$0xff]
    %v1817 = vld [vmem:[%s6 + $0xa0] sm:$0xff]
    %v1818 = vld [vmem:[%s6 + $0xa8] sm:$0xff]
    %v1819 = vld [vmem:[%s6 + $0xb0] sm:$0xff]
    %v1820 = vld [vmem:[%s6 + $0xb8] sm:$0xff]
    %v1821 = vld [vmem:[%s6 + $0xc0] sm:$0xff]
    %v1822 = vld [vmem:[%s6 + $0xc8] sm:$0xff]
    %v1823 = vld [vmem:[%s6 + $0xd0] sm:$0xff]
    %v1824 = vld [vmem:[%s6 + $0xd8] sm:$0xff]
    %v1825 = vld [vmem:[%s6 + $0xe0] sm:$0xff]
    %v1826 = vld [vmem:[%s6 + $0xe8] sm:$0xff]
    %v1827 = vld [vmem:[%s6 + $0xf0] sm:$0xff]
    %v1828 = vld [vmem:[%s6 + $0xf8] sm:$0xff]
    %v1829 = vld [vmem:[%s6 + $0x100] sm:$0xff]
    %v1830 = vld [vmem:[%s6 + $0x108] sm:$0xff]
    %v1831 = vld [vmem:[%s6 + $0x110] sm:$0xff]
    %v1832 = vld [vmem:[%s6 + $0x118] sm:$0xff]
    %v1833 = vld [vmem:[%s6 + $0x120] sm:$0xff]
    %v1834 = vld [vmem:[%s6 + $0x128] sm:$0xff]
    %v1835 = vld [vmem:[%s6 + $0x130] sm:$0xff]
    %v1836 = vld [vmem:[%s6 + $0x138] sm:$0xff]
    %v1837 = vld [vmem:[%s6 + $0x140] sm:$0xff]
    %v1838 = vld [vmem:[%s6 + $0x148] sm:$0xff]
    %v1839 = vld [vmem:[%s6 + $0x150] sm:$0xff]
    %v1840 = vld [vmem:[%s6 + $0x158] sm:$0xff]
    %v1841 = vld [vmem:[%s6 + $0x160] sm:$0xff]
    %v1842 = vld [vmem:[%s6 + $0x168] sm:$0xff]
    %v1843 = vld [vmem:[%s6 + $0x170] sm:$0xff]
    %v1844 = vld [vmem:[%s6 + $0x178] sm:$0xff]
    %v1845 = vld [vmem:[%s6 + $0x180] sm:$0xff]
    %v1846 = vld [vmem:[%s6 + $0x188] sm:$0xff]
    %v1847 = vld [vmem:[%s6 + $0x190] sm:$0xff]
    %v1848 = vld [vmem:[%s6 + $0x198] sm:$0xff]
    %v1849 = vld [vmem:[%s6 + $0x1a0] sm:$0xff]
    %v1850 = vld [vmem:[%s6 + $0x1a8] sm:$0xff]
    %v1851 = vld [vmem:[%s6 + $0x1b0] sm:$0xff]
    %v1852 = vld [vmem:[%s6 + $0x1b8] sm:$0xff]
    %v1853 = vld [vmem:[%s6 + $0x1c0] sm:$0xff]
    %v1854 = vld [vmem:[%s6 + $0x1c8] sm:$0xff]
    %v1855 = vld [vmem:[%s6 + $0x1d0] sm:$0xff]
    %v1856 = vld [vmem:[%s6 + $0x1d8] sm:$0xff]
    %v1857 = vld [vmem:[%s6 + $0x1e0] sm:$0xff]
    %v1858 = vld [vmem:[%s6 + $0x1e8] sm:$0xff]
    %v1859 = vld [vmem:[%s6 + $0x1f0] sm:$0xff]
    %v1860 = vld [vmem:[%s6 + $0x1f8] sm:$0xff]
    %v1861 = vld [vmem:[%s8] sm:$0xff]
    %s1862 = smul.u32 0, 4
    %s1863 = smul.addr %s1862, 8
    %s1864 = scalar_lea.vmem [#allocation2], %s1863
    %v1865 = vld [vmem:[%s1864] sm:$0xff]
    %v1866 = vld [vmem:[%s1864 + $0x8] sm:$0xff]
    %v1867 = vld [vmem:[%s1864 + $0x10] sm:$0xff]
    %v1868 = vld [vmem:[%s1864 + $0x18] sm:$0xff]
    %1869 = vmatprep.subr.mxu0 %v1858
    %1870 = vmatpush1.msra.mxu0 %v1857
    %1871 = vmatprep.subr.mxu0 %v1854
    %1872 = vmatpush1.msra.mxu0 %v1853
    %1873 = vmatprep.subr.mxu0 %v1850
    %1874 = vmatpush1.msra.mxu0 %v1849
    %1875 = vmatprep.subr.mxu0 %v1846
    %1876 = vmatpush1.msra.mxu0 %v1845
    %1877 = vmatprep.subr.mxu0 %v1842
    %1878 = vmatpush1.msra.mxu0 %v1841
    %1879 = vmatprep.subr.mxu0 %v1838
    %1880 = vmatpush1.msra.mxu0 %v1837
    %1881 = vmatprep.subr.mxu0 %v1834
    %1882 = vmatpush1.msra.mxu0 %v1833
    %1883 = vmatprep.subr.mxu0 %v1830
    %1884 = vmatpush1.msra.mxu0 %v1829
    %1885 = vmatprep.subr.mxu0 %v1826
    %1886 = vmatpush1.msra.mxu0 %v1825
    %1887 = vmatprep.subr.mxu0 %v1822
    %1888 = vmatpush1.msra.mxu0 %v1821
    %1889 = vmatprep.subr.mxu0 %v1818
    %1890 = vmatpush1.msra.mxu0 %v1817
    %1891 = vmatprep.subr.mxu0 %v1814
    %1892 = vmatpush1.msra.mxu0 %v1813
    %1893 = vmatprep.subr.mxu0 %v1810
    %1894 = vmatpush1.msra.mxu0 %v1809
    %1895 = vmatprep.subr.mxu0 %v1806
    %1896 = vmatpush1.msra.mxu0 %v1805
    %1897 = vmatprep.subr.mxu0 %v1802
    %1898 = vmatpush1.msra.mxu0 %v1801
    %1899 = vmatprep.subr.mxu0 %v1798
    %1900 = vmatpush1.msra.mxu0 %v1797
    %1901 = vmatprep.subr.mxu0 0.0
    %1902 = vmatpush2.msra.mxu0 0.0
    %1903 = vmatprep.subr.mxu0 0.0
    %1904 = vmatpush2.msra.mxu0 0.0
    %1905 = vmatprep.subr.mxu0 0.0
    %1906 = vmatpush2.msra.mxu0 0.0
    %1907 = vmatprep.subr.mxu0 0.0
    %1908 = vmatpush2.msra.mxu0 0.0
    %1909 = vmatprep.subr.mxu0 0.0
    %1910 = vmatpush2.msra.mxu0 0.0
    %1911 = vmatprep.subr.mxu0 0.0
    %1912 = vmatpush2.msra.mxu0 0.0
    %1913 = vmatprep.subr.mxu0 0.0
    %1914 = vmatpush2.msra.mxu0 0.0
    %1915 = vmatprep.subr.mxu0 0.0
    %1916 = vmatpush2.msra.mxu0 0.0
    %1917 = vmatprep.subr.mxu0 0.0
    %1918 = vmatpush2.msra.mxu0 0.0
    %1919 = vmatprep.subr.mxu0 0.0
    %1920 = vmatpush2.msra.mxu0 0.0
    %1921 = vmatprep.subr.mxu0 0.0
    %1922 = vmatpush2.msra.mxu0 0.0
    %1923 = vmatprep.subr.mxu0 0.0
    %1924 = vmatpush2.msra.mxu0 0.0
    %1925 = vmatprep.subr.mxu0 0.0
    %1926 = vmatpush2.msra.mxu0 0.0
    %1927 = vmatprep.subr.mxu0 0.0
    %1928 = vmatpush2.msra.mxu0 0.0
    %1929 = vmatprep.subr.mxu0 0.0
    %1930 = vmatpush2.msra.mxu0 0.0
    %1931 = vmatprep.subr.mxu0 0.0
    %1932 = vmatpush2.msra.mxu0 0.0
    %1933 = vmatprep.mubr.f32.mxu0 0.0
    %1934 = vmatmul.mubr.f32.gmra.mxu0 0.0
    %v1935 = vpop.f32.mrf.mxu0
    %v1936 = vadd.f32 %v1865, %v1935
    %v1937 = vpop.f32.mrf.mxu0
    %v1938 = vadd.f32 %v1866, %v1937
    %1939 = vdwg.mxu0
    %1940 = vmatprep.subr.mxu0 %v1860
    %1941 = vmatpush1.msra.mxu0 %v1859
    %1942 = vmatprep.subr.mxu0 %v1856
    %1943 = vmatpush1.msra.mxu0 %v1855
    %1944 = vmatprep.subr.mxu0 %v1852
    %1945 = vmatpush1.msra.mxu0 %v1851
    %1946 = vmatprep.subr.mxu0 %v1848
    %1947 = vmatpush1.msra.mxu0 %v1847
    %1948 = vmatprep.subr.mxu0 %v1844
    %1949 = vmatpush1.msra.mxu0 %v1843
    %1950 = vmatprep.subr.mxu0 %v1840
    %1951 = vmatpush1.msra.mxu0 %v1839
    %1952 = vmatprep.subr.mxu0 %v1836
    %1953 = vmatpush1.msra.mxu0 %v1835
    %1954 = vmatprep.subr.mxu0 %v1832
    %1955 = vmatpush1.msra.mxu0 %v1831
    %1956 = vmatprep.subr.mxu0 %v1828
    %1957 = vmatpush1.msra.mxu0 %v1827
    %1958 = vmatprep.subr.mxu0 %v1824
    %1959 = vmatpush1.msra.mxu0 %v1823
    %1960 = vmatprep.subr.mxu0 %v1820
    %1961 = vmatpush1.msra.mxu0 %v1819
    %1962 = vmatprep.subr.mxu0 %v1816
    %1963 = vmatpush1.msra.mxu0 %v1815
    %1964 = vmatprep.subr.mxu0 %v1812
    %1965 = vmatpush1.msra.mxu0 %v1811
    %1966 = vmatprep.subr.mxu0 %v1808
    %1967 = vmatpush1.msra.mxu0 %v1807
    %1968 = vmatprep.subr.mxu0 %v1804
    %1969 = vmatpush1.msra.mxu0 %v1803
    %1970 = vmatprep.subr.mxu0 %v1800
    %1971 = vmatpush1.msra.mxu0 %v1799
    %1972 = vmatprep.subr.mxu0 0.0
    %1973 = vmatpush2.msra.mxu0 0.0
    %1974 = vmatprep.subr.mxu0 0.0
    %1975 = vmatpush2.msra.mxu0 0.0
    %1976 = vmatprep.subr.mxu0 0.0
    %1977 = vmatpush2.msra.mxu0 0.0
    %1978 = vmatprep.subr.mxu0 0.0
    %1979 = vmatpush2.msra.mxu0 0.0
    %1980 = vmatprep.subr.mxu0 0.0
    %1981 = vmatpush2.msra.mxu0 0.0
    %1982 = vmatprep.subr.mxu0 0.0
    %1983 = vmatpush2.msra.mxu0 0.0
    %1984 = vmatprep.subr.mxu0 0.0
    %1985 = vmatpush2.msra.mxu0 0.0
    %1986 = vmatprep.subr.mxu0 0.0
    %1987 = vmatpush2.msra.mxu0 0.0
    %1988 = vmatprep.subr.mxu0 0.0
    %1989 = vmatpush2.msra.mxu0 0.0
    %1990 = vmatprep.subr.mxu0 0.0
    %1991 = vmatpush2.msra.mxu0 0.0
    %1992 = vmatprep.subr.mxu0 0.0
    %1993 = vmatpush2.msra.mxu0 0.0
    %1994 = vmatprep.subr.mxu0 0.0
    %1995 = vmatpush2.msra.mxu0 0.0
    %1996 = vmatprep.subr.mxu0 0.0
    %1997 = vmatpush2.msra.mxu0 0.0
    %1998 = vmatprep.subr.mxu0 0.0
    %1999 = vmatpush2.msra.mxu0 0.0
    %2000 = vmatprep.subr.mxu0 0.0
    %2001 = vmatpush2.msra.mxu0 0.0
    %2002 = vmatprep.subr.mxu0 0.0
    %2003 = vmatpush2.msra.mxu0 0.0
    %2004 = vmatprep.mubr.f32.mxu0 0.0
    %2005 = vmatmul.mubr.f32.gmra.mxu0 0.0
    %v2006 = vpop.f32.mrf.mxu0
    %v2007 = vadd.f32 %v1867, %v2006
    %v2008 = vpop.f32.mrf.mxu0
    %v2009 = vadd.f32 %v1868, %v2008
    %2010 = vdwg.mxu0
    %v2011 = vxor.u32 %v1936, 2147483648
    %v2012 = vmul.f32 %v2011, 1.442695
    %v2013 = vpow.pop %v2012
    %v2014 = vadd.f32 %v2013, 1.0
    %v2015 = vrcp.pop %v2014
    %v2016 = vmul.f32 1.0, %v2015
    %v2017 = vxor.u32 %v1938, 2147483648
    %v2018 = vmul.f32 %v2017, 1.442695
    %v2019 = vpow.pop %v2018
    %v2020 = vadd.f32 %v2019, 1.0
    %v2021 = vrcp.pop %v2020
    %v2022 = vmul.f32 1.0, %v2021
    %v2023 = vtanh.pop %v2007
    %v2024 = vxor.u32 %v2009, 2147483648
    %v2025 = vmul.f32 %v2024, 1.442695
    %v2026 = vpow.pop %v2025
    %v2027 = vadd.f32 %v2026, 1.0
    %v2028 = vrcp.pop %v2027
    %v2029 = vmul.f32 1.0, %v2028
    %v2030 = vmul.f32 %v2022, 0.0
    %v2031 = vmul.f32 %v2016, %v2023
    %v2032 = vadd.f32 %v2030, %v2031
    %v2033 = vtanh.pop %v2032
    %v2034 = vmul.f32 %v2029, %v2033
    %vm2035 = vcmp.eq.s32.totalorder %v1861, 0
    %v2036 = vsel %vm2035, %v2034, 0.0
    %s2037 = smul.u32 1, 4
    %s2038 = smul.addr %s2037, 8
    %s2039 = scalar_lea.vmem [#allocation2], %s2038
    %v2040 = vld [vmem:[%s2039] sm:$0xff]
    %v2041 = vld [vmem:[%s2039 + $0x8] sm:$0xff]
    %v2042 = vld [vmem:[%s2039 + $0x10] sm:$0xff]
    %v2043 = vld [vmem:[%s2039 + $0x18] sm:$0xff]
    %2044 = vmatprep.subr.mxu0 %v1858
    %2045 = vmatpush1.msra.mxu0 %v1857
    %2046 = vmatprep.subr.mxu0 %v1854
    %2047 = vmatpush1.msra.mxu0 %v1853
    %2048 = vmatprep.subr.mxu0 %v1850
    %2049 = vmatpush1.msra.mxu0 %v1849
    %2050 = vmatprep.subr.mxu0 %v1846
    %2051 = vmatpush1.msra.mxu0 %v1845
    %2052 = vmatprep.subr.mxu0 %v1842
    %2053 = vmatpush1.msra.mxu0 %v1841
    %2054 = vmatprep.subr.mxu0 %v1838
    %2055 = vmatpush1.msra.mxu0 %v1837
    %2056 = vmatprep.subr.mxu0 %v1834
    %2057 = vmatpush1.msra.mxu0 %v1833
    %2058 = vmatprep.subr.mxu0 %v1830
    %2059 = vmatpush1.msra.mxu0 %v1829
    %2060 = vmatprep.subr.mxu0 %v1826
    %2061 = vmatpush1.msra.mxu0 %v1825
    %2062 = vmatprep.subr.mxu0 %v1822
    %2063 = vmatpush1.msra.mxu0 %v1821
    %2064 = vmatprep.subr.mxu0 %v1818
    %2065 = vmatpush1.msra.mxu0 %v1817
    %2066 = vmatprep.subr.mxu0 %v1814
    %2067 = vmatpush1.msra.mxu0 %v1813
    %2068 = vmatprep.subr.mxu0 %v1810
    %2069 = vmatpush1.msra.mxu0 %v1809
    %2070 = vmatprep.subr.mxu0 %v1806
    %2071 = vmatpush1.msra.mxu0 %v1805
    %2072 = vmatprep.subr.mxu0 %v1802
    %2073 = vmatpush1.msra.mxu0 %v1801
    %2074 = vmatprep.subr.mxu0 %v1798
    %2075 = vmatpush1.msra.mxu0 %v1797
    %2076 = vmatprep.subr.mxu0 0.0
    %2077 = vmatpush2.msra.mxu0 0.0
    %2078 = vmatprep.subr.mxu0 0.0
    %2079 = vmatpush2.msra.mxu0 0.0
    %2080 = vmatprep.subr.mxu0 0.0
    %2081 = vmatpush2.msra.mxu0 0.0
    %2082 = vmatprep.subr.mxu0 0.0
    %2083 = vmatpush2.msra.mxu0 0.0
    %2084 = vmatprep.subr.mxu0 0.0
    %2085 = vmatpush2.msra.mxu0 0.0
    %2086 = vmatprep.subr.mxu0 0.0
    %2087 = vmatpush2.msra.mxu0 0.0
    %2088 = vmatprep.subr.mxu0 0.0
    %2089 = vmatpush2.msra.mxu0 0.0
    %2090 = vmatprep.subr.mxu0 0.0
    %2091 = vmatpush2.msra.mxu0 0.0
    %2092 = vmatprep.subr.mxu0 0.0
    %2093 = vmatpush2.msra.mxu0 0.0
    %2094 = vmatprep.subr.mxu0 0.0
    %2095 = vmatpush2.msra.mxu0 0.0
    %2096 = vmatprep.subr.mxu0 0.0
    %2097 = vmatpush2.msra.mxu0 0.0
    %2098 = vmatprep.subr.mxu0 0.0
    %2099 = vmatpush2.msra.mxu0 0.0
    %2100 = vmatprep.subr.mxu0 0.0
    %2101 = vmatpush2.msra.mxu0 0.0
    %2102 = vmatprep.subr.mxu0 0.0
    %2103 = vmatpush2.msra.mxu0 0.0
    %2104 = vmatprep.subr.mxu0 0.0
    %2105 = vmatpush2.msra.mxu0 0.0
    %2106 = vmatprep.subr.mxu0 0.0
    %2107 = vmatpush2.msra.mxu0 0.0
    %2108 = vmatprep.mubr.f32.mxu0 0.0
    %2109 = vmatmul.mubr.f32.gmra.mxu0 %v2034
    %v2110 = vpop.f32.mrf.mxu0
    %v2111 = vadd.f32 %v2040, %v2110
    %v2112 = vpop.f32.mrf.mxu0
    %v2113 = vadd.f32 %v2041, %v2112
    %2114 = vdwg.mxu0
    %2115 = vmatprep.subr.mxu0 %v1860
    %2116 = vmatpush1.msra.mxu0 %v1859
    %2117 = vmatprep.subr.mxu0 %v1856
    %2118 = vmatpush1.msra.mxu0 %v1855
    %2119 = vmatprep.subr.mxu0 %v1852
    %2120 = vmatpush1.msra.mxu0 %v1851
    %2121 = vmatprep.subr.mxu0 %v1848
    %2122 = vmatpush1.msra.mxu0 %v1847
    %2123 = vmatprep.subr.mxu0 %v1844
    %2124 = vmatpush1.msra.mxu0 %v1843
    %2125 = vmatprep.subr.mxu0 %v1840
    %2126 = vmatpush1.msra.mxu0 %v1839
    %2127 = vmatprep.subr.mxu0 %v1836
    %2128 = vmatpush1.msra.mxu0 %v1835
    %2129 = vmatprep.subr.mxu0 %v1832
    %2130 = vmatpush1.msra.mxu0 %v1831
    %2131 = vmatprep.subr.mxu0 %v1828
    %2132 = vmatpush1.msra.mxu0 %v1827
    %2133 = vmatprep.subr.mxu0 %v1824
    %2134 = vmatpush1.msra.mxu0 %v1823
    %2135 = vmatprep.subr.mxu0 %v1820
    %2136 = vmatpush1.msra.mxu0 %v1819
    %2137 = vmatprep.subr.mxu0 %v1816
    %2138 = vmatpush1.msra.mxu0 %v1815
    %2139 = vmatprep.subr.mxu0 %v1812
    %2140 = vmatpush1.msra.mxu0 %v1811
    %2141 = vmatprep.subr.mxu0 %v1808
    %2142 = vmatpush1.msra.mxu0 %v1807
    %2143 = vmatprep.subr.mxu0 %v1804
    %2144 = vmatpush1.msra.mxu0 %v1803
    %2145 = vmatprep.subr.mxu0 %v1800
    %2146 = vmatpush1.msra.mxu0 %v1799
    %2147 = vmatprep.subr.mxu0 0.0
    %2148 = vmatpush2.msra.mxu0 0.0
    %2149 = vmatprep.subr.mxu0 0.0
    %2150 = vmatpush2.msra.mxu0 0.0
    %2151 = vmatprep.subr.mxu0 0.0
    %2152 = vmatpush2.msra.mxu0 0.0
    %2153 = vmatprep.subr.mxu0 0.0
    %2154 = vmatpush2.msra.mxu0 0.0
    %2155 = vmatprep.subr.mxu0 0.0
    %2156 = vmatpush2.msra.mxu0 0.0
    %2157 = vmatprep.subr.mxu0 0.0
    %2158 = vmatpush2.msra.mxu0 0.0
    %2159 = vmatprep.subr.mxu0 0.0
    %2160 = vmatpush2.msra.mxu0 0.0
    %2161 = vmatprep.subr.mxu0 0.0
    %2162 = vmatpush2.msra.mxu0 0.0
    %2163 = vmatprep.subr.mxu0 0.0
    %2164 = vmatpush2.msra.mxu0 0.0
    %2165 = vmatprep.subr.mxu0 0.0
    %2166 = vmatpush2.msra.mxu0 0.0
    %2167 = vmatprep.subr.mxu0 0.0
    %2168 = vmatpush2.msra.mxu0 0.0
    %2169 = vmatprep.subr.mxu0 0.0
    %2170 = vmatpush2.msra.mxu0 0.0
    %2171 = vmatprep.subr.mxu0 0.0
    %2172 = vmatpush2.msra.mxu0 0.0
    %2173 = vmatprep.subr.mxu0 0.0
    %2174 = vmatpush2.msra.mxu0 0.0
    %2175 = vmatprep.subr.mxu0 0.0
    %2176 = vmatpush2.msra.mxu0 0.0
    %2177 = vmatprep.subr.mxu0 0.0
    %2178 = vmatpush2.msra.mxu0 0.0
    %2179 = vmatprep.mubr.f32.mxu0 0.0
    %2180 = vmatmul.mubr.f32.gmra.mxu0 %v2034
    %v2181 = vpop.f32.mrf.mxu0
    %v2182 = vadd.f32 %v2042, %v2181
    %v2183 = vpop.f32.mrf.mxu0
    %v2184 = vadd.f32 %v2043, %v2183
    %2185 = vdwg.mxu0
    %v2186 = vxor.u32 %v2111, 2147483648
    %v2187 = vmul.f32 %v2186, 1.442695
    %v2188 = vpow.pop %v2187
    %v2189 = vadd.f32 %v2188, 1.0
    %v2190 = vrcp.pop %v2189
    %v2191 = vmul.f32 1.0, %v2190
    %v2192 = vxor.u32 %v2113, 2147483648
    %v2193 = vmul.f32 %v2192, 1.442695
    %v2194 = vpow.pop %v2193
    %v2195 = vadd.f32 %v2194, 1.0
    %v2196 = vrcp.pop %v2195
    %v2197 = vmul.f32 1.0, %v2196
    %v2198 = vtanh.pop %v2182
    %v2199 = vxor.u32 %v2184, 2147483648
    %v2200 = vmul.f32 %v2199, 1.442695
    %v2201 = vpow.pop %v2200
    %v2202 = vadd.f32 %v2201, 1.0
    %v2203 = vrcp.pop %v2202
    %v2204 = vmul.f32 1.0, %v2203
    %v2205 = vmul.f32 %v2197, %v2032
    %v2206 = vmul.f32 %v2191, %v2198
    %v2207 = vadd.f32 %v2205, %v2206
    %v2208 = vtanh.pop %v2207
    %v2209 = vmul.f32 %v2204, %v2208
    %vm2210 = vcmp.eq.s32.totalorder %v1861, 1
    %v2211 = vsel %vm2210, %v2209, %v2036
    %s2212 = smul.u32 2, 4
    %s2213 = smul.addr %s2212, 8
    %s2214 = scalar_lea.vmem [#allocation2], %s2213
    %v2215 = vld [vmem:[%s2214] sm:$0xff]
    %v2216 = vld [vmem:[%s2214 + $0x8] sm:$0xff]
    %v2217 = vld [vmem:[%s2214 + $0x10] sm:$0xff]
    %v2218 = vld [vmem:[%s2214 + $0x18] sm:$0xff]
    %2219 = vmatprep.subr.mxu0 %v1858
    %2220 = vmatpush1.msra.mxu0 %v1857
    %2221 = vmatprep.subr.mxu0 %v1854
    %2222 = vmatpush1.msra.mxu0 %v1853
    %2223 = vmatprep.subr.mxu0 %v1850
    %2224 = vmatpush1.msra.mxu0 %v1849
    %2225 = vmatprep.subr.mxu0 %v1846
    %2226 = vmatpush1.msra.mxu0 %v1845
    %2227 = vmatprep.subr.mxu0 %v1842
    %2228 = vmatpush1.msra.mxu0 %v1841
    %2229 = vmatprep.subr.mxu0 %v1838
    %2230 = vmatpush1.msra.mxu0 %v1837
    %2231 = vmatprep.subr.mxu0 %v1834
    %2232 = vmatpush1.msra.mxu0 %v1833
    %2233 = vmatprep.subr.mxu0 %v1830
    %2234 = vmatpush1.msra.mxu0 %v1829
    %2235 = vmatprep.subr.mxu0 %v1826
    %2236 = vmatpush1.msra.mxu0 %v1825
    %2237 = vmatprep.subr.mxu0 %v1822
    %2238 = vmatpush1.msra.mxu0 %v1821
    %2239 = vmatprep.subr.mxu0 %v1818
    %2240 = vmatpush1.msra.mxu0 %v1817
    %2241 = vmatprep.subr.mxu0 %v1814
    %2242 = vmatpush1.msra.mxu0 %v1813
    %2243 = vmatprep.subr.mxu0 %v1810
    %2244 = vmatpush1.msra.mxu0 %v1809
    %2245 = vmatprep.subr.mxu0 %v1806
    %2246 = vmatpush1.msra.mxu0 %v1805
    %2247 = vmatprep.subr.mxu0 %v1802
    %2248 = vmatpush1.msra.mxu0 %v1801
    %2249 = vmatprep.subr.mxu0 %v1798
    %2250 = vmatpush1.msra.mxu0 %v1797
    %2251 = vmatprep.subr.mxu0 0.0
    %2252 = vmatpush2.msra.mxu0 0.0
    %2253 = vmatprep.subr.mxu0 0.0
    %2254 = vmatpush2.msra.mxu0 0.0
    %2255 = vmatprep.subr.mxu0 0.0
    %2256 = vmatpush2.msra.mxu0 0.0
    %2257 = vmatprep.subr.mxu0 0.0
    %2258 = vmatpush2.msra.mxu0 0.0
    %2259 = vmatprep.subr.mxu0 0.0
    %2260 = vmatpush2.msra.mxu0 0.0
    %2261 = vmatprep.subr.mxu0 0.0
    %2262 = vmatpush2.msra.mxu0 0.0
    %2263 = vmatprep.subr.mxu0 0.0
    %2264 = vmatpush2.msra.mxu0 0.0
    %2265 = vmatprep.subr.mxu0 0.0
    %2266 = vmatpush2.msra.mxu0 0.0
    %2267 = vmatprep.subr.mxu0 0.0
    %2268 = vmatpush2.msra.mxu0 0.0
    %2269 = vmatprep.subr.mxu0 0.0
    %2270 = vmatpush2.msra.mxu0 0.0
    %2271 = vmatprep.subr.mxu0 0.0
    %2272 = vmatpush2.msra.mxu0 0.0
    %2273 = vmatprep.subr.mxu0 0.0
    %2274 = vmatpush2.msra.mxu0 0.0
    %2275 = vmatprep.subr.mxu0 0.0
    %2276 = vmatpush2.msra.mxu0 0.0
    %2277 = vmatprep.subr.mxu0 0.0
    %2278 = vmatpush2.msra.mxu0 0.0
    %2279 = vmatprep.subr.mxu0 0.0
    %2280 = vmatpush2.msra.mxu0 0.0
    %2281 = vmatprep.subr.mxu0 0.0
    %2282 = vmatpush2.msra.mxu0 0.0
    %2283 = vmatprep.mubr.f32.mxu0 0.0
    %2284 = vmatmul.mubr.f32.gmra.mxu0 %v2209
    %v2285 = vpop.f32.mrf.mxu0
    %v2286 = vadd.f32 %v2215, %v2285
    %v2287 = vpop.f32.mrf.mxu0
    %v2288 = vadd.f32 %v2216, %v2287
    %2289 = vdwg.mxu0
    %2290 = vmatprep.subr.mxu0 %v1860
    %2291 = vmatpush1.msra.mxu0 %v1859
    %2292 = vmatprep.subr.mxu0 %v1856
    %2293 = vmatpush1.msra.mxu0 %v1855
    %2294 = vmatprep.subr.mxu0 %v1852
    %2295 = vmatpush1.msra.mxu0 %v1851
    %2296 = vmatprep.subr.mxu0 %v1848
    %2297 = vmatpush1.msra.mxu0 %v1847
    %2298 = vmatprep.subr.mxu0 %v1844
    %2299 = vmatpush1.msra.mxu0 %v1843
    %2300 = vmatprep.subr.mxu0 %v1840
    %2301 = vmatpush1.msra.mxu0 %v1839
    %2302 = vmatprep.subr.mxu0 %v1836
    %2303 = vmatpush1.msra.mxu0 %v1835
    %2304 = vmatprep.subr.mxu0 %v1832
    %2305 = vmatpush1.msra.mxu0 %v1831
    %2306 = vmatprep.subr.mxu0 %v1828
    %2307 = vmatpush1.msra.mxu0 %v1827
    %2308 = vmatprep.subr.mxu0 %v1824
    %2309 = vmatpush1.msra.mxu0 %v1823
    %2310 = vmatprep.subr.mxu0 %v1820
    %2311 = vmatpush1.msra.mxu0 %v1819
    %2312 = vmatprep.subr.mxu0 %v1816
    %2313 = vmatpush1.msra.mxu0 %v1815
    %2314 = vmatprep.subr.mxu0 %v1812
    %2315 = vmatpush1.msra.mxu0 %v1811
    %2316 = vmatprep.subr.mxu0 %v1808
    %2317 = vmatpush1.msra.mxu0 %v1807
    %2318 = vmatprep.subr.mxu0 %v1804
    %2319 = vmatpush1.msra.mxu0 %v1803
    %2320 = vmatprep.subr.mxu0 %v1800
    %2321 = vmatpush1.msra.mxu0 %v1799
    %2322 = vmatprep.subr.mxu0 0.0
    %2323 = vmatpush2.msra.mxu0 0.0
    %2324 = vmatprep.subr.mxu0 0.0
    %2325 = vmatpush2.msra.mxu0 0.0
    %2326 = vmatprep.subr.mxu0 0.0
    %2327 = vmatpush2.msra.mxu0 0.0
    %2328 = vmatprep.subr.mxu0 0.0
    %2329 = vmatpush2.msra.mxu0 0.0
    %2330 = vmatprep.subr.mxu0 0.0
    %2331 = vmatpush2.msra.mxu0 0.0
    %2332 = vmatprep.subr.mxu0 0.0
    %2333 = vmatpush2.msra.mxu0 0.0
    %2334 = vmatprep.subr.mxu0 0.0
    %2335 = vmatpush2.msra.mxu0 0.0
    %2336 = vmatprep.subr.mxu0 0.0
    %2337 = vmatpush2.msra.mxu0 0.0
    %2338 = vmatprep.subr.mxu0 0.0
    %2339 = vmatpush2.msra.mxu0 0.0
    %2340 = vmatprep.subr.mxu0 0.0
    %2341 = vmatpush2.msra.mxu0 0.0
    %2342 = vmatprep.subr.mxu0 0.0
    %2343 = vmatpush2.msra.mxu0 0.0
    %2344 = vmatprep.subr.mxu0 0.0
    %2345 = vmatpush2.msra.mxu0 0.0
    %2346 = vmatprep.subr.mxu0 0.0
    %2347 = vmatpush2.msra.mxu0 0.0
    %2348 = vmatprep.subr.mxu0 0.0
    %2349 = vmatpush2.msra.mxu0 0.0
    %2350 = vmatprep.subr.mxu0 0.0
    %2351 = vmatpush2.msra.mxu0 0.0
    %2352 = vmatprep.subr.mxu0 0.0
    %2353 = vmatpush2.msra.mxu0 0.0
    %2354 = vmatprep.mubr.f32.mxu0 0.0
    %2355 = vmatmul.mubr.f32.gmra.mxu0 %v2209
    %v2356 = vpop.f32.mrf.mxu0
    %v2357 = vadd.f32 %v2217, %v2356
    %v2358 = vpop.f32.mrf.mxu0
    %v2359 = vadd.f32 %v2218, %v2358
    %2360 = vdwg.mxu0
    %v2361 = vxor.u32 %v2286, 2147483648
    %v2362 = vmul.f32 %v2361, 1.442695
    %v2363 = vpow.pop %v2362
    %v2364 = vadd.f32 %v2363, 1.0
    %v2365 = vrcp.pop %v2364
    %v2366 = vmul.f32 1.0, %v2365
    %v2367 = vxor.u32 %v2288, 2147483648
    %v2368 = vmul.f32 %v2367, 1.442695
    %v2369 = vpow.pop %v2368
    %v2370 = vadd.f32 %v2369, 1.0
    %v2371 = vrcp.pop %v2370
    %v2372 = vmul.f32 1.0, %v2371
    %v2373 = vtanh.pop %v2357
    %v2374 = vxor.u32 %v2359, 2147483648
    %v2375 = vmul.f32 %v2374, 1.442695
    %v2376 = vpow.pop %v2375
    %v2377 = vadd.f32 %v2376, 1.0
    %v2378 = vrcp.pop %v2377
    %v2379 = vmul.f32 1.0, %v2378
    %v2380 = vmul.f32 %v2372, %v2207
    %v2381 = vmul.f32 %v2366, %v2373
    %v2382 = vadd.f32 %v2380, %v2381
    %v2383 = vtanh.pop %v2382
    %v2384 = vmul.f32 %v2379, %v2383
    %vm2385 = vcmp.eq.s32.totalorder %v1861, 2
    %v2386 = vsel %vm2385, %v2384, %v2211
    %s2387 = smul.u32 3, 4
    %s2388 = smul.addr %s2387, 8
    %s2389 = scalar_lea.vmem [#allocation2], %s2388
    %v2390 = vld [vmem:[%s2389] sm:$0xff]
    %v2391 = vld [vmem:[%s2389 + $0x8] sm:$0xff]
    %v2392 = vld [vmem:[%s2389 + $0x10] sm:$0xff]
    %v2393 = vld [vmem:[%s2389 + $0x18] sm:$0xff]
    %2394 = vmatprep.subr.mxu0 %v1858
    %2395 = vmatpush1.msra.mxu0 %v1857
    %2396 = vmatprep.subr.mxu0 %v1854
    %2397 = vmatpush1.msra.mxu0 %v1853
    %2398 = vmatprep.subr.mxu0 %v1850
    %2399 = vmatpush1.msra.mxu0 %v1849
    %2400 = vmatprep.subr.mxu0 %v1846
    %2401 = vmatpush1.msra.mxu0 %v1845
    %2402 = vmatprep.subr.mxu0 %v1842
    %2403 = vmatpush1.msra.mxu0 %v1841
    %2404 = vmatprep.subr.mxu0 %v1838
    %2405 = vmatpush1.msra.mxu0 %v1837
    %2406 = vmatprep.subr.mxu0 %v1834
    %2407 = vmatpush1.msra.mxu0 %v1833
    %2408 = vmatprep.subr.mxu0 %v1830
    %2409 = vmatpush1.msra.mxu0 %v1829
    %2410 = vmatprep.subr.mxu0 %v1826
    %2411 = vmatpush1.msra.mxu0 %v1825
    %2412 = vmatprep.subr.mxu0 %v1822
    %2413 = vmatpush1.msra.mxu0 %v1821
    %2414 = vmatprep.subr.mxu0 %v1818
    %2415 = vmatpush1.msra.mxu0 %v1817
    %2416 = vmatprep.subr.mxu0 %v1814
    %2417 = vmatpush1.msra.mxu0 %v1813
    %2418 = vmatprep.subr.mxu0 %v1810
    %2419 = vmatpush1.msra.mxu0 %v1809
    %2420 = vmatprep.subr.mxu0 %v1806
    %2421 = vmatpush1.msra.mxu0 %v1805
    %2422 = vmatprep.subr.mxu0 %v1802
    %2423 = vmatpush1.msra.mxu0 %v1801
    %2424 = vmatprep.subr.mxu0 %v1798
    %2425 = vmatpush1.msra.mxu0 %v1797
    %2426 = vmatprep.subr.mxu0 0.0
    %2427 = vmatpush2.msra.mxu0 0.0
    %2428 = vmatprep.subr.mxu0 0.0
    %2429 = vmatpush2.msra.mxu0 0.0
    %2430 = vmatprep.subr.mxu0 0.0
    %2431 = vmatpush2.msra.mxu0 0.0
    %2432 = vmatprep.subr.mxu0 0.0
    %2433 = vmatpush2.msra.mxu0 0.0
    %2434 = vmatprep.subr.mxu0 0.0
    %2435 = vmatpush2.msra.mxu0 0.0
    %2436 = vmatprep.subr.mxu0 0.0
    %2437 = vmatpush2.msra.mxu0 0.0
    %2438 = vmatprep.subr.mxu0 0.0
    %2439 = vmatpush2.msra.mxu0 0.0
    %2440 = vmatprep.subr.mxu0 0.0
    %2441 = vmatpush2.msra.mxu0 0.0
    %2442 = vmatprep.subr.mxu0 0.0
    %2443 = vmatpush2.msra.mxu0 0.0
    %2444 = vmatprep.subr.mxu0 0.0
    %2445 = vmatpush2.msra.mxu0 0.0
    %2446 = vmatprep.subr.mxu0 0.0
    %2447 = vmatpush2.msra.mxu0 0.0
    %2448 = vmatprep.subr.mxu0 0.0
    %2449 = vmatpush2.msra.mxu0 0.0
    %2450 = vmatprep.subr.mxu0 0.0
    %2451 = vmatpush2.msra.mxu0 0.0
    %2452 = vmatprep.subr.mxu0 0.0
    %2453 = vmatpush2.msra.mxu0 0.0
    %2454 = vmatprep.subr.mxu0 0.0
    %2455 = vmatpush2.msra.mxu0 0.0
    %2456 = vmatprep.subr.mxu0 0.0
    %2457 = vmatpush2.msra.mxu0 0.0
    %2458 = vmatprep.mubr.f32.mxu0 0.0
    %2459 = vmatmul.mubr.f32.gmra.mxu0 %v2384
    %v2460 = vpop.f32.mrf.mxu0
    %v2461 = vadd.f32 %v2390, %v2460
    %v2462 = vpop.f32.mrf.mxu0
    %v2463 = vadd.f32 %v2391, %v2462
    %2464 = vdwg.mxu0
    %2465 = vmatprep.subr.mxu0 %v1860
    %2466 = vmatpush1.msra.mxu0 %v1859
    %2467 = vmatprep.subr.mxu0 %v1856
    %2468 = vmatpush1.msra.mxu0 %v1855
    %2469 = vmatprep.subr.mxu0 %v1852
    %2470 = vmatpush1.msra.mxu0 %v1851
    %2471 = vmatprep.subr.mxu0 %v1848
    %2472 = vmatpush1.msra.mxu0 %v1847
    %2473 = vmatprep.subr.mxu0 %v1844
    %2474 = vmatpush1.msra.mxu0 %v1843
    %2475 = vmatprep.subr.mxu0 %v1840
    %2476 = vmatpush1.msra.mxu0 %v1839
    %2477 = vmatprep.subr.mxu0 %v1836
    %2478 = vmatpush1.msra.mxu0 %v1835
    %2479 = vmatprep.subr.mxu0 %v1832
    %2480 = vmatpush1.msra.mxu0 %v1831
    %2481 = vmatprep.subr.mxu0 %v1828
    %2482 = vmatpush1.msra.mxu0 %v1827
    %2483 = vmatprep.subr.mxu0 %v1824
    %2484 = vmatpush1.msra.mxu0 %v1823
    %2485 = vmatprep.subr.mxu0 %v1820
    %2486 = vmatpush1.msra.mxu0 %v1819
    %2487 = vmatprep.subr.mxu0 %v1816
    %2488 = vmatpush1.msra.mxu0 %v1815
    %2489 = vmatprep.subr.mxu0 %v1812
    %2490 = vmatpush1.msra.mxu0 %v1811
    %2491 = vmatprep.subr.mxu0 %v1808
    %2492 = vmatpush1.msra.mxu0 %v1807
    %2493 = vmatprep.subr.mxu0 %v1804
    %2494 = vmatpush1.msra.mxu0 %v1803
    %2495 = vmatprep.subr.mxu0 %v1800
    %2496 = vmatpush1.msra.mxu0 %v1799
    %2497 = vmatprep.subr.mxu0 0.0
    %2498 = vmatpush2.msra.mxu0 0.0
    %2499 = vmatprep.subr.mxu0 0.0
    %2500 = vmatpush2.msra.mxu0 0.0
    %2501 = vmatprep.subr.mxu0 0.0
    %2502 = vmatpush2.msra.mxu0 0.0
    %2503 = vmatprep.subr.mxu0 0.0
    %2504 = vmatpush2.msra.mxu0 0.0
    %2505 = vmatprep.subr.mxu0 0.0
    %2506 = vmatpush2.msra.mxu0 0.0
    %2507 = vmatprep.subr.mxu0 0.0
    %2508 = vmatpush2.msra.mxu0 0.0
    %2509 = vmatprep.subr.mxu0 0.0
    %2510 = vmatpush2.msra.mxu0 0.0
    %2511 = vmatprep.subr.mxu0 0.0
    %2512 = vmatpush2.msra.mxu0 0.0
    %2513 = vmatprep.subr.mxu0 0.0
    %2514 = vmatpush2.msra.mxu0 0.0
    %2515 = vmatprep.subr.mxu0 0.0
    %2516 = vmatpush2.msra.mxu0 0.0
    %2517 = vmatprep.subr.mxu0 0.0
    %2518 = vmatpush2.msra.mxu0 0.0
    %2519 = vmatprep.subr.mxu0 0.0
    %2520 = vmatpush2.msra.mxu0 0.0
    %2521 = vmatprep.subr.mxu0 0.0
    %2522 = vmatpush2.msra.mxu0 0.0
    %2523 = vmatprep.subr.mxu0 0.0
    %2524 = vmatpush2.msra.mxu0 0.0
    %2525 = vmatprep.subr.mxu0 0.0
    %2526 = vmatpush2.msra.mxu0 0.0
    %2527 = vmatprep.subr.mxu0 0.0
    %2528 = vmatpush2.msra.mxu0 0.0
    %2529 = vmatprep.mubr.f32.mxu0 0.0
    %2530 = vmatmul.mubr.f32.gmra.mxu0 %v2384
    %v2531 = vpop.f32.mrf.mxu0
    %v2532 = vadd.f32 %v2392, %v2531
    %v2533 = vpop.f32.mrf.mxu0
    %v2534 = vadd.f32 %v2393, %v2533
    %2535 = vdwg.mxu0
    %v2536 = vxor.u32 %v2461, 2147483648
    %v2537 = vmul.f32 %v2536, 1.442695
    %v2538 = vpow.pop %v2537
    %v2539 = vadd.f32 %v2538, 1.0
    %v2540 = vrcp.pop %v2539
    %v2541 = vmul.f32 1.0, %v2540
    %v2542 = vxor.u32 %v2463, 2147483648
    %v2543 = vmul.f32 %v2542, 1.442695
    %v2544 = vpow.pop %v2543
    %v2545 = vadd.f32 %v2544, 1.0
    %v2546 = vrcp.pop %v2545
    %v2547 = vmul.f32 1.0, %v2546
    %v2548 = vtanh.pop %v2532
    %v2549 = vxor.u32 %v2534, 2147483648
    %v2550 = vmul.f32 %v2549, 1.442695
    %v2551 = vpow.pop %v2550
    %v2552 = vadd.f32 %v2551, 1.0
    %v2553 = vrcp.pop %v2552
    %v2554 = vmul.f32 1.0, %v2553
    %v2555 = vmul.f32 %v2547, %v2382
    %v2556 = vmul.f32 %v2541, %v2548
    %v2557 = vadd.f32 %v2555, %v2556
    %v2558 = vtanh.pop %v2557
    %v2559 = vmul.f32 %v2554, %v2558
    %vm2560 = vcmp.eq.s32.totalorder %v1861, 3
    %v2561 = vsel %vm2560, %v2559, %v2386
    %s2562 = smul.u32 4, 4
    %s2563 = smul.addr %s2562, 8
    %s2564 = scalar_lea.vmem [#allocation2], %s2563
    %v2565 = vld [vmem:[%s2564] sm:$0xff]
    %v2566 = vld [vmem:[%s2564 + $0x8] sm:$0xff]
    %v2567 = vld [vmem:[%s2564 + $0x10] sm:$0xff]
    %v2568 = vld [vmem:[%s2564 + $0x18] sm:$0xff]
    %2569 = vmatprep.subr.mxu0 %v1858
    %2570 = vmatpush1.msra.mxu0 %v1857
    %2571 = vmatprep.subr.mxu0 %v1854
    %2572 = vmatpush1.msra.mxu0 %v1853
    %2573 = vmatprep.subr.mxu0 %v1850
    %2574 = vmatpush1.msra.mxu0 %v1849
    %2575 = vmatprep.subr.mxu0 %v1846
    %2576 = vmatpush1.msra.mxu0 %v1845
    %2577 = vmatprep.subr.mxu0 %v1842
    %2578 = vmatpush1.msra.mxu0 %v1841
    %2579 = vmatprep.subr.mxu0 %v1838
    %2580 = vmatpush1.msra.mxu0 %v1837
    %2581 = vmatprep.subr.mxu0 %v1834
    %2582 = vmatpush1.msra.mxu0 %v1833
    %2583 = vmatprep.subr.mxu0 %v1830
    %2584 = vmatpush1.msra.mxu0 %v1829
    %2585 = vmatprep.subr.mxu0 %v1826
    %2586 = vmatpush1.msra.mxu0 %v1825
    %2587 = vmatprep.subr.mxu0 %v1822
    %2588 = vmatpush1.msra.mxu0 %v1821
    %2589 = vmatprep.subr.mxu0 %v1818
    %2590 = vmatpush1.msra.mxu0 %v1817
    %2591 = vmatprep.subr.mxu0 %v1814
    %2592 = vmatpush1.msra.mxu0 %v1813
    %2593 = vmatprep.subr.mxu0 %v1810
    %2594 = vmatpush1.msra.mxu0 %v1809
    %2595 = vmatprep.subr.mxu0 %v1806
    %2596 = vmatpush1.msra.mxu0 %v1805
    %2597 = vmatprep.subr.mxu0 %v1802
    %2598 = vmatpush1.msra.mxu0 %v1801
    %2599 = vmatprep.subr.mxu0 %v1798
    %2600 = vmatpush1.msra.mxu0 %v1797
    %2601 = vmatprep.subr.mxu0 0.0
    %2602 = vmatpush2.msra.mxu0 0.0
    %2603 = vmatprep.subr.mxu0 0.0
    %2604 = vmatpush2.msra.mxu0 0.0
    %2605 = vmatprep.subr.mxu0 0.0
    %2606 = vmatpush2.msra.mxu0 0.0
    %2607 = vmatprep.subr.mxu0 0.0
    %2608 = vmatpush2.msra.mxu0 0.0
    %2609 = vmatprep.subr.mxu0 0.0
    %2610 = vmatpush2.msra.mxu0 0.0
    %2611 = vmatprep.subr.mxu0 0.0
    %2612 = vmatpush2.msra.mxu0 0.0
    %2613 = vmatprep.subr.mxu0 0.0
    %2614 = vmatpush2.msra.mxu0 0.0
    %2615 = vmatprep.subr.mxu0 0.0
    %2616 = vmatpush2.msra.mxu0 0.0
    %2617 = vmatprep.subr.mxu0 0.0
    %2618 = vmatpush2.msra.mxu0 0.0
    %2619 = vmatprep.subr.mxu0 0.0
    %2620 = vmatpush2.msra.mxu0 0.0
    %2621 = vmatprep.subr.mxu0 0.0
    %2622 = vmatpush2.msra.mxu0 0.0
    %2623 = vmatprep.subr.mxu0 0.0
    %2624 = vmatpush2.msra.mxu0 0.0
    %2625 = vmatprep.subr.mxu0 0.0
    %2626 = vmatpush2.msra.mxu0 0.0
    %2627 = vmatprep.subr.mxu0 0.0
    %2628 = vmatpush2.msra.mxu0 0.0
    %2629 = vmatprep.subr.mxu0 0.0
    %2630 = vmatpush2.msra.mxu0 0.0
    %2631 = vmatprep.subr.mxu0 0.0
    %2632 = vmatpush2.msra.mxu0 0.0
    %2633 = vmatprep.mubr.f32.mxu0 0.0
    %2634 = vmatmul.mubr.f32.gmra.mxu0 %v2559
    %v2635 = vpop.f32.mrf.mxu0
    %v2636 = vadd.f32 %v2565, %v2635
    %v2637 = vpop.f32.mrf.mxu0
    %v2638 = vadd.f32 %v2566, %v2637
    %2639 = vdwg.mxu0
    %2640 = vmatprep.subr.mxu0 %v1860
    %2641 = vmatpush1.msra.mxu0 %v1859
    %2642 = vmatprep.subr.mxu0 %v1856
    %2643 = vmatpush1.msra.mxu0 %v1855
    %2644 = vmatprep.subr.mxu0 %v1852
    %2645 = vmatpush1.msra.mxu0 %v1851
    %2646 = vmatprep.subr.mxu0 %v1848
    %2647 = vmatpush1.msra.mxu0 %v1847
    %2648 = vmatprep.subr.mxu0 %v1844
    %2649 = vmatpush1.msra.mxu0 %v1843
    %2650 = vmatprep.subr.mxu0 %v1840
    %2651 = vmatpush1.msra.mxu0 %v1839
    %2652 = vmatprep.subr.mxu0 %v1836
    %2653 = vmatpush1.msra.mxu0 %v1835
    %2654 = vmatprep.subr.mxu0 %v1832
    %2655 = vmatpush1.msra.mxu0 %v1831
    %2656 = vmatprep.subr.mxu0 %v1828
    %2657 = vmatpush1.msra.mxu0 %v1827
    %2658 = vmatprep.subr.mxu0 %v1824
    %2659 = vmatpush1.msra.mxu0 %v1823
    %2660 = vmatprep.subr.mxu0 %v1820
    %2661 = vmatpush1.msra.mxu0 %v1819
    %2662 = vmatprep.subr.mxu0 %v1816
    %2663 = vmatpush1.msra.mxu0 %v1815
    %2664 = vmatprep.subr.mxu0 %v1812
    %2665 = vmatpush1.msra.mxu0 %v1811
    %2666 = vmatprep.subr.mxu0 %v1808
    %2667 = vmatpush1.msra.mxu0 %v1807
    %2668 = vmatprep.subr.mxu0 %v1804
    %2669 = vmatpush1.msra.mxu0 %v1803
    %2670 = vmatprep.subr.mxu0 %v1800
    %2671 = vmatpush1.msra.mxu0 %v1799
    %2672 = vmatprep.subr.mxu0 0.0
    %2673 = vmatpush2.msra.mxu0 0.0
    %2674 = vmatprep.subr.mxu0 0.0
    %2675 = vmatpush2.msra.mxu0 0.0
    %2676 = vmatprep.subr.mxu0 0.0
    %2677 = vmatpush2.msra.mxu0 0.0
    %2678 = vmatprep.subr.mxu0 0.0
    %2679 = vmatpush2.msra.mxu0 0.0
    %2680 = vmatprep.subr.mxu0 0.0
    %2681 = vmatpush2.msra.mxu0 0.0
    %2682 = vmatprep.subr.mxu0 0.0
    %2683 = vmatpush2.msra.mxu0 0.0
    %2684 = vmatprep.subr.mxu0 0.0
    %2685 = vmatpush2.msra.mxu0 0.0
    %2686 = vmatprep.subr.mxu0 0.0
    %2687 = vmatpush2.msra.mxu0 0.0
    %2688 = vmatprep.subr.mxu0 0.0
    %2689 = vmatpush2.msra.mxu0 0.0
    %2690 = vmatprep.subr.mxu0 0.0
    %2691 = vmatpush2.msra.mxu0 0.0
    %2692 = vmatprep.subr.mxu0 0.0
    %2693 = vmatpush2.msra.mxu0 0.0
    %2694 = vmatprep.subr.mxu0 0.0
    %2695 = vmatpush2.msra.mxu0 0.0
    %2696 = vmatprep.subr.mxu0 0.0
    %2697 = vmatpush2.msra.mxu0 0.0
    %2698 = vmatprep.subr.mxu0 0.0
    %2699 = vmatpush2.msra.mxu0 0.0
    %2700 = vmatprep.subr.mxu0 0.0
    %2701 = vmatpush2.msra.mxu0 0.0
    %2702 = vmatprep.subr.mxu0 0.0
    %2703 = vmatpush2.msra.mxu0 0.0
    %2704 = vmatprep.mubr.f32.mxu0 0.0
    %2705 = vmatmul.mubr.f32.gmra.mxu0 %v2559
    %v2706 = vpop.f32.mrf.mxu0
    %v2707 = vadd.f32 %v2567, %v2706
    %v2708 = vpop.f32.mrf.mxu0
    %v2709 = vadd.f32 %v2568, %v2708
    %2710 = vdwg.mxu0
    %v2711 = vxor.u32 %v2636, 2147483648
    %v2712 = vmul.f32 %v2711, 1.442695
    %v2713 = vpow.pop %v2712
    %v2714 = vadd.f32 %v2713, 1.0
    %v2715 = vrcp.pop %v2714
    %v2716 = vmul.f32 1.0, %v2715
    %v2717 = vxor.u32 %v2638, 2147483648
    %v2718 = vmul.f32 %v2717, 1.442695
    %v2719 = vpow.pop %v2718
    %v2720 = vadd.f32 %v2719, 1.0
    %v2721 = vrcp.pop %v2720
    %v2722 = vmul.f32 1.0, %v2721
    %v2723 = vtanh.pop %v2707
    %v2724 = vxor.u32 %v2709, 2147483648
    %v2725 = vmul.f32 %v2724, 1.442695
    %v2726 = vpow.pop %v2725
    %v2727 = vadd.f32 %v2726, 1.0
    %v2728 = vrcp.pop %v2727
    %v2729 = vmul.f32 1.0, %v2728
    %v2730 = vmul.f32 %v2722, %v2557
    %v2731 = vmul.f32 %v2716, %v2723
    %v2732 = vadd.f32 %v2730, %v2731
    %v2733 = vtanh.pop %v2732
    %v2734 = vmul.f32 %v2729, %v2733
    %vm2735 = vcmp.eq.s32.totalorder %v1861, 4
    %v2736 = vsel %vm2735, %v2734, %v2561
    %s2737 = smul.u32 5, 4
    %s2738 = smul.addr %s2737, 8
    %s2739 = scalar_lea.vmem [#allocation2], %s2738
    %v2740 = vld [vmem:[%s2739] sm:$0xff]
    %v2741 = vld [vmem:[%s2739 + $0x8] sm:$0xff]
    %v2742 = vld [vmem:[%s2739 + $0x10] sm:$0xff]
    %v2743 = vld [vmem:[%s2739 + $0x18] sm:$0xff]
    %2744 = vmatprep.subr.mxu0 %v1858
    %2745 = vmatpush1.msra.mxu0 %v1857
    %2746 = vmatprep.subr.mxu0 %v1854
    %2747 = vmatpush1.msra.mxu0 %v1853
    %2748 = vmatprep.subr.mxu0 %v1850
    %2749 = vmatpush1.msra.mxu0 %v1849
    %2750 = vmatprep.subr.mxu0 %v1846
    %2751 = vmatpush1.msra.mxu0 %v1845
    %2752 = vmatprep.subr.mxu0 %v1842
    %2753 = vmatpush1.msra.mxu0 %v1841
    %2754 = vmatprep.subr.mxu0 %v1838
    %2755 = vmatpush1.msra.mxu0 %v1837
    %2756 = vmatprep.subr.mxu0 %v1834
    %2757 = vmatpush1.msra.mxu0 %v1833
    %2758 = vmatprep.subr.mxu0 %v1830
    %2759 = vmatpush1.msra.mxu0 %v1829
    %2760 = vmatprep.subr.mxu0 %v1826
    %2761 = vmatpush1.msra.mxu0 %v1825
    %2762 = vmatprep.subr.mxu0 %v1822
    %2763 = vmatpush1.msra.mxu0 %v1821
    %2764 = vmatprep.subr.mxu0 %v1818
    %2765 = vmatpush1.msra.mxu0 %v1817
    %2766 = vmatprep.subr.mxu0 %v1814
    %2767 = vmatpush1.msra.mxu0 %v1813
    %2768 = vmatprep.subr.mxu0 %v1810
    %2769 = vmatpush1.msra.mxu0 %v1809
    %2770 = vmatprep.subr.mxu0 %v1806
    %2771 = vmatpush1.msra.mxu0 %v1805
    %2772 = vmatprep.subr.mxu0 %v1802
    %2773 = vmatpush1.msra.mxu0 %v1801
    %2774 = vmatprep.subr.mxu0 %v1798
    %2775 = vmatpush1.msra.mxu0 %v1797
    %2776 = vmatprep.subr.mxu0 0.0
    %2777 = vmatpush2.msra.mxu0 0.0
    %2778 = vmatprep.subr.mxu0 0.0
    %2779 = vmatpush2.msra.mxu0 0.0
    %2780 = vmatprep.subr.mxu0 0.0
    %2781 = vmatpush2.msra.mxu0 0.0
    %2782 = vmatprep.subr.mxu0 0.0
    %2783 = vmatpush2.msra.mxu0 0.0
    %2784 = vmatprep.subr.mxu0 0.0
    %2785 = vmatpush2.msra.mxu0 0.0
    %2786 = vmatprep.subr.mxu0 0.0
    %2787 = vmatpush2.msra.mxu0 0.0
    %2788 = vmatprep.subr.mxu0 0.0
    %2789 = vmatpush2.msra.mxu0 0.0
    %2790 = vmatprep.subr.mxu0 0.0
    %2791 = vmatpush2.msra.mxu0 0.0
    %2792 = vmatprep.subr.mxu0 0.0
    %2793 = vmatpush2.msra.mxu0 0.0
    %2794 = vmatprep.subr.mxu0 0.0
    %2795 = vmatpush2.msra.mxu0 0.0
    %2796 = vmatprep.subr.mxu0 0.0
    %2797 = vmatpush2.msra.mxu0 0.0
    %2798 = vmatprep.subr.mxu0 0.0
    %2799 = vmatpush2.msra.mxu0 0.0
    %2800 = vmatprep.subr.mxu0 0.0
    %2801 = vmatpush2.msra.mxu0 0.0
    %2802 = vmatprep.subr.mxu0 0.0
    %2803 = vmatpush2.msra.mxu0 0.0
    %2804 = vmatprep.subr.mxu0 0.0
    %2805 = vmatpush2.msra.mxu0 0.0
    %2806 = vmatprep.subr.mxu0 0.0
    %2807 = vmatpush2.msra.mxu0 0.0
    %2808 = vmatprep.mubr.f32.mxu0 0.0
    %2809 = vmatmul.mubr.f32.gmra.mxu0 %v2734
    %v2810 = vpop.f32.mrf.mxu0
    %v2811 = vadd.f32 %v2740, %v2810
    %v2812 = vpop.f32.mrf.mxu0
    %v2813 = vadd.f32 %v2741, %v2812
    %2814 = vdwg.mxu0
    %2815 = vmatprep.subr.mxu0 %v1860
    %2816 = vmatpush1.msra.mxu0 %v1859
    %2817 = vmatprep.subr.mxu0 %v1856
    %2818 = vmatpush1.msra.mxu0 %v1855
    %2819 = vmatprep.subr.mxu0 %v1852
    %2820 = vmatpush1.msra.mxu0 %v1851
    %2821 = vmatprep.subr.mxu0 %v1848
    %2822 = vmatpush1.msra.mxu0 %v1847
    %2823 = vmatprep.subr.mxu0 %v1844
    %2824 = vmatpush1.msra.mxu0 %v1843
    %2825 = vmatprep.subr.mxu0 %v1840
    %2826 = vmatpush1.msra.mxu0 %v1839
    %2827 = vmatprep.subr.mxu0 %v1836
    %2828 = vmatpush1.msra.mxu0 %v1835
    %2829 = vmatprep.subr.mxu0 %v1832
    %2830 = vmatpush1.msra.mxu0 %v1831
    %2831 = vmatprep.subr.mxu0 %v1828
    %2832 = vmatpush1.msra.mxu0 %v1827
    %2833 = vmatprep.subr.mxu0 %v1824
    %2834 = vmatpush1.msra.mxu0 %v1823
    %2835 = vmatprep.subr.mxu0 %v1820
    %2836 = vmatpush1.msra.mxu0 %v1819
    %2837 = vmatprep.subr.mxu0 %v1816
    %2838 = vmatpush1.msra.mxu0 %v1815
    %2839 = vmatprep.subr.mxu0 %v1812
    %2840 = vmatpush1.msra.mxu0 %v1811
    %2841 = vmatprep.subr.mxu0 %v1808
    %2842 = vmatpush1.msra.mxu0 %v1807
    %2843 = vmatprep.subr.mxu0 %v1804
    %2844 = vmatpush1.msra.mxu0 %v1803
    %2845 = vmatprep.subr.mxu0 %v1800
    %2846 = vmatpush1.msra.mxu0 %v1799
    %2847 = vmatprep.subr.mxu0 0.0
    %2848 = vmatpush2.msra.mxu0 0.0
    %2849 = vmatprep.subr.mxu0 0.0
    %2850 = vmatpush2.msra.mxu0 0.0
    %2851 = vmatprep.subr.mxu0 0.0
    %2852 = vmatpush2.msra.mxu0 0.0
    %2853 = vmatprep.subr.mxu0 0.0
    %2854 = vmatpush2.msra.mxu0 0.0
    %2855 = vmatprep.subr.mxu0 0.0
    %2856 = vmatpush2.msra.mxu0 0.0
    %2857 = vmatprep.subr.mxu0 0.0
    %2858 = vmatpush2.msra.mxu0 0.0
    %2859 = vmatprep.subr.mxu0 0.0
    %2860 = vmatpush2.msra.mxu0 0.0
    %2861 = vmatprep.subr.mxu0 0.0
    %2862 = vmatpush2.msra.mxu0 0.0
    %2863 = vmatprep.subr.mxu0 0.0
    %2864 = vmatpush2.msra.mxu0 0.0
    %2865 = vmatprep.subr.mxu0 0.0
    %2866 = vmatpush2.msra.mxu0 0.0
    %2867 = vmatprep.subr.mxu0 0.0
    %2868 = vmatpush2.msra.mxu0 0.0
    %2869 = vmatprep.subr.mxu0 0.0
    %2870 = vmatpush2.msra.mxu0 0.0
    %2871 = vmatprep.subr.mxu0 0.0
    %2872 = vmatpush2.msra.mxu0 0.0
    %2873 = vmatprep.subr.mxu0 0.0
    %2874 = vmatpush2.msra.mxu0 0.0
    %2875 = vmatprep.subr.mxu0 0.0
    %2876 = vmatpush2.msra.mxu0 0.0
    %2877 = vmatprep.subr.mxu0 0.0
    %2878 = vmatpush2.msra.mxu0 0.0
    %2879 = vmatprep.mubr.f32.mxu0 0.0
    %2880 = vmatmul.mubr.f32.gmra.mxu0 %v2734
    %v2881 = vpop.f32.mrf.mxu0
    %v2882 = vadd.f32 %v2742, %v2881
    %v2883 = vpop.f32.mrf.mxu0
    %v2884 = vadd.f32 %v2743, %v2883
    %2885 = vdwg.mxu0
    %v2886 = vxor.u32 %v2811, 2147483648
    %v2887 = vmul.f32 %v2886, 1.442695
    %v2888 = vpow.pop %v2887
    %v2889 = vadd.f32 %v2888, 1.0
    %v2890 = vrcp.pop %v2889
    %v2891 = vmul.f32 1.0, %v2890
    %v2892 = vxor.u32 %v2813, 2147483648
    %v2893 = vmul.f32 %v2892, 1.442695
    %v2894 = vpow.pop %v2893
    %v2895 = vadd.f32 %v2894, 1.0
    %v2896 = vrcp.pop %v2895
    %v2897 = vmul.f32 1.0, %v2896
    %v2898 = vtanh.pop %v2882
    %v2899 = vxor.u32 %v2884, 2147483648
    %v2900 = vmul.f32 %v2899, 1.442695
    %v2901 = vpow.pop %v2900
    %v2902 = vadd.f32 %v2901, 1.0
    %v2903 = vrcp.pop %v2902
    %v2904 = vmul.f32 1.0, %v2903
    %v2905 = vmul.f32 %v2897, %v2732
    %v2906 = vmul.f32 %v2891, %v2898
    %v2907 = vadd.f32 %v2905, %v2906
    %v2908 = vtanh.pop %v2907
    %v2909 = vmul.f32 %v2904, %v2908
    %vm2910 = vcmp.eq.s32.totalorder %v1861, 5
    %v2911 = vsel %vm2910, %v2909, %v2736
    %s2912 = smul.u32 6, 4
    %s2913 = smul.addr %s2912, 8
    %s2914 = scalar_lea.vmem [#allocation2], %s2913
    %v2915 = vld [vmem:[%s2914] sm:$0xff]
    %v2916 = vld [vmem:[%s2914 + $0x8] sm:$0xff]
    %v2917 = vld [vmem:[%s2914 + $0x10] sm:$0xff]
    %v2918 = vld [vmem:[%s2914 + $0x18] sm:$0xff]
    %2919 = vmatprep.subr.mxu0 %v1858
    %2920 = vmatpush1.msra.mxu0 %v1857
    %2921 = vmatprep.subr.mxu0 %v1854
    %2922 = vmatpush1.msra.mxu0 %v1853
    %2923 = vmatprep.subr.mxu0 %v1850
    %2924 = vmatpush1.msra.mxu0 %v1849
    %2925 = vmatprep.subr.mxu0 %v1846
    %2926 = vmatpush1.msra.mxu0 %v1845
    %2927 = vmatprep.subr.mxu0 %v1842
    %2928 = vmatpush1.msra.mxu0 %v1841
    %2929 = vmatprep.subr.mxu0 %v1838
    %2930 = vmatpush1.msra.mxu0 %v1837
    %2931 = vmatprep.subr.mxu0 %v1834
    %2932 = vmatpush1.msra.mxu0 %v1833
    %2933 = vmatprep.subr.mxu0 %v1830
    %2934 = vmatpush1.msra.mxu0 %v1829
    %2935 = vmatprep.subr.mxu0 %v1826
    %2936 = vmatpush1.msra.mxu0 %v1825
    %2937 = vmatprep.subr.mxu0 %v1822
    %2938 = vmatpush1.msra.mxu0 %v1821
    %2939 = vmatprep.subr.mxu0 %v1818
    %2940 = vmatpush1.msra.mxu0 %v1817
    %2941 = vmatprep.subr.mxu0 %v1814
    %2942 = vmatpush1.msra.mxu0 %v1813
    %2943 = vmatprep.subr.mxu0 %v1810
    %2944 = vmatpush1.msra.mxu0 %v1809
    %2945 = vmatprep.subr.mxu0 %v1806
    %2946 = vmatpush1.msra.mxu0 %v1805
    %2947 = vmatprep.subr.mxu0 %v1802
    %2948 = vmatpush1.msra.mxu0 %v1801
    %2949 = vmatprep.subr.mxu0 %v1798
    %2950 = vmatpush1.msra.mxu0 %v1797
    %2951 = vmatprep.subr.mxu0 0.0
    %2952 = vmatpush2.msra.mxu0 0.0
    %2953 = vmatprep.subr.mxu0 0.0
    %2954 = vmatpush2.msra.mxu0 0.0
    %2955 = vmatprep.subr.mxu0 0.0
    %2956 = vmatpush2.msra.mxu0 0.0
    %2957 = vmatprep.subr.mxu0 0.0
    %2958 = vmatpush2.msra.mxu0 0.0
    %2959 = vmatprep.subr.mxu0 0.0
    %2960 = vmatpush2.msra.mxu0 0.0
    %2961 = vmatprep.subr.mxu0 0.0
    %2962 = vmatpush2.msra.mxu0 0.0
    %2963 = vmatprep.subr.mxu0 0.0
    %2964 = vmatpush2.msra.mxu0 0.0
    %2965 = vmatprep.subr.mxu0 0.0
    %2966 = vmatpush2.msra.mxu0 0.0
    %2967 = vmatprep.subr.mxu0 0.0
    %2968 = vmatpush2.msra.mxu0 0.0
    %2969 = vmatprep.subr.mxu0 0.0
    %2970 = vmatpush2.msra.mxu0 0.0
    %2971 = vmatprep.subr.mxu0 0.0
    %2972 = vmatpush2.msra.mxu0 0.0
    %2973 = vmatprep.subr.mxu0 0.0
    %2974 = vmatpush2.msra.mxu0 0.0
    %2975 = vmatprep.subr.mxu0 0.0
    %2976 = vmatpush2.msra.mxu0 0.0
    %2977 = vmatprep.subr.mxu0 0.0
    %2978 = vmatpush2.msra.mxu0 0.0
    %2979 = vmatprep.subr.mxu0 0.0
    %2980 = vmatpush2.msra.mxu0 0.0
    %2981 = vmatprep.subr.mxu0 0.0
    %2982 = vmatpush2.msra.mxu0 0.0
    %2983 = vmatprep.mubr.f32.mxu0 0.0
    %2984 = vmatmul.mubr.f32.gmra.mxu0 %v2909
    %v2985 = vpop.f32.mrf.mxu0
    %v2986 = vadd.f32 %v2915, %v2985
    %v2987 = vpop.f32.mrf.mxu0
    %v2988 = vadd.f32 %v2916, %v2987
    %2989 = vdwg.mxu0
    %2990 = vmatprep.subr.mxu0 %v1860
    %2991 = vmatpush1.msra.mxu0 %v1859
    %2992 = vmatprep.subr.mxu0 %v1856
    %2993 = vmatpush1.msra.mxu0 %v1855
    %2994 = vmatprep.subr.mxu0 %v1852
    %2995 = vmatpush1.msra.mxu0 %v1851
    %2996 = vmatprep.subr.mxu0 %v1848
    %2997 = vmatpush1.msra.mxu0 %v1847
    %2998 = vmatprep.subr.mxu0 %v1844
    %2999 = vmatpush1.msra.mxu0 %v1843
    %3000 = vmatprep.subr.mxu0 %v1840
    %3001 = vmatpush1.msra.mxu0 %v1839
    %3002 = vmatprep.subr.mxu0 %v1836
    %3003 = vmatpush1.msra.mxu0 %v1835
    %3004 = vmatprep.subr.mxu0 %v1832
    %3005 = vmatpush1.msra.mxu0 %v1831
    %3006 = vmatprep.subr.mxu0 %v1828
    %3007 = vmatpush1.msra.mxu0 %v1827
    %3008 = vmatprep.subr.mxu0 %v1824
    %3009 = vmatpush1.msra.mxu0 %v1823
    %3010 = vmatprep.subr.mxu0 %v1820
    %3011 = vmatpush1.msra.mxu0 %v1819
    %3012 = vmatprep.subr.mxu0 %v1816
    %3013 = vmatpush1.msra.mxu0 %v1815
    %3014 = vmatprep.subr.mxu0 %v1812
    %3015 = vmatpush1.msra.mxu0 %v1811
    %3016 = vmatprep.subr.mxu0 %v1808
    %3017 = vmatpush1.msra.mxu0 %v1807
    %3018 = vmatprep.subr.mxu0 %v1804
    %3019 = vmatpush1.msra.mxu0 %v1803
    %3020 = vmatprep.subr.mxu0 %v1800
    %3021 = vmatpush1.msra.mxu0 %v1799
    %3022 = vmatprep.subr.mxu0 0.0
    %3023 = vmatpush2.msra.mxu0 0.0
    %3024 = vmatprep.subr.mxu0 0.0
    %3025 = vmatpush2.msra.mxu0 0.0
    %3026 = vmatprep.subr.mxu0 0.0
    %3027 = vmatpush2.msra.mxu0 0.0
    %3028 = vmatprep.subr.mxu0 0.0
    %3029 = vmatpush2.msra.mxu0 0.0
    %3030 = vmatprep.subr.mxu0 0.0
    %3031 = vmatpush2.msra.mxu0 0.0
    %3032 = vmatprep.subr.mxu0 0.0
    %3033 = vmatpush2.msra.mxu0 0.0
    %3034 = vmatprep.subr.mxu0 0.0
    %3035 = vmatpush2.msra.mxu0 0.0
    %3036 = vmatprep.subr.mxu0 0.0
    %3037 = vmatpush2.msra.mxu0 0.0
    %3038 = vmatprep.subr.mxu0 0.0
    %3039 = vmatpush2.msra.mxu0 0.0
    %3040 = vmatprep.subr.mxu0 0.0
    %3041 = vmatpush2.msra.mxu0 0.0
    %3042 = vmatprep.subr.mxu0 0.0
    %3043 = vmatpush2.msra.mxu0 0.0
    %3044 = vmatprep.subr.mxu0 0.0
    %3045 = vmatpush2.msra.mxu0 0.0
    %3046 = vmatprep.subr.mxu0 0.0
    %3047 = vmatpush2.msra.mxu0 0.0
    %3048 = vmatprep.subr.mxu0 0.0
    %3049 = vmatpush2.msra.mxu0 0.0
    %3050 = vmatprep.subr.mxu0 0.0
    %3051 = vmatpush2.msra.mxu0 0.0
    %3052 = vmatprep.subr.mxu0 0.0
    %3053 = vmatpush2.msra.mxu0 0.0
    %3054 = vmatprep.mubr.f32.mxu0 0.0
    %3055 = vmatmul.mubr.f32.gmra.mxu0 %v2909
    %v3056 = vpop.f32.mrf.mxu0
    %v3057 = vadd.f32 %v2917, %v3056
    %v3058 = vpop.f32.mrf.mxu0
    %v3059 = vadd.f32 %v2918, %v3058
    %3060 = vdwg.mxu0
    %v3061 = vxor.u32 %v2986, 2147483648
    %v3062 = vmul.f32 %v3061, 1.442695
    %v3063 = vpow.pop %v3062
    %v3064 = vadd.f32 %v3063, 1.0
    %v3065 = vrcp.pop %v3064
    %v3066 = vmul.f32 1.0, %v3065
    %v3067 = vxor.u32 %v2988, 2147483648
    %v3068 = vmul.f32 %v3067, 1.442695
    %v3069 = vpow.pop %v3068
    %v3070 = vadd.f32 %v3069, 1.0
    %v3071 = vrcp.pop %v3070
    %v3072 = vmul.f32 1.0, %v3071
    %v3073 = vtanh.pop %v3057
    %v3074 = vxor.u32 %v3059, 2147483648
    %v3075 = vmul.f32 %v3074, 1.442695
    %v3076 = vpow.pop %v3075
    %v3077 = vadd.f32 %v3076, 1.0
    %v3078 = vrcp.pop %v3077
    %v3079 = vmul.f32 1.0, %v3078
    %v3080 = vmul.f32 %v3072, %v2907
    %v3081 = vmul.f32 %v3066, %v3073
    %v3082 = vadd.f32 %v3080, %v3081
    %v3083 = vtanh.pop %v3082
    %v3084 = vmul.f32 %v3079, %v3083
    %vm3085 = vcmp.eq.s32.totalorder %v1861, 6
    %v3086 = vsel %vm3085, %v3084, %v2911
    %s3087 = smul.u32 7, 4
    %s3088 = smul.addr %s3087, 8
    %s3089 = scalar_lea.vmem [#allocation2], %s3088
    %v3090 = vld [vmem:[%s3089] sm:$0xff]
    %v3091 = vld [vmem:[%s3089 + $0x8] sm:$0xff]
    %v3092 = vld [vmem:[%s3089 + $0x10] sm:$0xff]
    %v3093 = vld [vmem:[%s3089 + $0x18] sm:$0xff]
    %3094 = vmatprep.subr.mxu0 %v1858
    %3095 = vmatpush1.msra.mxu0 %v1857
    %3096 = vmatprep.subr.mxu0 %v1854
    %3097 = vmatpush1.msra.mxu0 %v1853
    %3098 = vmatprep.subr.mxu0 %v1850
    %3099 = vmatpush1.msra.mxu0 %v1849
    %3100 = vmatprep.subr.mxu0 %v1846
    %3101 = vmatpush1.msra.mxu0 %v1845
    %3102 = vmatprep.subr.mxu0 %v1842
    %3103 = vmatpush1.msra.mxu0 %v1841
    %3104 = vmatprep.subr.mxu0 %v1838
    %3105 = vmatpush1.msra.mxu0 %v1837
    %3106 = vmatprep.subr.mxu0 %v1834
    %3107 = vmatpush1.msra.mxu0 %v1833
    %3108 = vmatprep.subr.mxu0 %v1830
    %3109 = vmatpush1.msra.mxu0 %v1829
    %3110 = vmatprep.subr.mxu0 %v1826
    %3111 = vmatpush1.msra.mxu0 %v1825
    %3112 = vmatprep.subr.mxu0 %v1822
    %3113 = vmatpush1.msra.mxu0 %v1821
    %3114 = vmatprep.subr.mxu0 %v1818
    %3115 = vmatpush1.msra.mxu0 %v1817
    %3116 = vmatprep.subr.mxu0 %v1814
    %3117 = vmatpush1.msra.mxu0 %v1813
    %3118 = vmatprep.subr.mxu0 %v1810
    %3119 = vmatpush1.msra.mxu0 %v1809
    %3120 = vmatprep.subr.mxu0 %v1806
    %3121 = vmatpush1.msra.mxu0 %v1805
    %3122 = vmatprep.subr.mxu0 %v1802
    %3123 = vmatpush1.msra.mxu0 %v1801
    %3124 = vmatprep.subr.mxu0 %v1798
    %3125 = vmatpush1.msra.mxu0 %v1797
    %3126 = vmatprep.subr.mxu0 0.0
    %3127 = vmatpush2.msra.mxu0 0.0
    %3128 = vmatprep.subr.mxu0 0.0
    %3129 = vmatpush2.msra.mxu0 0.0
    %3130 = vmatprep.subr.mxu0 0.0
    %3131 = vmatpush2.msra.mxu0 0.0
    %3132 = vmatprep.subr.mxu0 0.0
    %3133 = vmatpush2.msra.mxu0 0.0
    %3134 = vmatprep.subr.mxu0 0.0
    %3135 = vmatpush2.msra.mxu0 0.0
    %3136 = vmatprep.subr.mxu0 0.0
    %3137 = vmatpush2.msra.mxu0 0.0
    %3138 = vmatprep.subr.mxu0 0.0
    %3139 = vmatpush2.msra.mxu0 0.0
    %3140 = vmatprep.subr.mxu0 0.0
    %3141 = vmatpush2.msra.mxu0 0.0
    %3142 = vmatprep.subr.mxu0 0.0
    %3143 = vmatpush2.msra.mxu0 0.0
    %3144 = vmatprep.subr.mxu0 0.0
    %3145 = vmatpush2.msra.mxu0 0.0
    %3146 = vmatprep.subr.mxu0 0.0
    %3147 = vmatpush2.msra.mxu0 0.0
    %3148 = vmatprep.subr.mxu0 0.0
    %3149 = vmatpush2.msra.mxu0 0.0
    %3150 = vmatprep.subr.mxu0 0.0
    %3151 = vmatpush2.msra.mxu0 0.0
    %3152 = vmatprep.subr.mxu0 0.0
    %3153 = vmatpush2.msra.mxu0 0.0
    %3154 = vmatprep.subr.mxu0 0.0
    %3155 = vmatpush2.msra.mxu0 0.0
    %3156 = vmatprep.subr.mxu0 0.0
    %3157 = vmatpush2.msra.mxu0 0.0
    %3158 = vmatprep.mubr.f32.mxu0 0.0
    %3159 = vmatmul.mubr.f32.gmra.mxu0 %v3084
    %v3160 = vpop.f32.mrf.mxu0
    %v3161 = vadd.f32 %v3090, %v3160
    %v3162 = vpop.f32.mrf.mxu0
    %v3163 = vadd.f32 %v3091, %v3162
    %3164 = vdwg.mxu0
    %3165 = vmatprep.subr.mxu0 %v1860
    %3166 = vmatpush1.msra.mxu0 %v1859
    %3167 = vmatprep.subr.mxu0 %v1856
    %3168 = vmatpush1.msra.mxu0 %v1855
    %3169 = vmatprep.subr.mxu0 %v1852
    %3170 = vmatpush1.msra.mxu0 %v1851
    %3171 = vmatprep.subr.mxu0 %v1848
    %3172 = vmatpush1.msra.mxu0 %v1847
    %3173 = vmatprep.subr.mxu0 %v1844
    %3174 = vmatpush1.msra.mxu0 %v1843
    %3175 = vmatprep.subr.mxu0 %v1840
    %3176 = vmatpush1.msra.mxu0 %v1839
    %3177 = vmatprep.subr.mxu0 %v1836
    %3178 = vmatpush1.msra.mxu0 %v1835
    %3179 = vmatprep.subr.mxu0 %v1832
    %3180 = vmatpush1.msra.mxu0 %v1831
    %3181 = vmatprep.subr.mxu0 %v1828
    %3182 = vmatpush1.msra.mxu0 %v1827
    %3183 = vmatprep.subr.mxu0 %v1824
    %3184 = vmatpush1.msra.mxu0 %v1823
    %3185 = vmatprep.subr.mxu0 %v1820
    %3186 = vmatpush1.msra.mxu0 %v1819
    %3187 = vmatprep.subr.mxu0 %v1816
    %3188 = vmatpush1.msra.mxu0 %v1815
    %3189 = vmatprep.subr.mxu0 %v1812
    %3190 = vmatpush1.msra.mxu0 %v1811
    %3191 = vmatprep.subr.mxu0 %v1808
    %3192 = vmatpush1.msra.mxu0 %v1807
    %3193 = vmatprep.subr.mxu0 %v1804
    %3194 = vmatpush1.msra.mxu0 %v1803
    %3195 = vmatprep.subr.mxu0 %v1800
    %3196 = vmatpush1.msra.mxu0 %v1799
    %3197 = vmatprep.subr.mxu0 0.0
    %3198 = vmatpush2.msra.mxu0 0.0
    %3199 = vmatprep.subr.mxu0 0.0
    %3200 = vmatpush2.msra.mxu0 0.0
    %3201 = vmatprep.subr.mxu0 0.0
    %3202 = vmatpush2.msra.mxu0 0.0
    %3203 = vmatprep.subr.mxu0 0.0
    %3204 = vmatpush2.msra.mxu0 0.0
    %3205 = vmatprep.subr.mxu0 0.0
    %3206 = vmatpush2.msra.mxu0 0.0
    %3207 = vmatprep.subr.mxu0 0.0
    %3208 = vmatpush2.msra.mxu0 0.0
    %3209 = vmatprep.subr.mxu0 0.0
    %3210 = vmatpush2.msra.mxu0 0.0
    %3211 = vmatprep.subr.mxu0 0.0
    %3212 = vmatpush2.msra.mxu0 0.0
    %3213 = vmatprep.subr.mxu0 0.0
    %3214 = vmatpush2.msra.mxu0 0.0
    %3215 = vmatprep.subr.mxu0 0.0
    %3216 = vmatpush2.msra.mxu0 0.0
    %3217 = vmatprep.subr.mxu0 0.0
    %3218 = vmatpush2.msra.mxu0 0.0
    %3219 = vmatprep.subr.mxu0 0.0
    %3220 = vmatpush2.msra.mxu0 0.0
    %3221 = vmatprep.subr.mxu0 0.0
    %3222 = vmatpush2.msra.mxu0 0.0
    %3223 = vmatprep.subr.mxu0 0.0
    %3224 = vmatpush2.msra.mxu0 0.0
    %3225 = vmatprep.subr.mxu0 0.0
    %3226 = vmatpush2.msra.mxu0 0.0
    %3227 = vmatprep.subr.mxu0 0.0
    %3228 = vmatpush2.msra.mxu0 0.0
    %3229 = vmatprep.mubr.f32.mxu0 0.0
    %3230 = vmatmul.mubr.f32.gmra.mxu0 %v3084
    %v3231 = vpop.f32.mrf.mxu0
    %v3232 = vadd.f32 %v3092, %v3231
    %v3233 = vpop.f32.mrf.mxu0
    %v3234 = vadd.f32 %v3093, %v3233
    %3235 = vdwg.mxu0
    %v3236 = vxor.u32 %v3161, 2147483648
    %v3237 = vmul.f32 %v3236, 1.442695
    %v3238 = vpow.pop %v3237
    %v3239 = vadd.f32 %v3238, 1.0
    %v3240 = vrcp.pop %v3239
    %v3241 = vmul.f32 1.0, %v3240
    %v3242 = vxor.u32 %v3163, 2147483648
    %v3243 = vmul.f32 %v3242, 1.442695
    %v3244 = vpow.pop %v3243
    %v3245 = vadd.f32 %v3244, 1.0
    %v3246 = vrcp.pop %v3245
    %v3247 = vmul.f32 1.0, %v3246
    %v3248 = vtanh.pop %v3232
    %v3249 = vxor.u32 %v3234, 2147483648
    %v3250 = vmul.f32 %v3249, 1.442695
    %v3251 = vpow.pop %v3250
    %v3252 = vadd.f32 %v3251, 1.0
    %v3253 = vrcp.pop %v3252
    %v3254 = vmul.f32 1.0, %v3253
    %v3255 = vmul.f32 %v3247, %v3082
    %v3256 = vmul.f32 %v3241, %v3248
    %v3257 = vadd.f32 %v3255, %v3256
    %v3258 = vtanh.pop %v3257
    %v3259 = vmul.f32 %v3254, %v3258
    %vm3260 = vcmp.eq.s32.totalorder %v1861, 7
    %v3261 = vsel %vm3260, %v3259, %v3086
    %s3262 = smul.u32 8, 4
    %s3263 = smul.addr %s3262, 8
    %s3264 = scalar_lea.vmem [#allocation2], %s3263
    %v3265 = vld [vmem:[%s3264] sm:$0xff]
    %v3266 = vld [vmem:[%s3264 + $0x8] sm:$0xff]
    %v3267 = vld [vmem:[%s3264 + $0x10] sm:$0xff]
    %v3268 = vld [vmem:[%s3264 + $0x18] sm:$0xff]
    %3269 = vmatprep.subr.mxu0 %v1858
    %3270 = vmatpush1.msra.mxu0 %v1857
    %3271 = vmatprep.subr.mxu0 %v1854
    %3272 = vmatpush1.msra.mxu0 %v1853
    %3273 = vmatprep.subr.mxu0 %v1850
    %3274 = vmatpush1.msra.mxu0 %v1849
    %3275 = vmatprep.subr.mxu0 %v1846
    %3276 = vmatpush1.msra.mxu0 %v1845
    %3277 = vmatprep.subr.mxu0 %v1842
    %3278 = vmatpush1.msra.mxu0 %v1841
    %3279 = vmatprep.subr.mxu0 %v1838
    %3280 = vmatpush1.msra.mxu0 %v1837
    %3281 = vmatprep.subr.mxu0 %v1834
    %3282 = vmatpush1.msra.mxu0 %v1833
    %3283 = vmatprep.subr.mxu0 %v1830
    %3284 = vmatpush1.msra.mxu0 %v1829
    %3285 = vmatprep.subr.mxu0 %v1826
    %3286 = vmatpush1.msra.mxu0 %v1825
    %3287 = vmatprep.subr.mxu0 %v1822
    %3288 = vmatpush1.msra.mxu0 %v1821
    %3289 = vmatprep.subr.mxu0 %v1818
    %3290 = vmatpush1.msra.mxu0 %v1817
    %3291 = vmatprep.subr.mxu0 %v1814
    %3292 = vmatpush1.msra.mxu0 %v1813
    %3293 = vmatprep.subr.mxu0 %v1810
    %3294 = vmatpush1.msra.mxu0 %v1809
    %3295 = vmatprep.subr.mxu0 %v1806
    %3296 = vmatpush1.msra.mxu0 %v1805
    %3297 = vmatprep.subr.mxu0 %v1802
    %3298 = vmatpush1.msra.mxu0 %v1801
    %3299 = vmatprep.subr.mxu0 %v1798
    %3300 = vmatpush1.msra.mxu0 %v1797
    %3301 = vmatprep.subr.mxu0 0.0
    %3302 = vmatpush2.msra.mxu0 0.0
    %3303 = vmatprep.subr.mxu0 0.0
    %3304 = vmatpush2.msra.mxu0 0.0
    %3305 = vmatprep.subr.mxu0 0.0
    %3306 = vmatpush2.msra.mxu0 0.0
    %3307 = vmatprep.subr.mxu0 0.0
    %3308 = vmatpush2.msra.mxu0 0.0
    %3309 = vmatprep.subr.mxu0 0.0
    %3310 = vmatpush2.msra.mxu0 0.0
    %3311 = vmatprep.subr.mxu0 0.0
    %3312 = vmatpush2.msra.mxu0 0.0
    %3313 = vmatprep.subr.mxu0 0.0
    %3314 = vmatpush2.msra.mxu0 0.0
    %3315 = vmatprep.subr.mxu0 0.0
    %3316 = vmatpush2.msra.mxu0 0.0
    %3317 = vmatprep.subr.mxu0 0.0
    %3318 = vmatpush2.msra.mxu0 0.0
    %3319 = vmatprep.subr.mxu0 0.0
    %3320 = vmatpush2.msra.mxu0 0.0
    %3321 = vmatprep.subr.mxu0 0.0
    %3322 = vmatpush2.msra.mxu0 0.0
    %3323 = vmatprep.subr.mxu0 0.0
    %3324 = vmatpush2.msra.mxu0 0.0
    %3325 = vmatprep.subr.mxu0 0.0
    %3326 = vmatpush2.msra.mxu0 0.0
    %3327 = vmatprep.subr.mxu0 0.0
    %3328 = vmatpush2.msra.mxu0 0.0
    %3329 = vmatprep.subr.mxu0 0.0
    %3330 = vmatpush2.msra.mxu0 0.0
    %3331 = vmatprep.subr.mxu0 0.0
    %3332 = vmatpush2.msra.mxu0 0.0
    %3333 = vmatprep.mubr.f32.mxu0 0.0
    %3334 = vmatmul.mubr.f32.gmra.mxu0 %v3259
    %v3335 = vpop.f32.mrf.mxu0
    %v3336 = vadd.f32 %v3265, %v3335
    %v3337 = vpop.f32.mrf.mxu0
    %v3338 = vadd.f32 %v3266, %v3337
    %3339 = vdwg.mxu0
    %3340 = vmatprep.subr.mxu0 %v1860
    %3341 = vmatpush1.msra.mxu0 %v1859
    %3342 = vmatprep.subr.mxu0 %v1856
    %3343 = vmatpush1.msra.mxu0 %v1855
    %3344 = vmatprep.subr.mxu0 %v1852
    %3345 = vmatpush1.msra.mxu0 %v1851
    %3346 = vmatprep.subr.mxu0 %v1848
    %3347 = vmatpush1.msra.mxu0 %v1847
    %3348 = vmatprep.subr.mxu0 %v1844
    %3349 = vmatpush1.msra.mxu0 %v1843
    %3350 = vmatprep.subr.mxu0 %v1840
    %3351 = vmatpush1.msra.mxu0 %v1839
    %3352 = vmatprep.subr.mxu0 %v1836
    %3353 = vmatpush1.msra.mxu0 %v1835
    %3354 = vmatprep.subr.mxu0 %v1832
    %3355 = vmatpush1.msra.mxu0 %v1831
    %3356 = vmatprep.subr.mxu0 %v1828
    %3357 = vmatpush1.msra.mxu0 %v1827
    %3358 = vmatprep.subr.mxu0 %v1824
    %3359 = vmatpush1.msra.mxu0 %v1823
    %3360 = vmatprep.subr.mxu0 %v1820
    %3361 = vmatpush1.msra.mxu0 %v1819
    %3362 = vmatprep.subr.mxu0 %v1816
    %3363 = vmatpush1.msra.mxu0 %v1815
    %3364 = vmatprep.subr.mxu0 %v1812
    %3365 = vmatpush1.msra.mxu0 %v1811
    %3366 = vmatprep.subr.mxu0 %v1808
    %3367 = vmatpush1.msra.mxu0 %v1807
    %3368 = vmatprep.subr.mxu0 %v1804
    %3369 = vmatpush1.msra.mxu0 %v1803
    %3370 = vmatprep.subr.mxu0 %v1800
    %3371 = vmatpush1.msra.mxu0 %v1799
    %3372 = vmatprep.subr.mxu0 0.0
    %3373 = vmatpush2.msra.mxu0 0.0
    %3374 = vmatprep.subr.mxu0 0.0
    %3375 = vmatpush2.msra.mxu0 0.0
    %3376 = vmatprep.subr.mxu0 0.0
    %3377 = vmatpush2.msra.mxu0 0.0
    %3378 = vmatprep.subr.mxu0 0.0
    %3379 = vmatpush2.msra.mxu0 0.0
    %3380 = vmatprep.subr.mxu0 0.0
    %3381 = vmatpush2.msra.mxu0 0.0
    %3382 = vmatprep.subr.mxu0 0.0
    %3383 = vmatpush2.msra.mxu0 0.0
    %3384 = vmatprep.subr.mxu0 0.0
    %3385 = vmatpush2.msra.mxu0 0.0
    %3386 = vmatprep.subr.mxu0 0.0
    %3387 = vmatpush2.msra.mxu0 0.0
    %3388 = vmatprep.subr.mxu0 0.0
    %3389 = vmatpush2.msra.mxu0 0.0
    %3390 = vmatprep.subr.mxu0 0.0
    %3391 = vmatpush2.msra.mxu0 0.0
    %3392 = vmatprep.subr.mxu0 0.0
    %3393 = vmatpush2.msra.mxu0 0.0
    %3394 = vmatprep.subr.mxu0 0.0
    %3395 = vmatpush2.msra.mxu0 0.0
    %3396 = vmatprep.subr.mxu0 0.0
    %3397 = vmatpush2.msra.mxu0 0.0
    %3398 = vmatprep.subr.mxu0 0.0
    %3399 = vmatpush2.msra.mxu0 0.0
    %3400 = vmatprep.subr.mxu0 0.0
    %3401 = vmatpush2.msra.mxu0 0.0
    %3402 = vmatprep.subr.mxu0 0.0
    %3403 = vmatpush2.msra.mxu0 0.0
    %3404 = vmatprep.mubr.f32.mxu0 0.0
    %3405 = vmatmul.mubr.f32.gmra.mxu0 %v3259
    %v3406 = vpop.f32.mrf.mxu0
    %v3407 = vadd.f32 %v3267, %v3406
    %v3408 = vpop.f32.mrf.mxu0
    %v3409 = vadd.f32 %v3268, %v3408
    %3410 = vdwg.mxu0
    %v3411 = vxor.u32 %v3336, 2147483648
    %v3412 = vmul.f32 %v3411, 1.442695
    %v3413 = vpow.pop %v3412
    %v3414 = vadd.f32 %v3413, 1.0
    %v3415 = vrcp.pop %v3414
    %v3416 = vmul.f32 1.0, %v3415
    %v3417 = vxor.u32 %v3338, 2147483648
    %v3418 = vmul.f32 %v3417, 1.442695
    %v3419 = vpow.pop %v3418
    %v3420 = vadd.f32 %v3419, 1.0
    %v3421 = vrcp.pop %v3420
    %v3422 = vmul.f32 1.0, %v3421
    %v3423 = vtanh.pop %v3407
    %v3424 = vxor.u32 %v3409, 2147483648
    %v3425 = vmul.f32 %v3424, 1.442695
    %v3426 = vpow.pop %v3425
    %v3427 = vadd.f32 %v3426, 1.0
    %v3428 = vrcp.pop %v3427
    %v3429 = vmul.f32 1.0, %v3428
    %v3430 = vmul.f32 %v3422, %v3257
    %v3431 = vmul.f32 %v3416, %v3423
    %v3432 = vadd.f32 %v3430, %v3431
    %v3433 = vtanh.pop %v3432
    %v3434 = vmul.f32 %v3429, %v3433
    %vm3435 = vcmp.eq.s32.totalorder %v1861, 8
    %v3436 = vsel %vm3435, %v3434, %v3261
    %s3437 = smul.u32 9, 4
    %s3438 = smul.addr %s3437, 8
    %s3439 = scalar_lea.vmem [#allocation2], %s3438
    %v3440 = vld [vmem:[%s3439] sm:$0xff]
    %v3441 = vld [vmem:[%s3439 + $0x8] sm:$0xff]
    %v3442 = vld [vmem:[%s3439 + $0x10] sm:$0xff]
    %v3443 = vld [vmem:[%s3439 + $0x18] sm:$0xff]
    %3444 = vmatprep.subr.mxu0 %v1858
    %3445 = vmatpush1.msra.mxu0 %v1857
    %3446 = vmatprep.subr.mxu0 %v1854
    %3447 = vmatpush1.msra.mxu0 %v1853
    %3448 = vmatprep.subr.mxu0 %v1850
    %3449 = vmatpush1.msra.mxu0 %v1849
    %3450 = vmatprep.subr.mxu0 %v1846
    %3451 = vmatpush1.msra.mxu0 %v1845
    %3452 = vmatprep.subr.mxu0 %v1842
    %3453 = vmatpush1.msra.mxu0 %v1841
    %3454 = vmatprep.subr.mxu0 %v1838
    %3455 = vmatpush1.msra.mxu0 %v1837
    %3456 = vmatprep.subr.mxu0 %v1834
    %3457 = vmatpush1.msra.mxu0 %v1833
    %3458 = vmatprep.subr.mxu0 %v1830
    %3459 = vmatpush1.msra.mxu0 %v1829
    %3460 = vmatprep.subr.mxu0 %v1826
    %3461 = vmatpush1.msra.mxu0 %v1825
    %3462 = vmatprep.subr.mxu0 %v1822
    %3463 = vmatpush1.msra.mxu0 %v1821
    %3464 = vmatprep.subr.mxu0 %v1818
    %3465 = vmatpush1.msra.mxu0 %v1817
    %3466 = vmatprep.subr.mxu0 %v1814
    %3467 = vmatpush1.msra.mxu0 %v1813
    %3468 = vmatprep.subr.mxu0 %v1810
    %3469 = vmatpush1.msra.mxu0 %v1809
    %3470 = vmatprep.subr.mxu0 %v1806
    %3471 = vmatpush1.msra.mxu0 %v1805
    %3472 = vmatprep.subr.mxu0 %v1802
    %3473 = vmatpush1.msra.mxu0 %v1801
    %3474 = vmatprep.subr.mxu0 %v1798
    %3475 = vmatpush1.msra.mxu0 %v1797
    %3476 = vmatprep.subr.mxu0 0.0
    %3477 = vmatpush2.msra.mxu0 0.0
    %3478 = vmatprep.subr.mxu0 0.0
    %3479 = vmatpush2.msra.mxu0 0.0
    %3480 = vmatprep.subr.mxu0 0.0
    %3481 = vmatpush2.msra.mxu0 0.0
    %3482 = vmatprep.subr.mxu0 0.0
    %3483 = vmatpush2.msra.mxu0 0.0
    %3484 = vmatprep.subr.mxu0 0.0
    %3485 = vmatpush2.msra.mxu0 0.0
    %3486 = vmatprep.subr.mxu0 0.0
    %3487 = vmatpush2.msra.mxu0 0.0
    %3488 = vmatprep.subr.mxu0 0.0
    %3489 = vmatpush2.msra.mxu0 0.0
    %3490 = vmatprep.subr.mxu0 0.0
    %3491 = vmatpush2.msra.mxu0 0.0
    %3492 = vmatprep.subr.mxu0 0.0
    %3493 = vmatpush2.msra.mxu0 0.0
    %3494 = vmatprep.subr.mxu0 0.0
    %3495 = vmatpush2.msra.mxu0 0.0
    %3496 = vmatprep.subr.mxu0 0.0
    %3497 = vmatpush2.msra.mxu0 0.0
    %3498 = vmatprep.subr.mxu0 0.0
    %3499 = vmatpush2.msra.mxu0 0.0
    %3500 = vmatprep.subr.mxu0 0.0
    %3501 = vmatpush2.msra.mxu0 0.0
    %3502 = vmatprep.subr.mxu0 0.0
    %3503 = vmatpush2.msra.mxu0 0.0
    %3504 = vmatprep.subr.mxu0 0.0
    %3505 = vmatpush2.msra.mxu0 0.0
    %3506 = vmatprep.subr.mxu0 0.0
    %3507 = vmatpush2.msra.mxu0 0.0
    %3508 = vmatprep.mubr.f32.mxu0 0.0
    %3509 = vmatmul.mubr.f32.gmra.mxu0 %v3434
    %v3510 = vpop.f32.mrf.mxu0
    %v3511 = vadd.f32 %v3440, %v3510
    %v3512 = vpop.f32.mrf.mxu0
    %v3513 = vadd.f32 %v3441, %v3512
    %3514 = vdwg.mxu0
    %3515 = vmatprep.subr.mxu0 %v1860
    %3516 = vmatpush1.msra.mxu0 %v1859
    %3517 = vmatprep.subr.mxu0 %v1856
    %3518 = vmatpush1.msra.mxu0 %v1855
    %3519 = vmatprep.subr.mxu0 %v1852
    %3520 = vmatpush1.msra.mxu0 %v1851
    %3521 = vmatprep.subr.mxu0 %v1848
    %3522 = vmatpush1.msra.mxu0 %v1847
    %3523 = vmatprep.subr.mxu0 %v1844
    %3524 = vmatpush1.msra.mxu0 %v1843
    %3525 = vmatprep.subr.mxu0 %v1840
    %3526 = vmatpush1.msra.mxu0 %v1839
    %3527 = vmatprep.subr.mxu0 %v1836
    %3528 = vmatpush1.msra.mxu0 %v1835
    %3529 = vmatprep.subr.mxu0 %v1832
    %3530 = vmatpush1.msra.mxu0 %v1831
    %3531 = vmatprep.subr.mxu0 %v1828
    %3532 = vmatpush1.msra.mxu0 %v1827
    %3533 = vmatprep.subr.mxu0 %v1824
    %3534 = vmatpush1.msra.mxu0 %v1823
    %3535 = vmatprep.subr.mxu0 %v1820
    %3536 = vmatpush1.msra.mxu0 %v1819
    %3537 = vmatprep.subr.mxu0 %v1816
    %3538 = vmatpush1.msra.mxu0 %v1815
    %3539 = vmatprep.subr.mxu0 %v1812
    %3540 = vmatpush1.msra.mxu0 %v1811
    %3541 = vmatprep.subr.mxu0 %v1808
    %3542 = vmatpush1.msra.mxu0 %v1807
    %3543 = vmatprep.subr.mxu0 %v1804
    %3544 = vmatpush1.msra.mxu0 %v1803
    %3545 = vmatprep.subr.mxu0 %v1800
    %3546 = vmatpush1.msra.mxu0 %v1799
    %3547 = vmatprep.subr.mxu0 0.0
    %3548 = vmatpush2.msra.mxu0 0.0
    %3549 = vmatprep.subr.mxu0 0.0
    %3550 = vmatpush2.msra.mxu0 0.0
    %3551 = vmatprep.subr.mxu0 0.0
    %3552 = vmatpush2.msra.mxu0 0.0
    %3553 = vmatprep.subr.mxu0 0.0
    %3554 = vmatpush2.msra.mxu0 0.0
    %3555 = vmatprep.subr.mxu0 0.0
    %3556 = vmatpush2.msra.mxu0 0.0
    %3557 = vmatprep.subr.mxu0 0.0
    %3558 = vmatpush2.msra.mxu0 0.0
    %3559 = vmatprep.subr.mxu0 0.0
    %3560 = vmatpush2.msra.mxu0 0.0
    %3561 = vmatprep.subr.mxu0 0.0
    %3562 = vmatpush2.msra.mxu0 0.0
    %3563 = vmatprep.subr.mxu0 0.0
    %3564 = vmatpush2.msra.mxu0 0.0
    %3565 = vmatprep.subr.mxu0 0.0
    %3566 = vmatpush2.msra.mxu0 0.0
    %3567 = vmatprep.subr.mxu0 0.0
    %3568 = vmatpush2.msra.mxu0 0.0
    %3569 = vmatprep.subr.mxu0 0.0
    %3570 = vmatpush2.msra.mxu0 0.0
    %3571 = vmatprep.subr.mxu0 0.0
    %3572 = vmatpush2.msra.mxu0 0.0
    %3573 = vmatprep.subr.mxu0 0.0
    %3574 = vmatpush2.msra.mxu0 0.0
    %3575 = vmatprep.subr.mxu0 0.0
    %3576 = vmatpush2.msra.mxu0 0.0
    %3577 = vmatprep.subr.mxu0 0.0
    %3578 = vmatpush2.msra.mxu0 0.0
    %3579 = vmatprep.mubr.f32.mxu0 0.0
    %3580 = vmatmul.mubr.f32.gmra.mxu0 %v3434
    %v3581 = vpop.f32.mrf.mxu0
    %v3582 = vadd.f32 %v3442, %v3581
    %v3583 = vpop.f32.mrf.mxu0
    %v3584 = vadd.f32 %v3443, %v3583
    %3585 = vdwg.mxu0
    %v3586 = vxor.u32 %v3511, 2147483648
    %v3587 = vmul.f32 %v3586, 1.442695
    %v3588 = vpow.pop %v3587
    %v3589 = vadd.f32 %v3588, 1.0
    %v3590 = vrcp.pop %v3589
    %v3591 = vmul.f32 1.0, %v3590
    %v3592 = vxor.u32 %v3513, 2147483648
    %v3593 = vmul.f32 %v3592, 1.442695
    %v3594 = vpow.pop %v3593
    %v3595 = vadd.f32 %v3594, 1.0
    %v3596 = vrcp.pop %v3595
    %v3597 = vmul.f32 1.0, %v3596
    %v3598 = vtanh.pop %v3582
    %v3599 = vxor.u32 %v3584, 2147483648
    %v3600 = vmul.f32 %v3599, 1.442695
    %v3601 = vpow.pop %v3600
    %v3602 = vadd.f32 %v3601, 1.0
    %v3603 = vrcp.pop %v3602
    %v3604 = vmul.f32 1.0, %v3603
    %v3605 = vmul.f32 %v3597, %v3432
    %v3606 = vmul.f32 %v3591, %v3598
    %v3607 = vadd.f32 %v3605, %v3606
    %v3608 = vtanh.pop %v3607
    %v3609 = vmul.f32 %v3604, %v3608
    %vm3610 = vcmp.eq.s32.totalorder %v1861, 9
    %v3611 = vsel %vm3610, %v3609, %v3436
    %s3612 = smul.u32 10, 4
    %s3613 = smul.addr %s3612, 8
    %s3614 = scalar_lea.vmem [#allocation2], %s3613
    %v3615 = vld [vmem:[%s3614] sm:$0xff]
    %v3616 = vld [vmem:[%s3614 + $0x8] sm:$0xff]
    %v3617 = vld [vmem:[%s3614 + $0x10] sm:$0xff]
    %v3618 = vld [vmem:[%s3614 + $0x18] sm:$0xff]
    %3619 = vmatprep.subr.mxu0 %v1858
    %3620 = vmatpush1.msra.mxu0 %v1857
    %3621 = vmatprep.subr.mxu0 %v1854
    %3622 = vmatpush1.msra.mxu0 %v1853
    %3623 = vmatprep.subr.mxu0 %v1850
    %3624 = vmatpush1.msra.mxu0 %v1849
    %3625 = vmatprep.subr.mxu0 %v1846
    %3626 = vmatpush1.msra.mxu0 %v1845
    %3627 = vmatprep.subr.mxu0 %v1842
    %3628 = vmatpush1.msra.mxu0 %v1841
    %3629 = vmatprep.subr.mxu0 %v1838
    %3630 = vmatpush1.msra.mxu0 %v1837
    %3631 = vmatprep.subr.mxu0 %v1834
    %3632 = vmatpush1.msra.mxu0 %v1833
    %3633 = vmatprep.subr.mxu0 %v1830
    %3634 = vmatpush1.msra.mxu0 %v1829
    %3635 = vmatprep.subr.mxu0 %v1826
    %3636 = vmatpush1.msra.mxu0 %v1825
    %3637 = vmatprep.subr.mxu0 %v1822
    %3638 = vmatpush1.msra.mxu0 %v1821
    %3639 = vmatprep.subr.mxu0 %v1818
    %3640 = vmatpush1.msra.mxu0 %v1817
    %3641 = vmatprep.subr.mxu0 %v1814
    %3642 = vmatpush1.msra.mxu0 %v1813
    %3643 = vmatprep.subr.mxu0 %v1810
    %3644 = vmatpush1.msra.mxu0 %v1809
    %3645 = vmatprep.subr.mxu0 %v1806
    %3646 = vmatpush1.msra.mxu0 %v1805
    %3647 = vmatprep.subr.mxu0 %v1802
    %3648 = vmatpush1.msra.mxu0 %v1801
    %3649 = vmatprep.subr.mxu0 %v1798
    %3650 = vmatpush1.msra.mxu0 %v1797
    %3651 = vmatprep.subr.mxu0 0.0
    %3652 = vmatpush2.msra.mxu0 0.0
    %3653 = vmatprep.subr.mxu0 0.0
    %3654 = vmatpush2.msra.mxu0 0.0
    %3655 = vmatprep.subr.mxu0 0.0
    %3656 = vmatpush2.msra.mxu0 0.0
    %3657 = vmatprep.subr.mxu0 0.0
    %3658 = vmatpush2.msra.mxu0 0.0
    %3659 = vmatprep.subr.mxu0 0.0
    %3660 = vmatpush2.msra.mxu0 0.0
    %3661 = vmatprep.subr.mxu0 0.0
    %3662 = vmatpush2.msra.mxu0 0.0
    %3663 = vmatprep.subr.mxu0 0.0
    %3664 = vmatpush2.msra.mxu0 0.0
    %3665 = vmatprep.subr.mxu0 0.0
    %3666 = vmatpush2.msra.mxu0 0.0
    %3667 = vmatprep.subr.mxu0 0.0
    %3668 = vmatpush2.msra.mxu0 0.0
    %3669 = vmatprep.subr.mxu0 0.0
    %3670 = vmatpush2.msra.mxu0 0.0
    %3671 = vmatprep.subr.mxu0 0.0
    %3672 = vmatpush2.msra.mxu0 0.0
    %3673 = vmatprep.subr.mxu0 0.0
    %3674 = vmatpush2.msra.mxu0 0.0
    %3675 = vmatprep.subr.mxu0 0.0
    %3676 = vmatpush2.msra.mxu0 0.0
    %3677 = vmatprep.subr.mxu0 0.0
    %3678 = vmatpush2.msra.mxu0 0.0
    %3679 = vmatprep.subr.mxu0 0.0
    %3680 = vmatpush2.msra.mxu0 0.0
    %3681 = vmatprep.subr.mxu0 0.0
    %3682 = vmatpush2.msra.mxu0 0.0
    %3683 = vmatprep.mubr.f32.mxu0 0.0
    %3684 = vmatmul.mubr.f32.gmra.mxu0 %v3609
    %v3685 = vpop.f32.mrf.mxu0
    %v3686 = vadd.f32 %v3615, %v3685
    %v3687 = vpop.f32.mrf.mxu0
    %v3688 = vadd.f32 %v3616, %v3687
    %3689 = vdwg.mxu0
    %3690 = vmatprep.subr.mxu0 %v1860
    %3691 = vmatpush1.msra.mxu0 %v1859
    %3692 = vmatprep.subr.mxu0 %v1856
    %3693 = vmatpush1.msra.mxu0 %v1855
    %3694 = vmatprep.subr.mxu0 %v1852
    %3695 = vmatpush1.msra.mxu0 %v1851
    %3696 = vmatprep.subr.mxu0 %v1848
    %3697 = vmatpush1.msra.mxu0 %v1847
    %3698 = vmatprep.subr.mxu0 %v1844
    %3699 = vmatpush1.msra.mxu0 %v1843
    %3700 = vmatprep.subr.mxu0 %v1840
    %3701 = vmatpush1.msra.mxu0 %v1839
    %3702 = vmatprep.subr.mxu0 %v1836
    %3703 = vmatpush1.msra.mxu0 %v1835
    %3704 = vmatprep.subr.mxu0 %v1832
    %3705 = vmatpush1.msra.mxu0 %v1831
    %3706 = vmatprep.subr.mxu0 %v1828
    %3707 = vmatpush1.msra.mxu0 %v1827
    %3708 = vmatprep.subr.mxu0 %v1824
    %3709 = vmatpush1.msra.mxu0 %v1823
    %3710 = vmatprep.subr.mxu0 %v1820
    %3711 = vmatpush1.msra.mxu0 %v1819
    %3712 = vmatprep.subr.mxu0 %v1816
    %3713 = vmatpush1.msra.mxu0 %v1815
    %3714 = vmatprep.subr.mxu0 %v1812
    %3715 = vmatpush1.msra.mxu0 %v1811
    %3716 = vmatprep.subr.mxu0 %v1808
    %3717 = vmatpush1.msra.mxu0 %v1807
    %3718 = vmatprep.subr.mxu0 %v1804
    %3719 = vmatpush1.msra.mxu0 %v1803
    %3720 = vmatprep.subr.mxu0 %v1800
    %3721 = vmatpush1.msra.mxu0 %v1799
    %3722 = vmatprep.subr.mxu0 0.0
    %3723 = vmatpush2.msra.mxu0 0.0
    %3724 = vmatprep.subr.mxu0 0.0
    %3725 = vmatpush2.msra.mxu0 0.0
    %3726 = vmatprep.subr.mxu0 0.0
    %3727 = vmatpush2.msra.mxu0 0.0
    %3728 = vmatprep.subr.mxu0 0.0
    %3729 = vmatpush2.msra.mxu0 0.0
    %3730 = vmatprep.subr.mxu0 0.0
    %3731 = vmatpush2.msra.mxu0 0.0
    %3732 = vmatprep.subr.mxu0 0.0
    %3733 = vmatpush2.msra.mxu0 0.0
    %3734 = vmatprep.subr.mxu0 0.0
    %3735 = vmatpush2.msra.mxu0 0.0
    %3736 = vmatprep.subr.mxu0 0.0
    %3737 = vmatpush2.msra.mxu0 0.0
    %3738 = vmatprep.subr.mxu0 0.0
    %3739 = vmatpush2.msra.mxu0 0.0
    %3740 = vmatprep.subr.mxu0 0.0
    %3741 = vmatpush2.msra.mxu0 0.0
    %3742 = vmatprep.subr.mxu0 0.0
    %3743 = vmatpush2.msra.mxu0 0.0
    %3744 = vmatprep.subr.mxu0 0.0
    %3745 = vmatpush2.msra.mxu0 0.0
    %3746 = vmatprep.subr.mxu0 0.0
    %3747 = vmatpush2.msra.mxu0 0.0
    %3748 = vmatprep.subr.mxu0 0.0
    %3749 = vmatpush2.msra.mxu0 0.0
    %3750 = vmatprep.subr.mxu0 0.0
    %3751 = vmatpush2.msra.mxu0 0.0
    %3752 = vmatprep.subr.mxu0 0.0
    %3753 = vmatpush2.msra.mxu0 0.0
    %3754 = vmatprep.mubr.f32.mxu0 0.0
    %3755 = vmatmul.mubr.f32.gmra.mxu0 %v3609
    %v3756 = vpop.f32.mrf.mxu0
    %v3757 = vadd.f32 %v3617, %v3756
    %v3758 = vpop.f32.mrf.mxu0
    %v3759 = vadd.f32 %v3618, %v3758
    %3760 = vdwg.mxu0
    %v3761 = vxor.u32 %v3686, 2147483648
    %v3762 = vmul.f32 %v3761, 1.442695
    %v3763 = vpow.pop %v3762
    %v3764 = vadd.f32 %v3763, 1.0
    %v3765 = vrcp.pop %v3764
    %v3766 = vmul.f32 1.0, %v3765
    %v3767 = vxor.u32 %v3688, 2147483648
    %v3768 = vmul.f32 %v3767, 1.442695
    %v3769 = vpow.pop %v3768
    %v3770 = vadd.f32 %v3769, 1.0
    %v3771 = vrcp.pop %v3770
    %v3772 = vmul.f32 1.0, %v3771
    %v3773 = vtanh.pop %v3757
    %v3774 = vxor.u32 %v3759, 2147483648
    %v3775 = vmul.f32 %v3774, 1.442695
    %v3776 = vpow.pop %v3775
    %v3777 = vadd.f32 %v3776, 1.0
    %v3778 = vrcp.pop %v3777
    %v3779 = vmul.f32 1.0, %v3778
    %v3780 = vmul.f32 %v3772, %v3607
    %v3781 = vmul.f32 %v3766, %v3773
    %v3782 = vadd.f32 %v3780, %v3781
    %v3783 = vtanh.pop %v3782
    %v3784 = vmul.f32 %v3779, %v3783
    %vm3785 = vcmp.eq.s32.totalorder %v1861, 10
    %v3786 = vsel %vm3785, %v3784, %v3611
    %s3787 = smul.u32 11, 4
    %s3788 = smul.addr %s3787, 8
    %s3789 = scalar_lea.vmem [#allocation2], %s3788
    %v3790 = vld [vmem:[%s3789] sm:$0xff]
    %v3791 = vld [vmem:[%s3789 + $0x8] sm:$0xff]
    %v3792 = vld [vmem:[%s3789 + $0x10] sm:$0xff]
    %v3793 = vld [vmem:[%s3789 + $0x18] sm:$0xff]
    %3794 = vmatprep.subr.mxu0 %v1858
    %3795 = vmatpush1.msra.mxu0 %v1857
    %3796 = vmatprep.subr.mxu0 %v1854
    %3797 = vmatpush1.msra.mxu0 %v1853
    %3798 = vmatprep.subr.mxu0 %v1850
    %3799 = vmatpush1.msra.mxu0 %v1849
    %3800 = vmatprep.subr.mxu0 %v1846
    %3801 = vmatpush1.msra.mxu0 %v1845
    %3802 = vmatprep.subr.mxu0 %v1842
    %3803 = vmatpush1.msra.mxu0 %v1841
    %3804 = vmatprep.subr.mxu0 %v1838
    %3805 = vmatpush1.msra.mxu0 %v1837
    %3806 = vmatprep.subr.mxu0 %v1834
    %3807 = vmatpush1.msra.mxu0 %v1833
    %3808 = vmatprep.subr.mxu0 %v1830
    %3809 = vmatpush1.msra.mxu0 %v1829
    %3810 = vmatprep.subr.mxu0 %v1826
    %3811 = vmatpush1.msra.mxu0 %v1825
    %3812 = vmatprep.subr.mxu0 %v1822
    %3813 = vmatpush1.msra.mxu0 %v1821
    %3814 = vmatprep.subr.mxu0 %v1818
    %3815 = vmatpush1.msra.mxu0 %v1817
    %3816 = vmatprep.subr.mxu0 %v1814
    %3817 = vmatpush1.msra.mxu0 %v1813
    %3818 = vmatprep.subr.mxu0 %v1810
    %3819 = vmatpush1.msra.mxu0 %v1809
    %3820 = vmatprep.subr.mxu0 %v1806
    %3821 = vmatpush1.msra.mxu0 %v1805
    %3822 = vmatprep.subr.mxu0 %v1802
    %3823 = vmatpush1.msra.mxu0 %v1801
    %3824 = vmatprep.subr.mxu0 %v1798
    %3825 = vmatpush1.msra.mxu0 %v1797
    %3826 = vmatprep.subr.mxu0 0.0
    %3827 = vmatpush2.msra.mxu0 0.0
    %3828 = vmatprep.subr.mxu0 0.0
    %3829 = vmatpush2.msra.mxu0 0.0
    %3830 = vmatprep.subr.mxu0 0.0
    %3831 = vmatpush2.msra.mxu0 0.0
    %3832 = vmatprep.subr.mxu0 0.0
    %3833 = vmatpush2.msra.mxu0 0.0
    %3834 = vmatprep.subr.mxu0 0.0
    %3835 = vmatpush2.msra.mxu0 0.0
    %3836 = vmatprep.subr.mxu0 0.0
    %3837 = vmatpush2.msra.mxu0 0.0
    %3838 = vmatprep.subr.mxu0 0.0
    %3839 = vmatpush2.msra.mxu0 0.0
    %3840 = vmatprep.subr.mxu0 0.0
    %3841 = vmatpush2.msra.mxu0 0.0
    %3842 = vmatprep.subr.mxu0 0.0
    %3843 = vmatpush2.msra.mxu0 0.0
    %3844 = vmatprep.subr.mxu0 0.0
    %3845 = vmatpush2.msra.mxu0 0.0
    %3846 = vmatprep.subr.mxu0 0.0
    %3847 = vmatpush2.msra.mxu0 0.0
    %3848 = vmatprep.subr.mxu0 0.0
    %3849 = vmatpush2.msra.mxu0 0.0
    %3850 = vmatprep.subr.mxu0 0.0
    %3851 = vmatpush2.msra.mxu0 0.0
    %3852 = vmatprep.subr.mxu0 0.0
    %3853 = vmatpush2.msra.mxu0 0.0
    %3854 = vmatprep.subr.mxu0 0.0
    %3855 = vmatpush2.msra.mxu0 0.0
    %3856 = vmatprep.subr.mxu0 0.0
    %3857 = vmatpush2.msra.mxu0 0.0
    %3858 = vmatprep.mubr.f32.mxu0 0.0
    %3859 = vmatmul.mubr.f32.gmra.mxu0 %v3784
    %v3860 = vpop.f32.mrf.mxu0
    %v3861 = vadd.f32 %v3790, %v3860
    %v3862 = vpop.f32.mrf.mxu0
    %v3863 = vadd.f32 %v3791, %v3862
    %3864 = vdwg.mxu0
    %3865 = vmatprep.subr.mxu0 %v1860
    %3866 = vmatpush1.msra.mxu0 %v1859
    %3867 = vmatprep.subr.mxu0 %v1856
    %3868 = vmatpush1.msra.mxu0 %v1855
    %3869 = vmatprep.subr.mxu0 %v1852
    %3870 = vmatpush1.msra.mxu0 %v1851
    %3871 = vmatprep.subr.mxu0 %v1848
    %3872 = vmatpush1.msra.mxu0 %v1847
    %3873 = vmatprep.subr.mxu0 %v1844
    %3874 = vmatpush1.msra.mxu0 %v1843
    %3875 = vmatprep.subr.mxu0 %v1840
    %3876 = vmatpush1.msra.mxu0 %v1839
    %3877 = vmatprep.subr.mxu0 %v1836
    %3878 = vmatpush1.msra.mxu0 %v1835
    %3879 = vmatprep.subr.mxu0 %v1832
    %3880 = vmatpush1.msra.mxu0 %v1831
    %3881 = vmatprep.subr.mxu0 %v1828
    %3882 = vmatpush1.msra.mxu0 %v1827
    %3883 = vmatprep.subr.mxu0 %v1824
    %3884 = vmatpush1.msra.mxu0 %v1823
    %3885 = vmatprep.subr.mxu0 %v1820
    %3886 = vmatpush1.msra.mxu0 %v1819
    %3887 = vmatprep.subr.mxu0 %v1816
    %3888 = vmatpush1.msra.mxu0 %v1815
    %3889 = vmatprep.subr.mxu0 %v1812
    %3890 = vmatpush1.msra.mxu0 %v1811
    %3891 = vmatprep.subr.mxu0 %v1808
    %3892 = vmatpush1.msra.mxu0 %v1807
    %3893 = vmatprep.subr.mxu0 %v1804
    %3894 = vmatpush1.msra.mxu0 %v1803
    %3895 = vmatprep.subr.mxu0 %v1800
    %3896 = vmatpush1.msra.mxu0 %v1799
    %3897 = vmatprep.subr.mxu0 0.0
    %3898 = vmatpush2.msra.mxu0 0.0
    %3899 = vmatprep.subr.mxu0 0.0
    %3900 = vmatpush2.msra.mxu0 0.0
    %3901 = vmatprep.subr.mxu0 0.0
    %3902 = vmatpush2.msra.mxu0 0.0
    %3903 = vmatprep.subr.mxu0 0.0
    %3904 = vmatpush2.msra.mxu0 0.0
    %3905 = vmatprep.subr.mxu0 0.0
    %3906 = vmatpush2.msra.mxu0 0.0
    %3907 = vmatprep.subr.mxu0 0.0
    %3908 = vmatpush2.msra.mxu0 0.0
    %3909 = vmatprep.subr.mxu0 0.0
    %3910 = vmatpush2.msra.mxu0 0.0
    %3911 = vmatprep.subr.mxu0 0.0
    %3912 = vmatpush2.msra.mxu0 0.0
    %3913 = vmatprep.subr.mxu0 0.0
    %3914 = vmatpush2.msra.mxu0 0.0
    %3915 = vmatprep.subr.mxu0 0.0
    %3916 = vmatpush2.msra.mxu0 0.0
    %3917 = vmatprep.subr.mxu0 0.0
    %3918 = vmatpush2.msra.mxu0 0.0
    %3919 = vmatprep.subr.mxu0 0.0
    %3920 = vmatpush2.msra.mxu0 0.0
    %3921 = vmatprep.subr.mxu0 0.0
    %3922 = vmatpush2.msra.mxu0 0.0
    %3923 = vmatprep.subr.mxu0 0.0
    %3924 = vmatpush2.msra.mxu0 0.0
    %3925 = vmatprep.subr.mxu0 0.0
    %3926 = vmatpush2.msra.mxu0 0.0
    %3927 = vmatprep.subr.mxu0 0.0
    %3928 = vmatpush2.msra.mxu0 0.0
    %3929 = vmatprep.mubr.f32.mxu0 0.0
    %3930 = vmatmul.mubr.f32.gmra.mxu0 %v3784
    %v3931 = vpop.f32.mrf.mxu0
    %v3932 = vadd.f32 %v3792, %v3931
    %v3933 = vpop.f32.mrf.mxu0
    %v3934 = vadd.f32 %v3793, %v3933
    %3935 = vdwg.mxu0
    %v3936 = vxor.u32 %v3861, 2147483648
    %v3937 = vmul.f32 %v3936, 1.442695
    %v3938 = vpow.pop %v3937
    %v3939 = vadd.f32 %v3938, 1.0
    %v3940 = vrcp.pop %v3939
    %v3941 = vmul.f32 1.0, %v3940
    %v3942 = vxor.u32 %v3863, 2147483648
    %v3943 = vmul.f32 %v3942, 1.442695
    %v3944 = vpow.pop %v3943
    %v3945 = vadd.f32 %v3944, 1.0
    %v3946 = vrcp.pop %v3945
    %v3947 = vmul.f32 1.0, %v3946
    %v3948 = vtanh.pop %v3932
    %v3949 = vxor.u32 %v3934, 2147483648
    %v3950 = vmul.f32 %v3949, 1.442695
    %v3951 = vpow.pop %v3950
    %v3952 = vadd.f32 %v3951, 1.0
    %v3953 = vrcp.pop %v3952
    %v3954 = vmul.f32 1.0, %v3953
    %v3955 = vmul.f32 %v3947, %v3782
    %v3956 = vmul.f32 %v3941, %v3948
    %v3957 = vadd.f32 %v3955, %v3956
    %v3958 = vtanh.pop %v3957
    %v3959 = vmul.f32 %v3954, %v3958
    %vm3960 = vcmp.eq.s32.totalorder %v1861, 11
    %v3961 = vsel %vm3960, %v3959, %v3786
    %s3962 = smul.u32 12, 4
    %s3963 = smul.addr %s3962, 8
    %s3964 = scalar_lea.vmem [#allocation2], %s3963
    %v3965 = vld [vmem:[%s3964] sm:$0xff]
    %v3966 = vld [vmem:[%s3964 + $0x8] sm:$0xff]
    %v3967 = vld [vmem:[%s3964 + $0x10] sm:$0xff]
    %v3968 = vld [vmem:[%s3964 + $0x18] sm:$0xff]
    %3969 = vmatprep.subr.mxu0 %v1858
    %3970 = vmatpush1.msra.mxu0 %v1857
    %3971 = vmatprep.subr.mxu0 %v1854
    %3972 = vmatpush1.msra.mxu0 %v1853
    %3973 = vmatprep.subr.mxu0 %v1850
    %3974 = vmatpush1.msra.mxu0 %v1849
    %3975 = vmatprep.subr.mxu0 %v1846
    %3976 = vmatpush1.msra.mxu0 %v1845
    %3977 = vmatprep.subr.mxu0 %v1842
    %3978 = vmatpush1.msra.mxu0 %v1841
    %3979 = vmatprep.subr.mxu0 %v1838
    %3980 = vmatpush1.msra.mxu0 %v1837
    %3981 = vmatprep.subr.mxu0 %v1834
    %3982 = vmatpush1.msra.mxu0 %v1833
    %3983 = vmatprep.subr.mxu0 %v1830
    %3984 = vmatpush1.msra.mxu0 %v1829
    %3985 = vmatprep.subr.mxu0 %v1826
    %3986 = vmatpush1.msra.mxu0 %v1825
    %3987 = vmatprep.subr.mxu0 %v1822
    %3988 = vmatpush1.msra.mxu0 %v1821
    %3989 = vmatprep.subr.mxu0 %v1818
    %3990 = vmatpush1.msra.mxu0 %v1817
    %3991 = vmatprep.subr.mxu0 %v1814
    %3992 = vmatpush1.msra.mxu0 %v1813
    %3993 = vmatprep.subr.mxu0 %v1810
    %3994 = vmatpush1.msra.mxu0 %v1809
    %3995 = vmatprep.subr.mxu0 %v1806
    %3996 = vmatpush1.msra.mxu0 %v1805
    %3997 = vmatprep.subr.mxu0 %v1802
    %3998 = vmatpush1.msra.mxu0 %v1801
    %3999 = vmatprep.subr.mxu0 %v1798
    %4000 = vmatpush1.msra.mxu0 %v1797
    %4001 = vmatprep.subr.mxu0 0.0
    %4002 = vmatpush2.msra.mxu0 0.0
    %4003 = vmatprep.subr.mxu0 0.0
    %4004 = vmatpush2.msra.mxu0 0.0
    %4005 = vmatprep.subr.mxu0 0.0
    %4006 = vmatpush2.msra.mxu0 0.0
    %4007 = vmatprep.subr.mxu0 0.0
    %4008 = vmatpush2.msra.mxu0 0.0
    %4009 = vmatprep.subr.mxu0 0.0
    %4010 = vmatpush2.msra.mxu0 0.0
    %4011 = vmatprep.subr.mxu0 0.0
    %4012 = vmatpush2.msra.mxu0 0.0
    %4013 = vmatprep.subr.mxu0 0.0
    %4014 = vmatpush2.msra.mxu0 0.0
    %4015 = vmatprep.subr.mxu0 0.0
    %4016 = vmatpush2.msra.mxu0 0.0
    %4017 = vmatprep.subr.mxu0 0.0
    %4018 = vmatpush2.msra.mxu0 0.0
    %4019 = vmatprep.subr.mxu0 0.0
    %4020 = vmatpush2.msra.mxu0 0.0
    %4021 = vmatprep.subr.mxu0 0.0
    %4022 = vmatpush2.msra.mxu0 0.0
    %4023 = vmatprep.subr.mxu0 0.0
    %4024 = vmatpush2.msra.mxu0 0.0
    %4025 = vmatprep.subr.mxu0 0.0
    %4026 = vmatpush2.msra.mxu0 0.0
    %4027 = vmatprep.subr.mxu0 0.0
    %4028 = vmatpush2.msra.mxu0 0.0
    %4029 = vmatprep.subr.mxu0 0.0
    %4030 = vmatpush2.msra.mxu0 0.0
    %4031 = vmatprep.subr.mxu0 0.0
    %4032 = vmatpush2.msra.mxu0 0.0
    %4033 = vmatprep.mubr.f32.mxu0 0.0
    %4034 = vmatmul.mubr.f32.gmra.mxu0 %v3959
    %v4035 = vpop.f32.mrf.mxu0
    %v4036 = vadd.f32 %v3965, %v4035
    %v4037 = vpop.f32.mrf.mxu0
    %v4038 = vadd.f32 %v3966, %v4037
    %4039 = vdwg.mxu0
    %4040 = vmatprep.subr.mxu0 %v1860
    %4041 = vmatpush1.msra.mxu0 %v1859
    %4042 = vmatprep.subr.mxu0 %v1856
    %4043 = vmatpush1.msra.mxu0 %v1855
    %4044 = vmatprep.subr.mxu0 %v1852
    %4045 = vmatpush1.msra.mxu0 %v1851
    %4046 = vmatprep.subr.mxu0 %v1848
    %4047 = vmatpush1.msra.mxu0 %v1847
    %4048 = vmatprep.subr.mxu0 %v1844
    %4049 = vmatpush1.msra.mxu0 %v1843
    %4050 = vmatprep.subr.mxu0 %v1840
    %4051 = vmatpush1.msra.mxu0 %v1839
    %4052 = vmatprep.subr.mxu0 %v1836
    %4053 = vmatpush1.msra.mxu0 %v1835
    %4054 = vmatprep.subr.mxu0 %v1832
    %4055 = vmatpush1.msra.mxu0 %v1831
    %4056 = vmatprep.subr.mxu0 %v1828
    %4057 = vmatpush1.msra.mxu0 %v1827
    %4058 = vmatprep.subr.mxu0 %v1824
    %4059 = vmatpush1.msra.mxu0 %v1823
    %4060 = vmatprep.subr.mxu0 %v1820
    %4061 = vmatpush1.msra.mxu0 %v1819
    %4062 = vmatprep.subr.mxu0 %v1816
    %4063 = vmatpush1.msra.mxu0 %v1815
    %4064 = vmatprep.subr.mxu0 %v1812
    %4065 = vmatpush1.msra.mxu0 %v1811
    %4066 = vmatprep.subr.mxu0 %v1808
    %4067 = vmatpush1.msra.mxu0 %v1807
    %4068 = vmatprep.subr.mxu0 %v1804
    %4069 = vmatpush1.msra.mxu0 %v1803
    %4070 = vmatprep.subr.mxu0 %v1800
    %4071 = vmatpush1.msra.mxu0 %v1799
    %4072 = vmatprep.subr.mxu0 0.0
    %4073 = vmatpush2.msra.mxu0 0.0
    %4074 = vmatprep.subr.mxu0 0.0
    %4075 = vmatpush2.msra.mxu0 0.0
    %4076 = vmatprep.subr.mxu0 0.0
    %4077 = vmatpush2.msra.mxu0 0.0
    %4078 = vmatprep.subr.mxu0 0.0
    %4079 = vmatpush2.msra.mxu0 0.0
    %4080 = vmatprep.subr.mxu0 0.0
    %4081 = vmatpush2.msra.mxu0 0.0
    %4082 = vmatprep.subr.mxu0 0.0
    %4083 = vmatpush2.msra.mxu0 0.0
    %4084 = vmatprep.subr.mxu0 0.0
    %4085 = vmatpush2.msra.mxu0 0.0
    %4086 = vmatprep.subr.mxu0 0.0
    %4087 = vmatpush2.msra.mxu0 0.0
    %4088 = vmatprep.subr.mxu0 0.0
    %4089 = vmatpush2.msra.mxu0 0.0
    %4090 = vmatprep.subr.mxu0 0.0
    %4091 = vmatpush2.msra.mxu0 0.0
    %4092 = vmatprep.subr.mxu0 0.0
    %4093 = vmatpush2.msra.mxu0 0.0
    %4094 = vmatprep.subr.mxu0 0.0
    %4095 = vmatpush2.msra.mxu0 0.0
    %4096 = vmatprep.subr.mxu0 0.0
    %4097 = vmatpush2.msra.mxu0 0.0
    %4098 = vmatprep.subr.mxu0 0.0
    %4099 = vmatpush2.msra.mxu0 0.0
    %4100 = vmatprep.subr.mxu0 0.0
    %4101 = vmatpush2.msra.mxu0 0.0
    %4102 = vmatprep.subr.mxu0 0.0
    %4103 = vmatpush2.msra.mxu0 0.0
    %4104 = vmatprep.mubr.f32.mxu0 0.0
    %4105 = vmatmul.mubr.f32.gmra.mxu0 %v3959
    %v4106 = vpop.f32.mrf.mxu0
    %v4107 = vadd.f32 %v3967, %v4106
    %v4108 = vpop.f32.mrf.mxu0
    %v4109 = vadd.f32 %v3968, %v4108
    %4110 = vdwg.mxu0
    %v4111 = vxor.u32 %v4036, 2147483648
    %v4112 = vmul.f32 %v4111, 1.442695
    %v4113 = vpow.pop %v4112
    %v4114 = vadd.f32 %v4113, 1.0
    %v4115 = vrcp.pop %v4114
    %v4116 = vmul.f32 1.0, %v4115
    %v4117 = vxor.u32 %v4038, 2147483648
    %v4118 = vmul.f32 %v4117, 1.442695
    %v4119 = vpow.pop %v4118
    %v4120 = vadd.f32 %v4119, 1.0
    %v4121 = vrcp.pop %v4120
    %v4122 = vmul.f32 1.0, %v4121
    %v4123 = vtanh.pop %v4107
    %v4124 = vxor.u32 %v4109, 2147483648
    %v4125 = vmul.f32 %v4124, 1.442695
    %v4126 = vpow.pop %v4125
    %v4127 = vadd.f32 %v4126, 1.0
    %v4128 = vrcp.pop %v4127
    %v4129 = vmul.f32 1.0, %v4128
    %v4130 = vmul.f32 %v4122, %v3957
    %v4131 = vmul.f32 %v4116, %v4123
    %v4132 = vadd.f32 %v4130, %v4131
    %v4133 = vtanh.pop %v4132
    %v4134 = vmul.f32 %v4129, %v4133
    %vm4135 = vcmp.eq.s32.totalorder %v1861, 12
    %v4136 = vsel %vm4135, %v4134, %v3961
    %s4137 = smul.u32 13, 4
    %s4138 = smul.addr %s4137, 8
    %s4139 = scalar_lea.vmem [#allocation2], %s4138
    %v4140 = vld [vmem:[%s4139] sm:$0xff]
    %v4141 = vld [vmem:[%s4139 + $0x8] sm:$0xff]
    %v4142 = vld [vmem:[%s4139 + $0x10] sm:$0xff]
    %v4143 = vld [vmem:[%s4139 + $0x18] sm:$0xff]
    %4144 = vmatprep.subr.mxu0 %v1858
    %4145 = vmatpush1.msra.mxu0 %v1857
    %4146 = vmatprep.subr.mxu0 %v1854
    %4147 = vmatpush1.msra.mxu0 %v1853
    %4148 = vmatprep.subr.mxu0 %v1850
    %4149 = vmatpush1.msra.mxu0 %v1849
    %4150 = vmatprep.subr.mxu0 %v1846
    %4151 = vmatpush1.msra.mxu0 %v1845
    %4152 = vmatprep.subr.mxu0 %v1842
    %4153 = vmatpush1.msra.mxu0 %v1841
    %4154 = vmatprep.subr.mxu0 %v1838
    %4155 = vmatpush1.msra.mxu0 %v1837
    %4156 = vmatprep.subr.mxu0 %v1834
    %4157 = vmatpush1.msra.mxu0 %v1833
    %4158 = vmatprep.subr.mxu0 %v1830
    %4159 = vmatpush1.msra.mxu0 %v1829
    %4160 = vmatprep.subr.mxu0 %v1826
    %4161 = vmatpush1.msra.mxu0 %v1825
    %4162 = vmatprep.subr.mxu0 %v1822
    %4163 = vmatpush1.msra.mxu0 %v1821
    %4164 = vmatprep.subr.mxu0 %v1818
    %4165 = vmatpush1.msra.mxu0 %v1817
    %4166 = vmatprep.subr.mxu0 %v1814
    %4167 = vmatpush1.msra.mxu0 %v1813
    %4168 = vmatprep.subr.mxu0 %v1810
    %4169 = vmatpush1.msra.mxu0 %v1809
    %4170 = vmatprep.subr.mxu0 %v1806
    %4171 = vmatpush1.msra.mxu0 %v1805
    %4172 = vmatprep.subr.mxu0 %v1802
    %4173 = vmatpush1.msra.mxu0 %v1801
    %4174 = vmatprep.subr.mxu0 %v1798
    %4175 = vmatpush1.msra.mxu0 %v1797
    %4176 = vmatprep.subr.mxu0 0.0
    %4177 = vmatpush2.msra.mxu0 0.0
    %4178 = vmatprep.subr.mxu0 0.0
    %4179 = vmatpush2.msra.mxu0 0.0
    %4180 = vmatprep.subr.mxu0 0.0
    %4181 = vmatpush2.msra.mxu0 0.0
    %4182 = vmatprep.subr.mxu0 0.0
    %4183 = vmatpush2.msra.mxu0 0.0
    %4184 = vmatprep.subr.mxu0 0.0
    %4185 = vmatpush2.msra.mxu0 0.0
    %4186 = vmatprep.subr.mxu0 0.0
    %4187 = vmatpush2.msra.mxu0 0.0
    %4188 = vmatprep.subr.mxu0 0.0
    %4189 = vmatpush2.msra.mxu0 0.0
    %4190 = vmatprep.subr.mxu0 0.0
    %4191 = vmatpush2.msra.mxu0 0.0
    %4192 = vmatprep.subr.mxu0 0.0
    %4193 = vmatpush2.msra.mxu0 0.0
    %4194 = vmatprep.subr.mxu0 0.0
    %4195 = vmatpush2.msra.mxu0 0.0
    %4196 = vmatprep.subr.mxu0 0.0
    %4197 = vmatpush2.msra.mxu0 0.0
    %4198 = vmatprep.subr.mxu0 0.0
    %4199 = vmatpush2.msra.mxu0 0.0
    %4200 = vmatprep.subr.mxu0 0.0
    %4201 = vmatpush2.msra.mxu0 0.0
    %4202 = vmatprep.subr.mxu0 0.0
    %4203 = vmatpush2.msra.mxu0 0.0
    %4204 = vmatprep.subr.mxu0 0.0
    %4205 = vmatpush2.msra.mxu0 0.0
    %4206 = vmatprep.subr.mxu0 0.0
    %4207 = vmatpush2.msra.mxu0 0.0
    %4208 = vmatprep.mubr.f32.mxu0 0.0
    %4209 = vmatmul.mubr.f32.gmra.mxu0 %v4134
    %v4210 = vpop.f32.mrf.mxu0
    %v4211 = vadd.f32 %v4140, %v4210
    %v4212 = vpop.f32.mrf.mxu0
    %v4213 = vadd.f32 %v4141, %v4212
    %4214 = vdwg.mxu0
    %4215 = vmatprep.subr.mxu0 %v1860
    %4216 = vmatpush1.msra.mxu0 %v1859
    %4217 = vmatprep.subr.mxu0 %v1856
    %4218 = vmatpush1.msra.mxu0 %v1855
    %4219 = vmatprep.subr.mxu0 %v1852
    %4220 = vmatpush1.msra.mxu0 %v1851
    %4221 = vmatprep.subr.mxu0 %v1848
    %4222 = vmatpush1.msra.mxu0 %v1847
    %4223 = vmatprep.subr.mxu0 %v1844
    %4224 = vmatpush1.msra.mxu0 %v1843
    %4225 = vmatprep.subr.mxu0 %v1840
    %4226 = vmatpush1.msra.mxu0 %v1839
    %4227 = vmatprep.subr.mxu0 %v1836
    %4228 = vmatpush1.msra.mxu0 %v1835
    %4229 = vmatprep.subr.mxu0 %v1832
    %4230 = vmatpush1.msra.mxu0 %v1831
    %4231 = vmatprep.subr.mxu0 %v1828
    %4232 = vmatpush1.msra.mxu0 %v1827
    %4233 = vmatprep.subr.mxu0 %v1824
    %4234 = vmatpush1.msra.mxu0 %v1823
    %4235 = vmatprep.subr.mxu0 %v1820
    %4236 = vmatpush1.msra.mxu0 %v1819
    %4237 = vmatprep.subr.mxu0 %v1816
    %4238 = vmatpush1.msra.mxu0 %v1815
    %4239 = vmatprep.subr.mxu0 %v1812
    %4240 = vmatpush1.msra.mxu0 %v1811
    %4241 = vmatprep.subr.mxu0 %v1808
    %4242 = vmatpush1.msra.mxu0 %v1807
    %4243 = vmatprep.subr.mxu0 %v1804
    %4244 = vmatpush1.msra.mxu0 %v1803
    %4245 = vmatprep.subr.mxu0 %v1800
    %4246 = vmatpush1.msra.mxu0 %v1799
    %4247 = vmatprep.subr.mxu0 0.0
    %4248 = vmatpush2.msra.mxu0 0.0
    %4249 = vmatprep.subr.mxu0 0.0
    %4250 = vmatpush2.msra.mxu0 0.0
    %4251 = vmatprep.subr.mxu0 0.0
    %4252 = vmatpush2.msra.mxu0 0.0
    %4253 = vmatprep.subr.mxu0 0.0
    %4254 = vmatpush2.msra.mxu0 0.0
    %4255 = vmatprep.subr.mxu0 0.0
    %4256 = vmatpush2.msra.mxu0 0.0
    %4257 = vmatprep.subr.mxu0 0.0
    %4258 = vmatpush2.msra.mxu0 0.0
    %4259 = vmatprep.subr.mxu0 0.0
    %4260 = vmatpush2.msra.mxu0 0.0
    %4261 = vmatprep.subr.mxu0 0.0
    %4262 = vmatpush2.msra.mxu0 0.0
    %4263 = vmatprep.subr.mxu0 0.0
    %4264 = vmatpush2.msra.mxu0 0.0
    %4265 = vmatprep.subr.mxu0 0.0
    %4266 = vmatpush2.msra.mxu0 0.0
    %4267 = vmatprep.subr.mxu0 0.0
    %4268 = vmatpush2.msra.mxu0 0.0
    %4269 = vmatprep.subr.mxu0 0.0
    %4270 = vmatpush2.msra.mxu0 0.0
    %4271 = vmatprep.subr.mxu0 0.0
    %4272 = vmatpush2.msra.mxu0 0.0
    %4273 = vmatprep.subr.mxu0 0.0
    %4274 = vmatpush2.msra.mxu0 0.0
    %4275 = vmatprep.subr.mxu0 0.0
    %4276 = vmatpush2.msra.mxu0 0.0
    %4277 = vmatprep.subr.mxu0 0.0
    %4278 = vmatpush2.msra.mxu0 0.0
    %4279 = vmatprep.mubr.f32.mxu0 0.0
    %4280 = vmatmul.mubr.f32.gmra.mxu0 %v4134
    %v4281 = vpop.f32.mrf.mxu0
    %v4282 = vadd.f32 %v4142, %v4281
    %v4283 = vpop.f32.mrf.mxu0
    %v4284 = vadd.f32 %v4143, %v4283
    %4285 = vdwg.mxu0
    %v4286 = vxor.u32 %v4211, 2147483648
    %v4287 = vmul.f32 %v4286, 1.442695
    %v4288 = vpow.pop %v4287
    %v4289 = vadd.f32 %v4288, 1.0
    %v4290 = vrcp.pop %v4289
    %v4291 = vmul.f32 1.0, %v4290
    %v4292 = vxor.u32 %v4213, 2147483648
    %v4293 = vmul.f32 %v4292, 1.442695
    %v4294 = vpow.pop %v4293
    %v4295 = vadd.f32 %v4294, 1.0
    %v4296 = vrcp.pop %v4295
    %v4297 = vmul.f32 1.0, %v4296
    %v4298 = vtanh.pop %v4282
    %v4299 = vxor.u32 %v4284, 2147483648
    %v4300 = vmul.f32 %v4299, 1.442695
    %v4301 = vpow.pop %v4300
    %v4302 = vadd.f32 %v4301, 1.0
    %v4303 = vrcp.pop %v4302
    %v4304 = vmul.f32 1.0, %v4303
    %v4305 = vmul.f32 %v4297, %v4132
    %v4306 = vmul.f32 %v4291, %v4298
    %v4307 = vadd.f32 %v4305, %v4306
    %v4308 = vtanh.pop %v4307
    %v4309 = vmul.f32 %v4304, %v4308
    %vm4310 = vcmp.eq.s32.totalorder %v1861, 13
    %v4311 = vsel %vm4310, %v4309, %v4136
    %s4312 = smul.u32 14, 4
    %s4313 = smul.addr %s4312, 8
    %s4314 = scalar_lea.vmem [#allocation2], %s4313
    %v4315 = vld [vmem:[%s4314] sm:$0xff]
    %v4316 = vld [vmem:[%s4314 + $0x8] sm:$0xff]
    %v4317 = vld [vmem:[%s4314 + $0x10] sm:$0xff]
    %v4318 = vld [vmem:[%s4314 + $0x18] sm:$0xff]
    %4319 = vmatprep.subr.mxu0 %v1858
    %4320 = vmatpush1.msra.mxu0 %v1857
    %4321 = vmatprep.subr.mxu0 %v1854
    %4322 = vmatpush1.msra.mxu0 %v1853
    %4323 = vmatprep.subr.mxu0 %v1850
    %4324 = vmatpush1.msra.mxu0 %v1849
    %4325 = vmatprep.subr.mxu0 %v1846
    %4326 = vmatpush1.msra.mxu0 %v1845
    %4327 = vmatprep.subr.mxu0 %v1842
    %4328 = vmatpush1.msra.mxu0 %v1841
    %4329 = vmatprep.subr.mxu0 %v1838
    %4330 = vmatpush1.msra.mxu0 %v1837
    %4331 = vmatprep.subr.mxu0 %v1834
    %4332 = vmatpush1.msra.mxu0 %v1833
    %4333 = vmatprep.subr.mxu0 %v1830
    %4334 = vmatpush1.msra.mxu0 %v1829
    %4335 = vmatprep.subr.mxu0 %v1826
    %4336 = vmatpush1.msra.mxu0 %v1825
    %4337 = vmatprep.subr.mxu0 %v1822
    %4338 = vmatpush1.msra.mxu0 %v1821
    %4339 = vmatprep.subr.mxu0 %v1818
    %4340 = vmatpush1.msra.mxu0 %v1817
    %4341 = vmatprep.subr.mxu0 %v1814
    %4342 = vmatpush1.msra.mxu0 %v1813
    %4343 = vmatprep.subr.mxu0 %v1810
    %4344 = vmatpush1.msra.mxu0 %v1809
    %4345 = vmatprep.subr.mxu0 %v1806
    %4346 = vmatpush1.msra.mxu0 %v1805
    %4347 = vmatprep.subr.mxu0 %v1802
    %4348 = vmatpush1.msra.mxu0 %v1801
    %4349 = vmatprep.subr.mxu0 %v1798
    %4350 = vmatpush1.msra.mxu0 %v1797
    %4351 = vmatprep.subr.mxu0 0.0
    %4352 = vmatpush2.msra.mxu0 0.0
    %4353 = vmatprep.subr.mxu0 0.0
    %4354 = vmatpush2.msra.mxu0 0.0
    %4355 = vmatprep.subr.mxu0 0.0
    %4356 = vmatpush2.msra.mxu0 0.0
    %4357 = vmatprep.subr.mxu0 0.0
    %4358 = vmatpush2.msra.mxu0 0.0
    %4359 = vmatprep.subr.mxu0 0.0
    %4360 = vmatpush2.msra.mxu0 0.0
    %4361 = vmatprep.subr.mxu0 0.0
    %4362 = vmatpush2.msra.mxu0 0.0
    %4363 = vmatprep.subr.mxu0 0.0
    %4364 = vmatpush2.msra.mxu0 0.0
    %4365 = vmatprep.subr.mxu0 0.0
    %4366 = vmatpush2.msra.mxu0 0.0
    %4367 = vmatprep.subr.mxu0 0.0
    %4368 = vmatpush2.msra.mxu0 0.0
    %4369 = vmatprep.subr.mxu0 0.0
    %4370 = vmatpush2.msra.mxu0 0.0
    %4371 = vmatprep.subr.mxu0 0.0
    %4372 = vmatpush2.msra.mxu0 0.0
    %4373 = vmatprep.subr.mxu0 0.0
    %4374 = vmatpush2.msra.mxu0 0.0
    %4375 = vmatprep.subr.mxu0 0.0
    %4376 = vmatpush2.msra.mxu0 0.0
    %4377 = vmatprep.subr.mxu0 0.0
    %4378 = vmatpush2.msra.mxu0 0.0
    %4379 = vmatprep.subr.mxu0 0.0
    %4380 = vmatpush2.msra.mxu0 0.0
    %4381 = vmatprep.subr.mxu0 0.0
    %4382 = vmatpush2.msra.mxu0 0.0
    %4383 = vmatprep.mubr.f32.mxu0 0.0
    %4384 = vmatmul.mubr.f32.gmra.mxu0 %v4309
    %v4385 = vpop.f32.mrf.mxu0
    %v4386 = vadd.f32 %v4315, %v4385
    %v4387 = vpop.f32.mrf.mxu0
    %v4388 = vadd.f32 %v4316, %v4387
    %4389 = vdwg.mxu0
    %4390 = vmatprep.subr.mxu0 %v1860
    %4391 = vmatpush1.msra.mxu0 %v1859
    %4392 = vmatprep.subr.mxu0 %v1856
    %4393 = vmatpush1.msra.mxu0 %v1855
    %4394 = vmatprep.subr.mxu0 %v1852
    %4395 = vmatpush1.msra.mxu0 %v1851
    %4396 = vmatprep.subr.mxu0 %v1848
    %4397 = vmatpush1.msra.mxu0 %v1847
    %4398 = vmatprep.subr.mxu0 %v1844
    %4399 = vmatpush1.msra.mxu0 %v1843
    %4400 = vmatprep.subr.mxu0 %v1840
    %4401 = vmatpush1.msra.mxu0 %v1839
    %4402 = vmatprep.subr.mxu0 %v1836
    %4403 = vmatpush1.msra.mxu0 %v1835
    %4404 = vmatprep.subr.mxu0 %v1832
    %4405 = vmatpush1.msra.mxu0 %v1831
    %4406 = vmatprep.subr.mxu0 %v1828
    %4407 = vmatpush1.msra.mxu0 %v1827
    %4408 = vmatprep.subr.mxu0 %v1824
    %4409 = vmatpush1.msra.mxu0 %v1823
    %4410 = vmatprep.subr.mxu0 %v1820
    %4411 = vmatpush1.msra.mxu0 %v1819
    %4412 = vmatprep.subr.mxu0 %v1816
    %4413 = vmatpush1.msra.mxu0 %v1815
    %4414 = vmatprep.subr.mxu0 %v1812
    %4415 = vmatpush1.msra.mxu0 %v1811
    %4416 = vmatprep.subr.mxu0 %v1808
    %4417 = vmatpush1.msra.mxu0 %v1807
    %4418 = vmatprep.subr.mxu0 %v1804
    %4419 = vmatpush1.msra.mxu0 %v1803
    %4420 = vmatprep.subr.mxu0 %v1800
    %4421 = vmatpush1.msra.mxu0 %v1799
    %4422 = vmatprep.subr.mxu0 0.0
    %4423 = vmatpush2.msra.mxu0 0.0
    %4424 = vmatprep.subr.mxu0 0.0
    %4425 = vmatpush2.msra.mxu0 0.0
    %4426 = vmatprep.subr.mxu0 0.0
    %4427 = vmatpush2.msra.mxu0 0.0
    %4428 = vmatprep.subr.mxu0 0.0
    %4429 = vmatpush2.msra.mxu0 0.0
    %4430 = vmatprep.subr.mxu0 0.0
    %4431 = vmatpush2.msra.mxu0 0.0
    %4432 = vmatprep.subr.mxu0 0.0
    %4433 = vmatpush2.msra.mxu0 0.0
    %4434 = vmatprep.subr.mxu0 0.0
    %4435 = vmatpush2.msra.mxu0 0.0
    %4436 = vmatprep.subr.mxu0 0.0
    %4437 = vmatpush2.msra.mxu0 0.0
    %4438 = vmatprep.subr.mxu0 0.0
    %4439 = vmatpush2.msra.mxu0 0.0
    %4440 = vmatprep.subr.mxu0 0.0
    %4441 = vmatpush2.msra.mxu0 0.0
    %4442 = vmatprep.subr.mxu0 0.0
    %4443 = vmatpush2.msra.mxu0 0.0
    %4444 = vmatprep.subr.mxu0 0.0
    %4445 = vmatpush2.msra.mxu0 0.0
    %4446 = vmatprep.subr.mxu0 0.0
    %4447 = vmatpush2.msra.mxu0 0.0
    %4448 = vmatprep.subr.mxu0 0.0
    %4449 = vmatpush2.msra.mxu0 0.0
    %4450 = vmatprep.subr.mxu0 0.0
    %4451 = vmatpush2.msra.mxu0 0.0
    %4452 = vmatprep.subr.mxu0 0.0
    %4453 = vmatpush2.msra.mxu0 0.0
    %4454 = vmatprep.mubr.f32.mxu0 0.0
    %4455 = vmatmul.mubr.f32.gmra.mxu0 %v4309
    %v4456 = vpop.f32.mrf.mxu0
    %v4457 = vadd.f32 %v4317, %v4456
    %v4458 = vpop.f32.mrf.mxu0
    %v4459 = vadd.f32 %v4318, %v4458
    %4460 = vdwg.mxu0
    %v4461 = vxor.u32 %v4386, 2147483648
    %v4462 = vmul.f32 %v4461, 1.442695
    %v4463 = vpow.pop %v4462
    %v4464 = vadd.f32 %v4463, 1.0
    %v4465 = vrcp.pop %v4464
    %v4466 = vmul.f32 1.0, %v4465
    %v4467 = vxor.u32 %v4388, 2147483648
    %v4468 = vmul.f32 %v4467, 1.442695
    %v4469 = vpow.pop %v4468
    %v4470 = vadd.f32 %v4469, 1.0
    %v4471 = vrcp.pop %v4470
    %v4472 = vmul.f32 1.0, %v4471
    %v4473 = vtanh.pop %v4457
    %v4474 = vxor.u32 %v4459, 2147483648
    %v4475 = vmul.f32 %v4474, 1.442695
    %v4476 = vpow.pop %v4475
    %v4477 = vadd.f32 %v4476, 1.0
    %v4478 = vrcp.pop %v4477
    %v4479 = vmul.f32 1.0, %v4478
    %v4480 = vmul.f32 %v4472, %v4307
    %v4481 = vmul.f32 %v4466, %v4473
    %v4482 = vadd.f32 %v4480, %v4481
    %v4483 = vtanh.pop %v4482
    %v4484 = vmul.f32 %v4479, %v4483
    %vm4485 = vcmp.eq.s32.totalorder %v1861, 14
    %v4486 = vsel %vm4485, %v4484, %v4311
    %s4487 = smul.u32 15, 4
    %s4488 = smul.addr %s4487, 8
    %s4489 = scalar_lea.vmem [#allocation2], %s4488
    %v4490 = vld [vmem:[%s4489] sm:$0xff]
    %v4491 = vld [vmem:[%s4489 + $0x8] sm:$0xff]
    %v4492 = vld [vmem:[%s4489 + $0x10] sm:$0xff]
    %v4493 = vld [vmem:[%s4489 + $0x18] sm:$0xff]
    %4494 = vmatprep.subr.mxu0 %v1858
    %4495 = vmatpush1.msra.mxu0 %v1857
    %4496 = vmatprep.subr.mxu0 %v1854
    %4497 = vmatpush1.msra.mxu0 %v1853
    %4498 = vmatprep.subr.mxu0 %v1850
    %4499 = vmatpush1.msra.mxu0 %v1849
    %4500 = vmatprep.subr.mxu0 %v1846
    %4501 = vmatpush1.msra.mxu0 %v1845
    %4502 = vmatprep.subr.mxu0 %v1842
    %4503 = vmatpush1.msra.mxu0 %v1841
    %4504 = vmatprep.subr.mxu0 %v1838
    %4505 = vmatpush1.msra.mxu0 %v1837
    %4506 = vmatprep.subr.mxu0 %v1834
    %4507 = vmatpush1.msra.mxu0 %v1833
    %4508 = vmatprep.subr.mxu0 %v1830
    %4509 = vmatpush1.msra.mxu0 %v1829
    %4510 = vmatprep.subr.mxu0 %v1826
    %4511 = vmatpush1.msra.mxu0 %v1825
    %4512 = vmatprep.subr.mxu0 %v1822
    %4513 = vmatpush1.msra.mxu0 %v1821
    %4514 = vmatprep.subr.mxu0 %v1818
    %4515 = vmatpush1.msra.mxu0 %v1817
    %4516 = vmatprep.subr.mxu0 %v1814
    %4517 = vmatpush1.msra.mxu0 %v1813
    %4518 = vmatprep.subr.mxu0 %v1810
    %4519 = vmatpush1.msra.mxu0 %v1809
    %4520 = vmatprep.subr.mxu0 %v1806
    %4521 = vmatpush1.msra.mxu0 %v1805
    %4522 = vmatprep.subr.mxu0 %v1802
    %4523 = vmatpush1.msra.mxu0 %v1801
    %4524 = vmatprep.subr.mxu0 %v1798
    %4525 = vmatpush1.msra.mxu0 %v1797
    %4526 = vmatprep.subr.mxu0 0.0
    %4527 = vmatpush2.msra.mxu0 0.0
    %4528 = vmatprep.subr.mxu0 0.0
    %4529 = vmatpush2.msra.mxu0 0.0
    %4530 = vmatprep.subr.mxu0 0.0
    %4531 = vmatpush2.msra.mxu0 0.0
    %4532 = vmatprep.subr.mxu0 0.0
    %4533 = vmatpush2.msra.mxu0 0.0
    %4534 = vmatprep.subr.mxu0 0.0
    %4535 = vmatpush2.msra.mxu0 0.0
    %4536 = vmatprep.subr.mxu0 0.0
    %4537 = vmatpush2.msra.mxu0 0.0
    %4538 = vmatprep.subr.mxu0 0.0
    %4539 = vmatpush2.msra.mxu0 0.0
    %4540 = vmatprep.subr.mxu0 0.0
    %4541 = vmatpush2.msra.mxu0 0.0
    %4542 = vmatprep.subr.mxu0 0.0
    %4543 = vmatpush2.msra.mxu0 0.0
    %4544 = vmatprep.subr.mxu0 0.0
    %4545 = vmatpush2.msra.mxu0 0.0
    %4546 = vmatprep.subr.mxu0 0.0
    %4547 = vmatpush2.msra.mxu0 0.0
    %4548 = vmatprep.subr.mxu0 0.0
    %4549 = vmatpush2.msra.mxu0 0.0
    %4550 = vmatprep.subr.mxu0 0.0
    %4551 = vmatpush2.msra.mxu0 0.0
    %4552 = vmatprep.subr.mxu0 0.0
    %4553 = vmatpush2.msra.mxu0 0.0
    %4554 = vmatprep.subr.mxu0 0.0
    %4555 = vmatpush2.msra.mxu0 0.0
    %4556 = vmatprep.subr.mxu0 0.0
    %4557 = vmatpush2.msra.mxu0 0.0
    %4558 = vmatprep.mubr.f32.mxu0 0.0
    %4559 = vmatmul.mubr.f32.gmra.mxu0 %v4484
    %v4560 = vpop.f32.mrf.mxu0
    %v4561 = vadd.f32 %v4490, %v4560
    %v4562 = vpop.f32.mrf.mxu0
    %v4563 = vadd.f32 %v4491, %v4562
    %4564 = vdwg.mxu0
    %4565 = vmatprep.subr.mxu0 %v1860
    %4566 = vmatpush1.msra.mxu0 %v1859
    %4567 = vmatprep.subr.mxu0 %v1856
    %4568 = vmatpush1.msra.mxu0 %v1855
    %4569 = vmatprep.subr.mxu0 %v1852
    %4570 = vmatpush1.msra.mxu0 %v1851
    %4571 = vmatprep.subr.mxu0 %v1848
    %4572 = vmatpush1.msra.mxu0 %v1847
    %4573 = vmatprep.subr.mxu0 %v1844
    %4574 = vmatpush1.msra.mxu0 %v1843
    %4575 = vmatprep.subr.mxu0 %v1840
    %4576 = vmatpush1.msra.mxu0 %v1839
    %4577 = vmatprep.subr.mxu0 %v1836
    %4578 = vmatpush1.msra.mxu0 %v1835
    %4579 = vmatprep.subr.mxu0 %v1832
    %4580 = vmatpush1.msra.mxu0 %v1831
    %4581 = vmatprep.subr.mxu0 %v1828
    %4582 = vmatpush1.msra.mxu0 %v1827
    %4583 = vmatprep.subr.mxu0 %v1824
    %4584 = vmatpush1.msra.mxu0 %v1823
    %4585 = vmatprep.subr.mxu0 %v1820
    %4586 = vmatpush1.msra.mxu0 %v1819
    %4587 = vmatprep.subr.mxu0 %v1816
    %4588 = vmatpush1.msra.mxu0 %v1815
    %4589 = vmatprep.subr.mxu0 %v1812
    %4590 = vmatpush1.msra.mxu0 %v1811
    %4591 = vmatprep.subr.mxu0 %v1808
    %4592 = vmatpush1.msra.mxu0 %v1807
    %4593 = vmatprep.subr.mxu0 %v1804
    %4594 = vmatpush1.msra.mxu0 %v1803
    %4595 = vmatprep.subr.mxu0 %v1800
    %4596 = vmatpush1.msra.mxu0 %v1799
    %4597 = vmatprep.subr.mxu0 0.0
    %4598 = vmatpush2.msra.mxu0 0.0
    %4599 = vmatprep.subr.mxu0 0.0
    %4600 = vmatpush2.msra.mxu0 0.0
    %4601 = vmatprep.subr.mxu0 0.0
    %4602 = vmatpush2.msra.mxu0 0.0
    %4603 = vmatprep.subr.mxu0 0.0
    %4604 = vmatpush2.msra.mxu0 0.0
    %4605 = vmatprep.subr.mxu0 0.0
    %4606 = vmatpush2.msra.mxu0 0.0
    %4607 = vmatprep.subr.mxu0 0.0
    %4608 = vmatpush2.msra.mxu0 0.0
    %4609 = vmatprep.subr.mxu0 0.0
    %4610 = vmatpush2.msra.mxu0 0.0
    %4611 = vmatprep.subr.mxu0 0.0
    %4612 = vmatpush2.msra.mxu0 0.0
    %4613 = vmatprep.subr.mxu0 0.0
    %4614 = vmatpush2.msra.mxu0 0.0
    %4615 = vmatprep.subr.mxu0 0.0
    %4616 = vmatpush2.msra.mxu0 0.0
    %4617 = vmatprep.subr.mxu0 0.0
    %4618 = vmatpush2.msra.mxu0 0.0
    %4619 = vmatprep.subr.mxu0 0.0
    %4620 = vmatpush2.msra.mxu0 0.0
    %4621 = vmatprep.subr.mxu0 0.0
    %4622 = vmatpush2.msra.mxu0 0.0
    %4623 = vmatprep.subr.mxu0 0.0
    %4624 = vmatpush2.msra.mxu0 0.0
    %4625 = vmatprep.subr.mxu0 0.0
    %4626 = vmatpush2.msra.mxu0 0.0
    %4627 = vmatprep.subr.mxu0 0.0
    %4628 = vmatpush2.msra.mxu0 0.0
    %4629 = vmatprep.mubr.f32.mxu0 0.0
    %4630 = vmatmul.mubr.f32.gmra.mxu0 %v4484
    %v4631 = vpop.f32.mrf.mxu0
    %v4632 = vadd.f32 %v4492, %v4631
    %v4633 = vpop.f32.mrf.mxu0
    %v4634 = vadd.f32 %v4493, %v4633
    %4635 = vdwg.mxu0
    %v4636 = vxor.u32 %v4561, 2147483648
    %v4637 = vmul.f32 %v4636, 1.442695
    %v4638 = vpow.pop %v4637
    %v4639 = vadd.f32 %v4638, 1.0
    %v4640 = vrcp.pop %v4639
    %v4641 = vmul.f32 1.0, %v4640
    %v4642 = vxor.u32 %v4563, 2147483648
    %v4643 = vmul.f32 %v4642, 1.442695
    %v4644 = vpow.pop %v4643
    %v4645 = vadd.f32 %v4644, 1.0
    %v4646 = vrcp.pop %v4645
    %v4647 = vmul.f32 1.0, %v4646
    %v4648 = vtanh.pop %v4632
    %v4649 = vxor.u32 %v4634, 2147483648
    %v4650 = vmul.f32 %v4649, 1.442695
    %v4651 = vpow.pop %v4650
    %v4652 = vadd.f32 %v4651, 1.0
    %v4653 = vrcp.pop %v4652
    %v4654 = vmul.f32 1.0, %v4653
    %v4655 = vmul.f32 %v4647, %v4482
    %v4656 = vmul.f32 %v4641, %v4648
    %v4657 = vadd.f32 %v4655, %v4656
    %v4658 = vtanh.pop %v4657
    %v4659 = vmul.f32 %v4654, %v4658
    %vm4660 = vcmp.eq.s32.totalorder %v1861, 15
    %v4661 = vsel %vm4660, %v4659, %v4486
    %v4662 = vrot.slane %v4661, 4
    %v4663 = vadd.f32 %v4661, %v4662
    %v4664 = vrot.slane %v4663, 2
    %v4665 = vadd.f32 %v4663, %v4664
    %v4666 = vrot.slane %v4665, 1
    %v4667 = vadd.f32 %v4665, %v4666
    %v4668 = vrcp.pop 8.0
    %v4669 = vmul.f32 %v4667, %v4668
    %v4670 = vsub.f32 %v4661, %v4669
    %v4671 = vmul.f32 %v4670, %v4670
    %v4672 = vrot.slane %v4671, 4
    %v4673 = vadd.f32 %v4671, %v4672
    %v4674 = vrot.slane %v4673, 2
    %v4675 = vadd.f32 %v4673, %v4674
    %v4676 = vrot.slane %v4675, 1
    %v4677 = vadd.f32 %v4675, %v4676
    %v4678 = vmul.f32 %v4677, %v4668
    %v4679 = vadd.f32 %v4678, 1e-05
    %v4680 = vrsqrt.pop %v4679
    %v4681 = vmul.f32 %v4670, %v4680
    %v4682 = vld [vmem:[%s9] sm:$0x1]
    %v4684 = vlaneseq
    %v4685 = vshrl.u32 %v4684, 7
    %v4686 = vsub.s32 0, %v4685
    %v4687 = vrot.slane %v4682, %v4686
    %v4689 = vmul.f32 %v4681, %v4687
    %v4690 = vld [vmem:[%s10] sm:$0x1]
    %v4692 = vlaneseq
    %v4693 = vshrl.u32 %v4692, 7
    %v4694 = vsub.s32 0, %v4693
    %v4695 = vrot.slane %v4690, %v4694
    %v4697 = vadd.f32 %v4689, %v4695
    %v4698 = vld [vmem:[#allocation6] sm:$0xff]
    %v4699 = vld [vmem:[#allocation6 + $0x8] sm:$0xff]
    %v4700 = vld [vmem:[#allocation6 + $0x10] sm:$0xff]
    %v4701 = vld [vmem:[#allocation6 + $0x18] sm:$0xff]
    %v4702 = vld [vmem:[#allocation6 + $0x20] sm:$0xff]
    %v4703 = vld [vmem:[#allocation6 + $0x28] sm:$0xff]
    %v4704 = vld [vmem:[#allocation6 + $0x30] sm:$0xff]
    %v4705 = vld [vmem:[#allocation6 + $0x38] sm:$0xff]
    %v4706 = vld [vmem:[#allocation6 + $0x40] sm:$0xff]
    %v4707 = vld [vmem:[#allocation6 + $0x48] sm:$0xff]
    %v4708 = vld [vmem:[#allocation6 + $0x50] sm:$0xff]
    %v4709 = vld [vmem:[#allocation6 + $0x58] sm:$0xff]
    %v4710 = vld [vmem:[#allocation6 + $0x60] sm:$0xff]
    %v4711 = vld [vmem:[#allocation6 + $0x68] sm:$0xff]
    %v4712 = vld [vmem:[#allocation6 + $0x70] sm:$0xff]
    %v4713 = vld [vmem:[#allocation6 + $0x78] sm:$0xff]
    %v4714 = vld [vmem:[%s12] sm:$0x1]
    %v4716 = vlaneseq
    %v4717 = vshrl.u32 %v4716, 7
    %v4718 = vsub.s32 0, %v4717
    %v4719 = vrot.slane %v4714, %v4718
    %4721 = vmatprep.subr.mxu0 0.0
    %4722 = vmatpush1.msra.mxu0 %v4713
    %4723 = vmatprep.subr.mxu0 0.0
    %4724 = vmatpush1.msra.mxu0 %v4712
    %4725 = vmatprep.subr.mxu0 0.0
    %4726 = vmatpush1.msra.mxu0 %v4711
    %4727 = vmatprep.subr.mxu0 0.0
    %4728 = vmatpush1.msra.mxu0 %v4710
    %4729 = vmatprep.subr.mxu0 0.0
    %4730 = vmatpush1.msra.mxu0 %v4709
    %4731 = vmatprep.subr.mxu0 0.0
    %4732 = vmatpush1.msra.mxu0 %v4708
    %4733 = vmatprep.subr.mxu0 0.0
    %4734 = vmatpush1.msra.mxu0 %v4707
    %4735 = vmatprep.subr.mxu0 0.0
    %4736 = vmatpush1.msra.mxu0 %v4706
    %4737 = vmatprep.subr.mxu0 0.0
    %4738 = vmatpush1.msra.mxu0 %v4705
    %4739 = vmatprep.subr.mxu0 0.0
    %4740 = vmatpush1.msra.mxu0 %v4704
    %4741 = vmatprep.subr.mxu0 0.0
    %4742 = vmatpush1.msra.mxu0 %v4703
    %4743 = vmatprep.subr.mxu0 0.0
    %4744 = vmatpush1.msra.mxu0 %v4702
    %4745 = vmatprep.subr.mxu0 0.0
    %4746 = vmatpush1.msra.mxu0 %v4701
    %4747 = vmatprep.subr.mxu0 0.0
    %4748 = vmatpush1.msra.mxu0 %v4700
    %4749 = vmatprep.subr.mxu0 0.0
    %4750 = vmatpush1.msra.mxu0 %v4699
    %4751 = vmatprep.subr.mxu0 0.0
    %4752 = vmatpush1.msra.mxu0 %v4698
    %4753 = vmatprep.subr.mxu0 0.0
    %4754 = vmatpush2.msra.mxu0 0.0
    %4755 = vmatprep.subr.mxu0 0.0
    %4756 = vmatpush2.msra.mxu0 0.0
    %4757 = vmatprep.subr.mxu0 0.0
    %4758 = vmatpush2.msra.mxu0 0.0
    %4759 = vmatprep.subr.mxu0 0.0
    %4760 = vmatpush2.msra.mxu0 0.0
    %4761 = vmatprep.subr.mxu0 0.0
    %4762 = vmatpush2.msra.mxu0 0.0
    %4763 = vmatprep.subr.mxu0 0.0
    %4764 = vmatpush2.msra.mxu0 0.0
    %4765 = vmatprep.subr.mxu0 0.0
    %4766 = vmatpush2.msra.mxu0 0.0
    %4767 = vmatprep.subr.mxu0 0.0
    %4768 = vmatpush2.msra.mxu0 0.0
    %4769 = vmatprep.subr.mxu0 0.0
    %4770 = vmatpush2.msra.mxu0 0.0
    %4771 = vmatprep.subr.mxu0 0.0
    %4772 = vmatpush2.msra.mxu0 0.0
    %4773 = vmatprep.subr.mxu0 0.0
    %4774 = vmatpush2.msra.mxu0 0.0
    %4775 = vmatprep.subr.mxu0 0.0
    %4776 = vmatpush2.msra.mxu0 0.0
    %4777 = vmatprep.subr.mxu0 0.0
    %4778 = vmatpush2.msra.mxu0 0.0
    %4779 = vmatprep.subr.mxu0 0.0
    %4780 = vmatpush2.msra.mxu0 0.0
    %4781 = vmatprep.subr.mxu0 0.0
    %4782 = vmatpush2.msra.mxu0 0.0
    %4783 = vmatprep.subr.mxu0 0.0
    %4784 = vmatpush2.msra.mxu0 0.0
    %4785 = vmatprep.mubr.f32.mxu0 0.0
    %4786 = vmatmul.mubr.f32.gmra.mxu0 %v4697
    %v4787 = vpop.f32.mrf.mxu0
    %v4788 = vadd.f32 %v4719, %v4787
    %v4789 = vpop.f32.mrf.mxu0
    %4790 = vdwg.mxu0
    %v4791 = vrot.slane %v4788, 4
    %v4792 = vadd.f32 %v4788, %v4791
    %v4793 = vrot.slane %v4792, 2
    %v4794 = vadd.f32 %v4792, %v4793
    %v4795 = vrot.slane %v4794, 1
    %v4796 = vadd.f32 %v4794, %v4795
    %v4797 = vmul.f32 %v4796, %v4668
    %v4798 = vsub.f32 %v4788, %v4797
    %v4799 = vmul.f32 %v4798, %v4798
    %v4800 = vrot.slane %v4799, 4
    %v4801 = vadd.f32 %v4799, %v4800
    %v4802 = vrot.slane %v4801, 2
    %v4803 = vadd.f32 %v4801, %v4802
    %v4804 = vrot.slane %v4803, 1
    %v4805 = vadd.f32 %v4803, %v4804
    %v4806 = vmul.f32 %v4805, %v4668
    %v4807 = vadd.f32 %v4806, 1e-05
    %v4808 = vrsqrt.pop %v4807
    %v4809 = vmul.f32 %v4798, %v4808
    %v4810 = vld [vmem:[%s13] sm:$0x1]
    %v4812 = vlaneseq
    %v4813 = vshrl.u32 %v4812, 7
    %v4814 = vsub.s32 0, %v4813
    %v4815 = vrot.slane %v4810, %v4814
    %v4817 = vmul.f32 %v4809, %v4815
    %v4818 = vld [vmem:[%s14] sm:$0x1]
    %v4820 = vlaneseq
    %v4821 = vshrl.u32 %v4820, 7
    %v4822 = vsub.s32 0, %v4821
    %v4823 = vrot.slane %v4818, %v4822
    %v4825 = vadd.f32 %v4817, %v4823
    %v4826 = vld [vmem:[%s15] sm:$0xff]
    %v4827 = vld [vmem:[%s15 + $0x8] sm:$0xff]
    %v4828 = vld [vmem:[%s15 + $0x10] sm:$0xff]
    %v4829 = vld [vmem:[%s15 + $0x18] sm:$0xff]
    %v4830 = vld [vmem:[%s15 + $0x20] sm:$0xff]
    %v4831 = vld [vmem:[%s15 + $0x28] sm:$0xff]
    %v4832 = vld [vmem:[%s15 + $0x30] sm:$0xff]
    %v4833 = vld [vmem:[%s15 + $0x38] sm:$0xff]
    %v4834 = vld [vmem:[%s15 + $0x40] sm:$0xff]
    %v4835 = vld [vmem:[%s15 + $0x48] sm:$0xff]
    %v4836 = vld [vmem:[%s15 + $0x50] sm:$0xff]
    %v4837 = vld [vmem:[%s15 + $0x58] sm:$0xff]
    %v4838 = vld [vmem:[%s15 + $0x60] sm:$0xff]
    %v4839 = vld [vmem:[%s15 + $0x68] sm:$0xff]
    %v4840 = vld [vmem:[%s15 + $0x70] sm:$0xff]
    %v4841 = vld [vmem:[%s15 + $0x78] sm:$0xff]
    %v4842 = vld [vmem:[#allocation3] sm:$0x1]
    %v4844 = vlaneseq
    %v4845 = vshrl.u32 %v4844, 7
    %v4846 = vsub.s32 0, %v4845
    %v4847 = vrot.slane %v4842, %v4846
    %4849 = vmatprep.subr.mxu0 0.0
    %4850 = vmatpush1.msra.mxu0 %v4841
    %4851 = vmatprep.subr.mxu0 0.0
    %4852 = vmatpush1.msra.mxu0 %v4840
    %4853 = vmatprep.subr.mxu0 0.0
    %4854 = vmatpush1.msra.mxu0 %v4839
    %4855 = vmatprep.subr.mxu0 0.0
    %4856 = vmatpush1.msra.mxu0 %v4838
    %4857 = vmatprep.subr.mxu0 0.0
    %4858 = vmatpush1.msra.mxu0 %v4837
    %4859 = vmatprep.subr.mxu0 0.0
    %4860 = vmatpush1.msra.mxu0 %v4836
    %4861 = vmatprep.subr.mxu0 0.0
    %4862 = vmatpush1.msra.mxu0 %v4835
    %4863 = vmatprep.subr.mxu0 0.0
    %4864 = vmatpush1.msra.mxu0 %v4834
    %4865 = vmatprep.subr.mxu0 0.0
    %4866 = vmatpush1.msra.mxu0 %v4833
    %4867 = vmatprep.subr.mxu0 0.0
    %4868 = vmatpush1.msra.mxu0 %v4832
    %4869 = vmatprep.subr.mxu0 0.0
    %4870 = vmatpush1.msra.mxu0 %v4831
    %4871 = vmatprep.subr.mxu0 0.0
    %4872 = vmatpush1.msra.mxu0 %v4830
    %4873 = vmatprep.subr.mxu0 0.0
    %4874 = vmatpush1.msra.mxu0 %v4829
    %4875 = vmatprep.subr.mxu0 0.0
    %4876 = vmatpush1.msra.mxu0 %v4828
    %4877 = vmatprep.subr.mxu0 0.0
    %4878 = vmatpush1.msra.mxu0 %v4827
    %4879 = vmatprep.subr.mxu0 0.0
    %4880 = vmatpush1.msra.mxu0 %v4826
    %4881 = vmatprep.subr.mxu0 0.0
    %4882 = vmatpush2.msra.mxu0 0.0
    %4883 = vmatprep.subr.mxu0 0.0
    %4884 = vmatpush2.msra.mxu0 0.0
    %4885 = vmatprep.subr.mxu0 0.0
    %4886 = vmatpush2.msra.mxu0 0.0
    %4887 = vmatprep.subr.mxu0 0.0
    %4888 = vmatpush2.msra.mxu0 0.0
    %4889 = vmatprep.subr.mxu0 0.0
    %4890 = vmatpush2.msra.mxu0 0.0
    %4891 = vmatprep.subr.mxu0 0.0
    %4892 = vmatpush2.msra.mxu0 0.0
    %4893 = vmatprep.subr.mxu0 0.0
    %4894 = vmatpush2.msra.mxu0 0.0
    %4895 = vmatprep.subr.mxu0 0.0
    %4896 = vmatpush2.msra.mxu0 0.0
    %4897 = vmatprep.subr.mxu0 0.0
    %4898 = vmatpush2.msra.mxu0 0.0
    %4899 = vmatprep.subr.mxu0 0.0
    %4900 = vmatpush2.msra.mxu0 0.0
    %4901 = vmatprep.subr.mxu0 0.0
    %4902 = vmatpush2.msra.mxu0 0.0
    %4903 = vmatprep.subr.mxu0 0.0
    %4904 = vmatpush2.msra.mxu0 0.0
    %4905 = vmatprep.subr.mxu0 0.0
    %4906 = vmatpush2.msra.mxu0 0.0
    %4907 = vmatprep.subr.mxu0 0.0
    %4908 = vmatpush2.msra.mxu0 0.0
    %4909 = vmatprep.subr.mxu0 0.0
    %4910 = vmatpush2.msra.mxu0 0.0
    %4911 = vmatprep.subr.mxu0 0.0
    %4912 = vmatpush2.msra.mxu0 0.0
    %4913 = vmatprep.mubr.f32.mxu0 0.0
    %4914 = vmatmul.mubr.f32.gmra.mxu0 %v4825
    %v4915 = vpop.f32.mrf.mxu0
    %v4916 = vadd.f32 %v4847, %v4915
    %v4917 = vpop.f32.mrf.mxu0
    %4918 = vdwg.mxu0
    %vm4919 = vcmask 7168
    %4920 = vst.msk [vmem:[%s17] sm:$0xff] %vm4919, %v4916
    // Predicated region
    $region78: #{base_model_forward.1} parent=1 // pred_check
      _
    $region79: #{base_model_forward.1} parent=1 // pred_check_branch
      %4922 = sbr.rel (0) target = $region81
    $region80: #{base_model_forward.1} parent=1 // pred_region
      _
    $region81: #{base_model_forward.1} parent=1 // pred_fallthru
      _
    // Predicated region
    $region82: #{base_model_forward.1} parent=1 // pred_check
      _
    $region83: #{base_model_forward.1} parent=1 // pred_check_branch
      %4924 = sbr.rel (0) target = $region85
    $region84: #{base_model_forward.1} parent=1 // pred_region
      _
    $region85: #{base_model_forward.1} parent=1 // pred_fallthru
      _
    %4925 = vsyncpa [#allocation5], 1
    %4926 = vsyncpa [#allocation7], 1

</llo_original>
